<compile_context>
chip_gen: v6e
topology: v6e:2x2x1
jax: 0.10.0
libtpu: 0.0.40
codegen_flags: <defaults>
</compile_context>

<pallas_src>
import functools

import jax
import jax.numpy as jnp
from jax.experimental import pallas as pl
from jax.experimental.pallas import tpu as pltpu

N_EMBD = 128
N_HEAD = 4
N_LAYER = 4
BLOCK_SIZE = 64
HEAD_SIZE = N_EMBD             # Block passes n_embd as head_size (module quirk)
VOCAB_SIZE = 65                # len(set(text)) in the original script; 65 here
VOCAB_PAD = 128                # lane-aligned padding for the lm_head output
EPS = 1e-5                     # nn.LayerNorm default
SCALE = float(N_EMBD) ** -0.5  # C ** -0.5 with C = n_embd = 128
NEG_BIG = -1e30                # additive mask value (NOT -inf: keeps softmax finite)


def _layernorm(h, g, b):
    mean = jnp.mean(h, axis=-1, keepdims=True)
    var = jnp.mean((h - mean) ** 2, axis=-1, keepdims=True)   # biased, like torch
    return (h - mean) * jax.lax.rsqrt(var + EPS) * g + b


def layer_kernel(x_ref, mask_ref,
                 ln1_g_ref, ln1_b_ref, wqkv_ref, wproj_ref, bproj_ref,
                 ln2_g_ref, ln2_b_ref, w1_ref, b1_ref, w2_ref, b2_ref,
                 wlm_ref, blm_ref,
                 o_ref, x_acc, *, batch, seq):
    """One transformer Block per grid step; lm_head epilogue on the last step."""
    del batch, seq  # shapes are baked into the refs (batch is merged into rows)
    l = pl.program_id(0)
    H, D = N_HEAD, HEAD_SIZE

    # Initialize the carried residual stream from the embedding input.
    @pl.when(l == 0)
    def _():
        x_acc[...] = x_ref[...]

    x = x_acc[...]                                   # (B*T, C) f32
    mask_bias = mask_ref[...]                        # (B*T, B*T) f32, block-diag+causal

    # ---- ln1 + fused-QKV multi-head causal self-attention (batch merged) ----
    h1 = _layernorm(x, ln1_g_ref[0], ln1_b_ref[0])                  # (BT, C)
    qkv = jnp.dot(h1.astype(jnp.bfloat16), wqkv_ref[0],
                  preferred_element_type=jnp.float32)               # (BT, 3*H*D)

    heads = []
    for h in range(H):                               # static unroll (4 heads)
        q = qkv[:, h * D:(h + 1) * D].astype(jnp.bfloat16)           # (BT, D)
        k = qkv[:, (H + h) * D:(H + h + 1) * D].astype(jnp.bfloat16)
        v = qkv[:, (2 * H + h) * D:(2 * H + h + 1) * D].astype(jnp.bfloat16)
        s = jax.lax.dot_general(                     # q @ k^T, no explicit transpose
            q, k, (((1,), (1,)), ((), ())),
            preferred_element_type=jnp.float32)                      # (BT, BT)
        s = s * SCALE + mask_bias
        s = s - jnp.max(s, axis=-1, keepdims=True)
        p = jnp.exp(s)
        p = p * pl.reciprocal(jnp.sum(p, axis=-1, keepdims=True), approx=True)
        heads.append(jnp.dot(p.astype(jnp.bfloat16), v,
                             preferred_element_type=jnp.float32))    # (BT, D)

    # lane-axis concat (heads already live in disjoint 128-lane stripes)
    cat = jnp.concatenate(heads, axis=-1).astype(jnp.bfloat16)       # (BT, H*D)
    sa = jnp.dot(cat, wproj_ref[0], preferred_element_type=jnp.float32)
    x = x + sa + bproj_ref[0]                                        # residual 1

    # ---- ln2 + feed-forward ----
    h2 = _layernorm(x, ln2_g_ref[0], ln2_b_ref[0])
    ff = jnp.dot(h2.astype(jnp.bfloat16), w1_ref[0],
                 preferred_element_type=jnp.float32) + b1_ref[0]
    ff = jnp.maximum(ff, 0.0)
    ff = jnp.dot(ff.astype(jnp.bfloat16), w2_ref[0],
                 preferred_element_type=jnp.float32) + b2_ref[0]
    x = x + ff                                                       # residual 2

    x_acc[...] = x                                   # carry to next grid step

    # ---- lm_head epilogue (NO ln_f: the module never applies it in forward) ----
    @pl.when(l == N_LAYER - 1)
    def _():
        o_ref[...] = (jnp.dot(x.astype(jnp.bfloat16), wlm_ref[...],
                              preferred_element_type=jnp.float32)
                      + blm_ref[...])


def model_forward(idx, params):
    B, T = idx.shape
    C = N_EMBD
    BT = B * T
    assert T <= BLOCK_SIZE

    # embeddings (tiny gather; done in plain JAX, see TODO at top)
    x = params['tok_emb'][idx] + params['pos_emb'][:T]               # (B, T, C)
    x2d = x.reshape(BT, C).astype(jnp.float32)

    # block-diagonal (same sequence) + causal additive mask, built once on host
    row = jnp.arange(BT, dtype=jnp.int32)[:, None]
    col = jnp.arange(BT, dtype=jnp.int32)[None, :]
    keep = (row // T == col // T) & (row >= col)
    mask_bias = jnp.where(keep, 0.0, NEG_BIG).astype(jnp.float32)    # (BT, BT)

    def per_layer(shape):                            # stacked (L, ...) weight
        nd = len(shape)
        return pl.BlockSpec((1,) + tuple(shape[1:]),
                            lambda l, _nd=nd: (l,) + (0,) * (_nd - 1))

    def whole(shape):                                # layer-independent array
        nd = len(shape)
        return pl.BlockSpec(tuple(shape), lambda l, _nd=nd: (0,) * _nd)

    args = (
        x2d, mask_bias,
        params['ln1_g'], params['ln1_b'], params['wqkv_bf16'],
        params['wproj_bf16'], params['bproj'],
        params['ln2_g'], params['ln2_b'],
        params['w1_bf16'], params['b1'], params['w2_bf16'], params['b2'],
        params['wlm_pad_bf16'], params['blm_pad'],
    )
    in_specs = [
        whole(x2d.shape),
        whole(mask_bias.shape),
        per_layer(params['ln1_g'].shape),
        per_layer(params['ln1_b'].shape),
        per_layer(params['wqkv_bf16'].shape),
        per_layer(params['wproj_bf16'].shape),
        per_layer(params['bproj'].shape),
        per_layer(params['ln2_g'].shape),
        per_layer(params['ln2_b'].shape),
        per_layer(params['w1_bf16'].shape),
        per_layer(params['b1'].shape),
        per_layer(params['w2_bf16'].shape),
        per_layer(params['b2'].shape),
        whole(params['wlm_pad_bf16'].shape),
        whole(params['blm_pad'].shape),
    ]

    cost = pl.CostEstimate(flops=int(5.4e8), transcendentals=int(2.6e5),
                           bytes_accessed=int(3.5e6))

    logits2d = pl.pallas_call(
        functools.partial(layer_kernel, batch=B, seq=T),
        out_shape=jax.ShapeDtypeStruct((BT, VOCAB_PAD), jnp.float32),
        grid_spec=pltpu.PrefetchScalarGridSpec(
            num_scalar_prefetch=0,
            grid=(N_LAYER,),                         # stream one layer per step
            in_specs=in_specs,
            out_specs=pl.BlockSpec((BT, VOCAB_PAD), lambda l: (0, 0)),
            scratch_shapes=[pltpu.VMEM((BT, C), jnp.float32)],   # carried residual
        ),
        compiler_params=pltpu.CompilerParams(
            dimension_semantics=("arbitrary",),      # layer axis is sequential
            vmem_limit_bytes=16 * 1024 * 1024,
        ),
        cost_estimate=cost,
    )(*args)

    return logits2d[:, :VOCAB_SIZE].reshape(B, T, VOCAB_SIZE)


def init_params(key):
    """Deterministic synthetic parameters (PyTorch Linear semantics y = x W^T + b,
    stored here already transposed as (in, out); layer axis stacked in front)."""
    C, H, D, L = N_EMBD, N_HEAD, HEAD_SIZE, N_LAYER
    ks = jax.random.split(key, 16)
    s = 0.02
    p = {}
    p['tok_emb'] = jax.random.normal(ks[0], (VOCAB_SIZE, C), jnp.float32)
    p['pos_emb'] = jax.random.normal(ks[1], (BLOCK_SIZE, C), jnp.float32)

    # per-head attention weights, (in, out) = (C, D)
    p['wq'] = s * jax.random.normal(ks[2], (L, H, C, D), jnp.float32)
    p['wk'] = s * jax.random.normal(ks[3], (L, H, C, D), jnp.float32)
    p['wv'] = s * jax.random.normal(ks[4], (L, H, C, D), jnp.float32)

    # fused QKV weight: columns = [q heads | k heads | v heads], each head D wide
    def heads_to_cols(w):                       # (L,H,C,D) -> (L, C, H*D)
        return jnp.transpose(w, (0, 2, 1, 3)).reshape(L, C, H * D)
    p['wqkv'] = jnp.concatenate(
        [heads_to_cols(p['wq']), heads_to_cols(p['wk']), heads_to_cols(p['wv'])],
        axis=-1)                                # (L, C, 3*H*D)

    p['wproj'] = s * jax.random.normal(ks[5], (L, H, D, C), jnp.float32)
    p['bproj'] = 0.01 * jax.random.normal(ks[6], (L, 1, C), jnp.float32)

    p['w1'] = s * jax.random.normal(ks[7], (L, C, 4 * C), jnp.float32)
    p['b1'] = 0.01 * jax.random.normal(ks[8], (L, 1, 4 * C), jnp.float32)
    p['w2'] = s * jax.random.normal(ks[9], (L, 4 * C, C), jnp.float32)
    p['b2'] = 0.01 * jax.random.normal(ks[10], (L, 1, C), jnp.float32)

    p['ln1_g'] = 1.0 + 0.1 * jax.random.normal(ks[11], (L, 1, C), jnp.float32)
    p['ln1_b'] = 0.1 * jax.random.normal(ks[12], (L, 1, C), jnp.float32)
    p['ln2_g'] = 1.0 + 0.1 * jax.random.normal(ks[13], (L, 1, C), jnp.float32)
    p['ln2_b'] = 0.1 * jax.random.normal(ks[14], (L, 1, C), jnp.float32)

    p['wlm'] = s * jax.random.normal(ks[15], (C, VOCAB_SIZE), jnp.float32)
    p['blm'] = jnp.zeros((VOCAB_SIZE,), jnp.float32)

    # kernel-side variants: bf16 MXU weights, head-stacked proj, lane-padded lm_head
    p['wqkv_bf16'] = p['wqkv'].astype(jnp.bfloat16)                      # (L,C,3HD)
    p['wproj_bf16'] = p['wproj'].reshape(L, H * D, C).astype(jnp.bfloat16)  # (L,HD,C)
    p['w1_bf16'] = p['w1'].astype(jnp.bfloat16)
    p['w2_bf16'] = p['w2'].astype(jnp.bfloat16)
    wlm_pad = jnp.zeros((C, VOCAB_PAD), jnp.float32).at[:, :VOCAB_SIZE].set(p['wlm'])
    p['wlm_pad_bf16'] = wlm_pad.astype(jnp.bfloat16)
    p['blm_pad'] = jnp.zeros((1, VOCAB_PAD), jnp.float32).at[0, :VOCAB_SIZE].set(p['blm'])
    return p


def reference_forward(idx, params):
    """Pure-JAX f32 reference mirroring the PyTorch module (for a sanity check)."""
    B, T = idx.shape
    C, H, D, L = N_EMBD, N_HEAD, HEAD_SIZE, N_LAYER

    def ln(h, g, b):
        m = h.mean(-1, keepdims=True)
        v = ((h - m) ** 2).mean(-1, keepdims=True)
        return (h - m) / jnp.sqrt(v + EPS) * g + b

    x = params['tok_emb'][idx] + params['pos_emb'][:T]            # (B, T, C)
    mask = jnp.tril(jnp.ones((T, T), bool))
    for l in range(L):
        h1 = ln(x, params['ln1_g'][l], params['ln1_b'][l])
        outs = []
        for h in range(H):
            q = h1 @ params['wq'][l, h]
            k = h1 @ params['wk'][l, h]
            v = h1 @ params['wv'][l, h]
            wei = q @ jnp.swapaxes(k, -2, -1) * SCALE
            wei = jnp.where(mask, wei, -jnp.inf)
            wei = jax.nn.softmax(wei, axis=-1)
            outs.append(wei @ v)
        cat = jnp.concatenate(outs, axis=-1)                      # (B, T, H*D)
        sa = cat @ params['wproj'][l].reshape(H * D, C) + params['bproj'][l]
        x = x + sa
        h2 = ln(x, params['ln2_g'][l], params['ln2_b'][l])
        ff = jnp.maximum(h2 @ params['w1'][l] + params['b1'][l], 0.0)
        ff = ff @ params['w2'][l] + params['b2'][l]
        x = x + ff
    # NOTE: the module defines ln_f but never calls it in forward(); logits
    # come straight off the residual stream.
    return x @ params['wlm'] + params['blm']


if __name__ == "__main__":
    key = jax.random.PRNGKey(0)
    kp, ki = jax.random.split(key)
    B, T = 2, BLOCK_SIZE                                  # idx: (2, 64)
    params = init_params(kp)
    idx = jax.random.randint(ki, (B, T), 0, VOCAB_SIZE, dtype=jnp.int32)

    logits = model_forward(idx, params)
    logits = jax.block_until_ready(logits)

    ref = reference_forward(idx, params)
    assert logits.shape == (B, T, VOCAB_SIZE)
    # bf16 matmul weights/inputs + approx softmax reciprocal + reordered f32
    # accumulation => small deviations from the f32 reference.
    assert jnp.allclose(logits, ref, atol=2e-2, rtol=2e-2), "mismatch vs reference"
    print("KERNEL_OK")
</pallas_src>

<mosaic_0001>
module attributes {stable_mosaic.version = 11 : i64} {
  func.func @layer_kernel(%arg0: i32, %arg1: memref<128x128xf32, #tpu.memory_space<vmem>>, %arg2: memref<128x128xf32, #tpu.memory_space<vmem>>, %arg3: memref<1x1x128xf32, #tpu.memory_space<vmem>>, %arg4: memref<1x1x128xf32, #tpu.memory_space<vmem>>, %arg5: memref<1x128x1536xbf16, #tpu.memory_space<vmem>>, %arg6: memref<1x512x128xbf16, #tpu.memory_space<vmem>>, %arg7: memref<1x1x128xf32, #tpu.memory_space<vmem>>, %arg8: memref<1x1x128xf32, #tpu.memory_space<vmem>>, %arg9: memref<1x1x128xf32, #tpu.memory_space<vmem>>, %arg10: memref<1x128x512xbf16, #tpu.memory_space<vmem>>, %arg11: memref<1x1x512xf32, #tpu.memory_space<vmem>>, %arg12: memref<1x512x128xbf16, #tpu.memory_space<vmem>>, %arg13: memref<1x1x128xf32, #tpu.memory_space<vmem>>, %arg14: memref<128x128xbf16, #tpu.memory_space<vmem>>, %arg15: memref<1x128xf32, #tpu.memory_space<vmem>>, %arg16: memref<128x128xf32, #tpu.memory_space<vmem>>, %arg17: memref<128x128xf32, #tpu.memory_space<vmem>>) attributes {dimension_semantics = [#tpu.dimension_semantics<arbitrary>], iteration_bounds = array<i64: 4>, scalar_prefetch = 0 : i64, scratch_operands = 1 : i64, tpu.core_type = #tpu.core_type<tc>, window_params = [{pipeline_mode = #tpu.pipeline_mode<synchronous>, transform_indices = @transform_0, window_bounds = array<i64: 128, 128>}, {pipeline_mode = #tpu.pipeline_mode<synchronous>, transform_indices = @transform_1, window_bounds = array<i64: 128, 128>}, {transform_indices = @transform_2, window_bounds = array<i64: 1, 1, 128>}, {transform_indices = @transform_3, window_bounds = array<i64: 1, 1, 128>}, {transform_indices = @transform_4, window_bounds = array<i64: 1, 128, 1536>}, {transform_indices = @transform_5, window_bounds = array<i64: 1, 512, 128>}, {transform_indices = @transform_6, window_bounds = array<i64: 1, 1, 128>}, {transform_indices = @transform_7, window_bounds = array<i64: 1, 1, 128>}, {transform_indices = @transform_8, window_bounds = array<i64: 1, 1, 128>}, {transform_indices = @transform_9, window_bounds = array<i64: 1, 128, 512>}, {transform_indices = @transform_10, window_bounds = array<i64: 1, 1, 512>}, {transform_indices = @transform_11, window_bounds = array<i64: 1, 512, 128>}, {transform_indices = @transform_12, window_bounds = array<i64: 1, 1, 128>}, {pipeline_mode = #tpu.pipeline_mode<synchronous>, transform_indices = @transform_13, window_bounds = array<i64: 128, 128>}, {pipeline_mode = #tpu.pipeline_mode<synchronous>, transform_indices = @transform_14, window_bounds = array<i64: 1, 128>}, {pipeline_mode = #tpu.pipeline_mode<synchronous>, transform_indices = @transform_15, window_bounds = array<i64: 128, 128>}]} {
    %c0_i32 = arith.constant 0 : i32
    %0 = arith.cmpi eq, %arg0, %c0_i32 : i32
    %1 = arith.extui %0 : i1 to i32
    %c0_i32_0 = arith.constant 0 : i32
    %2 = arith.cmpi ne, %1, %c0_i32_0 : i32
    scf.if %2 {
      %c0_74 = arith.constant 0 : index
      %c0_75 = arith.constant 0 : index
      %182 = vector.load %arg1[%c0_74, %c0_75] : memref<128x128xf32, #tpu.memory_space<vmem>>, vector<128x128xf32>
      %c0_76 = arith.constant 0 : index
      %c0_77 = arith.constant 0 : index
      %183 = vector.load %arg17[%c0_76, %c0_77] : memref<128x128xf32, #tpu.memory_space<vmem>>, vector<128x128xf32>
      tpu.vector_store %arg17[%c0_76, %c0_77], %182 {strides = array<i32>} : memref<128x128xf32, #tpu.memory_space<vmem>>, vector<128x128xf32>,
    } else {
    }
    %c0 = arith.constant 0 : index
    %c0_1 = arith.constant 0 : index
    %3 = vector.load %arg17[%c0, %c0_1] : memref<128x128xf32, #tpu.memory_space<vmem>>, vector<128x128xf32>
    %c0_2 = arith.constant 0 : index
    %c0_3 = arith.constant 0 : index
    %4 = vector.load %arg2[%c0_2, %c0_3] : memref<128x128xf32, #tpu.memory_space<vmem>>, vector<128x128xf32>
    %c0_4 = arith.constant 0 : index
    %c0_5 = arith.constant 0 : index
    %c0_6 = arith.constant 0 : index
    %5 = vector.load %arg3[%c0_4, %c0_5, %c0_6] : memref<1x1x128xf32, #tpu.memory_space<vmem>>, vector<1x1x128xf32>
    %6 = vector.shape_cast %5 : vector<1x1x128xf32> to vector<1x128xf32>
    %c0_7 = arith.constant 0 : index
    %c0_8 = arith.constant 0 : index
    %c0_9 = arith.constant 0 : index
    %7 = vector.load %arg4[%c0_7, %c0_8, %c0_9] : memref<1x1x128xf32, #tpu.memory_space<vmem>>, vector<1x1x128xf32>
    %8 = vector.shape_cast %7 : vector<1x1x128xf32> to vector<1x128xf32>
    %cst = arith.constant dense<0.000000e+00> : vector<128xf32>
    %9 = vector.multi_reduction <add>, %3, %cst [1] : vector<128x128xf32> to vector<128xf32>
    %10 = vector.shape_cast %9 : vector<128xf32> to vector<128x1xf32>
    %cst_10 = arith.constant 1.280000e+02 : f32
    %11 = vector.broadcast %cst_10 : f32 to vector<128x1xf32>
    %12 = arith.divf %10, %11 : vector<128x1xf32>
    %13 = vector.broadcast %12 : vector<128x1xf32> to vector<128x128xf32>
    %14 = arith.subf %3, %13 : vector<128x128xf32>
    %15 = arith.mulf %14, %14 : vector<128x128xf32>
    %cst_11 = arith.constant dense<0.000000e+00> : vector<128xf32>
    %16 = vector.multi_reduction <add>, %15, %cst_11 [1] : vector<128x128xf32> to vector<128xf32>
    %17 = vector.shape_cast %16 : vector<128xf32> to vector<128x1xf32>
    %cst_12 = arith.constant 1.280000e+02 : f32
    %18 = vector.broadcast %cst_12 : f32 to vector<128x1xf32>
    %19 = arith.divf %17, %18 : vector<128x1xf32>
    %20 = vector.broadcast %12 : vector<128x1xf32> to vector<128x128xf32>
    %21 = arith.subf %3, %20 : vector<128x128xf32>
    %cst_13 = arith.constant 9.99999974E-6 : f32
    %22 = vector.broadcast %cst_13 : f32 to vector<128x1xf32>
    %23 = arith.addf %19, %22 : vector<128x1xf32>
    %24 = math.rsqrt %23 : vector<128x1xf32>
    %25 = vector.broadcast %24 : vector<128x1xf32> to vector<128x128xf32>
    %26 = arith.mulf %21, %25 : vector<128x128xf32>
    %27 = vector.broadcast %6 : vector<1x128xf32> to vector<128x128xf32>
    %28 = arith.mulf %26, %27 : vector<128x128xf32>
    %29 = vector.broadcast %8 : vector<1x128xf32> to vector<128x128xf32>
    %30 = arith.addf %28, %29 : vector<128x128xf32>
    %31 = arith.truncf %30 : vector<128x128xf32> to vector<128x128xbf16>
    %c0_14 = arith.constant 0 : index
    %c0_15 = arith.constant 0 : index
    %c0_16 = arith.constant 0 : index
    %32 = vector.load %arg5[%c0_14, %c0_15, %c0_16] : memref<1x128x1536xbf16, #tpu.memory_space<vmem>>, vector<1x128x1536xbf16>
    %33 = vector.shape_cast %32 : vector<1x128x1536xbf16> to vector<128x1536xbf16>
    %cst_17 = arith.constant dense<0.000000e+00> : vector<128x1536xf32>
    %34 = tpu.matmul %31, %33, %cst_17 {dimension_numbers = #tpu.dot_dimension_numbers<[1], [0], [0], [1], [0, 0, 1, 1], [], []>} : vector<128x128xbf16>, vector<128x1536xbf16>, vector<128x1536xf32> -> vector<128x1536xf32>
    %35 = vector.extract_strided_slice %34 {offsets = [0, 0], sizes = [128, 128], strides = [1, 1]} : vector<128x1536xf32> to vector<128x128xf32>
    %36 = arith.truncf %35 : vector<128x128xf32> to vector<128x128xbf16>
    %37 = vector.extract_strided_slice %34 {offsets = [0, 512], sizes = [128, 128], strides = [1, 1]} : vector<128x1536xf32> to vector<128x128xf32>
    %38 = arith.truncf %37 : vector<128x128xf32> to vector<128x128xbf16>
    %39 = vector.extract_strided_slice %34 {offsets = [0, 1024], sizes = [128, 128], strides = [1, 1]} : vector<128x1536xf32> to vector<128x128xf32>
    %40 = arith.truncf %39 : vector<128x128xf32> to vector<128x128xbf16>
    %cst_18 = arith.constant dense<0.000000e+00> : vector<128x128xf32>
    %41 = tpu.matmul %36, %38, %cst_18 {dimension_numbers = #tpu.dot_dimension_numbers<[1], [1], [0], [0], [0, 0, 1, 0], [], []>} : vector<128x128xbf16>, vector<128x128xbf16>, vector<128x128xf32> -> vector<128x128xf32>
    %cst_19 = arith.constant 0.0883883461 : f32
    %42 = vector.broadcast %cst_19 : f32 to vector<128x128xf32>
    %43 = arith.mulf %41, %42 : vector<128x128xf32>
    %44 = arith.addf %43, %4 : vector<128x128xf32>
    %cst_20 = arith.constant dense<0xFF800000> : vector<128xf32>
    %45 = vector.multi_reduction <maximumf>, %44, %cst_20 [1] : vector<128x128xf32> to vector<128xf32>
    %46 = vector.shape_cast %45 : vector<128xf32> to vector<128x1xf32>
    %47 = vector.broadcast %46 : vector<128x1xf32> to vector<128x128xf32>
    %48 = arith.subf %44, %47 : vector<128x128xf32>
    %49 = math.exp %48 : vector<128x128xf32>
    %cst_21 = arith.constant dense<0.000000e+00> : vector<128xf32>
    %50 = vector.multi_reduction <add>, %49, %cst_21 [1] : vector<128x128xf32> to vector<128xf32>
    %51 = vector.shape_cast %50 : vector<128xf32> to vector<128x1xf32>
    %52 = tpu.reciprocal %51 {approx = true} : vector<128x1xf32> -> vector<128x1xf32>
    %53 = vector.broadcast %52 : vector<128x1xf32> to vector<128x128xf32>
    %54 = arith.mulf %49, %53 : vector<128x128xf32>
    %55 = arith.truncf %54 : vector<128x128xf32> to vector<128x128xbf16>
    %cst_22 = arith.constant dense<0.000000e+00> : vector<128x128xf32>
    %56 = tpu.matmul %55, %40, %cst_22 {dimension_numbers = #tpu.dot_dimension_numbers<[1], [0], [0], [1], [0, 0, 1, 1], [], []>} : vector<128x128xbf16>, vector<128x128xbf16>, vector<128x128xf32> -> vector<128x128xf32>
    %57 = vector.extract_strided_slice %34 {offsets = [0, 128], sizes = [128, 128], strides = [1, 1]} : vector<128x1536xf32> to vector<128x128xf32>
    %58 = arith.truncf %57 : vector<128x128xf32> to vector<128x128xbf16>
    %59 = vector.extract_strided_slice %34 {offsets = [0, 640], sizes = [128, 128], strides = [1, 1]} : vector<128x1536xf32> to vector<128x128xf32>
    %60 = arith.truncf %59 : vector<128x128xf32> to vector<128x128xbf16>
    %61 = vector.extract_strided_slice %34 {offsets = [0, 1152], sizes = [128, 128], strides = [1, 1]} : vector<128x1536xf32> to vector<128x128xf32>
    %62 = arith.truncf %61 : vector<128x128xf32> to vector<128x128xbf16>
    %cst_23 = arith.constant dense<0.000000e+00> : vector<128x128xf32>
    %63 = tpu.matmul %58, %60, %cst_23 {dimension_numbers = #tpu.dot_dimension_numbers<[1], [1], [0], [0], [0, 0, 1, 0], [], []>} : vector<128x128xbf16>, vector<128x128xbf16>, vector<128x128xf32> -> vector<128x128xf32>
    %cst_24 = arith.constant 0.0883883461 : f32
    %64 = vector.broadcast %cst_24 : f32 to vector<128x128xf32>
    %65 = arith.mulf %63, %64 : vector<128x128xf32>
    %66 = arith.addf %65, %4 : vector<128x128xf32>
    %cst_25 = arith.constant dense<0xFF800000> : vector<128xf32>
    %67 = vector.multi_reduction <maximumf>, %66, %cst_25 [1] : vector<128x128xf32> to vector<128xf32>
    %68 = vector.shape_cast %67 : vector<128xf32> to vector<128x1xf32>
    %69 = vector.broadcast %68 : vector<128x1xf32> to vector<128x128xf32>
    %70 = arith.subf %66, %69 : vector<128x128xf32>
    %71 = math.exp %70 : vector<128x128xf32>
    %cst_26 = arith.constant dense<0.000000e+00> : vector<128xf32>
    %72 = vector.multi_reduction <add>, %71, %cst_26 [1] : vector<128x128xf32> to vector<128xf32>
    %73 = vector.shape_cast %72 : vector<128xf32> to vector<128x1xf32>
    %74 = tpu.reciprocal %73 {approx = true} : vector<128x1xf32> -> vector<128x1xf32>
    %75 = vector.broadcast %74 : vector<128x1xf32> to vector<128x128xf32>
    %76 = arith.mulf %71, %75 : vector<128x128xf32>
    %77 = arith.truncf %76 : vector<128x128xf32> to vector<128x128xbf16>
    %cst_27 = arith.constant dense<0.000000e+00> : vector<128x128xf32>
    %78 = tpu.matmul %77, %62, %cst_27 {dimension_numbers = #tpu.dot_dimension_numbers<[1], [0], [0], [1], [0, 0, 1, 1], [], []>} : vector<128x128xbf16>, vector<128x128xbf16>, vector<128x128xf32> -> vector<128x128xf32>
    %79 = vector.extract_strided_slice %34 {offsets = [0, 256], sizes = [128, 128], strides = [1, 1]} : vector<128x1536xf32> to vector<128x128xf32>
    %80 = arith.truncf %79 : vector<128x128xf32> to vector<128x128xbf16>
    %81 = vector.extract_strided_slice %34 {offsets = [0, 768], sizes = [128, 128], strides = [1, 1]} : vector<128x1536xf32> to vector<128x128xf32>
    %82 = arith.truncf %81 : vector<128x128xf32> to vector<128x128xbf16>
    %83 = vector.extract_strided_slice %34 {offsets = [0, 1280], sizes = [128, 128], strides = [1, 1]} : vector<128x1536xf32> to vector<128x128xf32>
    %84 = arith.truncf %83 : vector<128x128xf32> to vector<128x128xbf16>
    %cst_28 = arith.constant dense<0.000000e+00> : vector<128x128xf32>
    %85 = tpu.matmul %80, %82, %cst_28 {dimension_numbers = #tpu.dot_dimension_numbers<[1], [1], [0], [0], [0, 0, 1, 0], [], []>} : vector<128x128xbf16>, vector<128x128xbf16>, vector<128x128xf32> -> vector<128x128xf32>
    %cst_29 = arith.constant 0.0883883461 : f32
    %86 = vector.broadcast %cst_29 : f32 to vector<128x128xf32>
    %87 = arith.mulf %85, %86 : vector<128x128xf32>
    %88 = arith.addf %87, %4 : vector<128x128xf32>
    %cst_30 = arith.constant dense<0xFF800000> : vector<128xf32>
    %89 = vector.multi_reduction <maximumf>, %88, %cst_30 [1] : vector<128x128xf32> to vector<128xf32>
    %90 = vector.shape_cast %89 : vector<128xf32> to vector<128x1xf32>
    %91 = vector.broadcast %90 : vector<128x1xf32> to vector<128x128xf32>
    %92 = arith.subf %88, %91 : vector<128x128xf32>
    %93 = math.exp %92 : vector<128x128xf32>
    %cst_31 = arith.constant dense<0.000000e+00> : vector<128xf32>
    %94 = vector.multi_reduction <add>, %93, %cst_31 [1] : vector<128x128xf32> to vector<128xf32>
    %95 = vector.shape_cast %94 : vector<128xf32> to vector<128x1xf32>
    %96 = tpu.reciprocal %95 {approx = true} : vector<128x1xf32> -> vector<128x1xf32>
    %97 = vector.broadcast %96 : vector<128x1xf32> to vector<128x128xf32>
    %98 = arith.mulf %93, %97 : vector<128x128xf32>
    %99 = arith.truncf %98 : vector<128x128xf32> to vector<128x128xbf16>
    %cst_32 = arith.constant dense<0.000000e+00> : vector<128x128xf32>
    %100 = tpu.matmul %99, %84, %cst_32 {dimension_numbers = #tpu.dot_dimension_numbers<[1], [0], [0], [1], [0, 0, 1, 1], [], []>} : vector<128x128xbf16>, vector<128x128xbf16>, vector<128x128xf32> -> vector<128x128xf32>
    %101 = vector.extract_strided_slice %34 {offsets = [0, 384], sizes = [128, 128], strides = [1, 1]} : vector<128x1536xf32> to vector<128x128xf32>
    %102 = arith.truncf %101 : vector<128x128xf32> to vector<128x128xbf16>
    %103 = vector.extract_strided_slice %34 {offsets = [0, 896], sizes = [128, 128], strides = [1, 1]} : vector<128x1536xf32> to vector<128x128xf32>
    %104 = arith.truncf %103 : vector<128x128xf32> to vector<128x128xbf16>
    %105 = vector.extract_strided_slice %34 {offsets = [0, 1408], sizes = [128, 128], strides = [1, 1]} : vector<128x1536xf32> to vector<128x128xf32>
    %106 = arith.truncf %105 : vector<128x128xf32> to vector<128x128xbf16>
    %cst_33 = arith.constant dense<0.000000e+00> : vector<128x128xf32>
    %107 = tpu.matmul %102, %104, %cst_33 {dimension_numbers = #tpu.dot_dimension_numbers<[1], [1], [0], [0], [0, 0, 1, 0], [], []>} : vector<128x128xbf16>, vector<128x128xbf16>, vector<128x128xf32> -> vector<128x128xf32>
    %cst_34 = arith.constant 0.0883883461 : f32
    %108 = vector.broadcast %cst_34 : f32 to vector<128x128xf32>
    %109 = arith.mulf %107, %108 : vector<128x128xf32>
    %110 = arith.addf %109, %4 : vector<128x128xf32>
    %cst_35 = arith.constant dense<0xFF800000> : vector<128xf32>
    %111 = vector.multi_reduction <maximumf>, %110, %cst_35 [1] : vector<128x128xf32> to vector<128xf32>
    %112 = vector.shape_cast %111 : vector<128xf32> to vector<128x1xf32>
    %113 = vector.broadcast %112 : vector<128x1xf32> to vector<128x128xf32>
    %114 = arith.subf %110, %113 : vector<128x128xf32>
    %115 = math.exp %114 : vector<128x128xf32>
    %cst_36 = arith.constant dense<0.000000e+00> : vector<128xf32>
    %116 = vector.multi_reduction <add>, %115, %cst_36 [1] : vector<128x128xf32> to vector<128xf32>
    %117 = vector.shape_cast %116 : vector<128xf32> to vector<128x1xf32>
    %118 = tpu.reciprocal %117 {approx = true} : vector<128x1xf32> -> vector<128x1xf32>
    %119 = vector.broadcast %118 : vector<128x1xf32> to vector<128x128xf32>
    %120 = arith.mulf %115, %119 : vector<128x128xf32>
    %121 = arith.truncf %120 : vector<128x128xf32> to vector<128x128xbf16>
    %cst_37 = arith.constant dense<0.000000e+00> : vector<128x128xf32>
    %122 = tpu.matmul %121, %106, %cst_37 {dimension_numbers = #tpu.dot_dimension_numbers<[1], [0], [0], [1], [0, 0, 1, 1], [], []>} : vector<128x128xbf16>, vector<128x128xbf16>, vector<128x128xf32> -> vector<128x128xf32>
    %123 = tpu.concatenate %56, %78, %100, %122 in 1 : vector<128x128xf32>, vector<128x128xf32>, vector<128x128xf32>, vector<128x128xf32> -> vector<128x512xf32>
    %124 = arith.truncf %123 : vector<128x512xf32> to vector<128x512xbf16>
    %c0_38 = arith.constant 0 : index
    %c0_39 = arith.constant 0 : index
    %c0_40 = arith.constant 0 : index
    %125 = vector.load %arg6[%c0_38, %c0_39, %c0_40] : memref<1x512x128xbf16, #tpu.memory_space<vmem>>, vector<1x512x128xbf16>
    %126 = vector.shape_cast %125 : vector<1x512x128xbf16> to vector<512x128xbf16>
    %cst_41 = arith.constant dense<0.000000e+00> : vector<128x128xf32>
    %127 = tpu.matmul %124, %126, %cst_41 {dimension_numbers = #tpu.dot_dimension_numbers<[1], [0], [0], [1], [0, 0, 1, 1], [], []>} : vector<128x512xbf16>, vector<512x128xbf16>, vector<128x128xf32> -> vector<128x128xf32>
    %128 = arith.addf %3, %127 : vector<128x128xf32>
    %c0_42 = arith.constant 0 : index
    %c0_43 = arith.constant 0 : index
    %c0_44 = arith.constant 0 : index
    %129 = vector.load %arg7[%c0_42, %c0_43, %c0_44] : memref<1x1x128xf32, #tpu.memory_space<vmem>>, vector<1x1x128xf32>
    %130 = vector.shape_cast %129 : vector<1x1x128xf32> to vector<1x128xf32>
    %131 = vector.broadcast %130 : vector<1x128xf32> to vector<128x128xf32>
    %132 = arith.addf %128, %131 : vector<128x128xf32>
    %c0_45 = arith.constant 0 : index
    %c0_46 = arith.constant 0 : index
    %c0_47 = arith.constant 0 : index
    %133 = vector.load %arg8[%c0_45, %c0_46, %c0_47] : memref<1x1x128xf32, #tpu.memory_space<vmem>>, vector<1x1x128xf32>
    %134 = vector.shape_cast %133 : vector<1x1x128xf32> to vector<1x128xf32>
    %c0_48 = arith.constant 0 : index
    %c0_49 = arith.constant 0 : index
    %c0_50 = arith.constant 0 : index
    %135 = vector.load %arg9[%c0_48, %c0_49, %c0_50] : memref<1x1x128xf32, #tpu.memory_space<vmem>>, vector<1x1x128xf32>
    %136 = vector.shape_cast %135 : vector<1x1x128xf32> to vector<1x128xf32>
    %cst_51 = arith.constant dense<0.000000e+00> : vector<128xf32>
    %137 = vector.multi_reduction <add>, %132, %cst_51 [1] : vector<128x128xf32> to vector<128xf32>
    %138 = vector.shape_cast %137 : vector<128xf32> to vector<128x1xf32>
    %cst_52 = arith.constant 1.280000e+02 : f32
    %139 = vector.broadcast %cst_52 : f32 to vector<128x1xf32>
    %140 = arith.divf %138, %139 : vector<128x1xf32>
    %141 = vector.broadcast %140 : vector<128x1xf32> to vector<128x128xf32>
    %142 = arith.subf %132, %141 : vector<128x128xf32>
    %143 = arith.mulf %142, %142 : vector<128x128xf32>
    %cst_53 = arith.constant dense<0.000000e+00> : vector<128xf32>
    %144 = vector.multi_reduction <add>, %143, %cst_53 [1] : vector<128x128xf32> to vector<128xf32>
    %145 = vector.shape_cast %144 : vector<128xf32> to vector<128x1xf32>
    %cst_54 = arith.constant 1.280000e+02 : f32
    %146 = vector.broadcast %cst_54 : f32 to vector<128x1xf32>
    %147 = arith.divf %145, %146 : vector<128x1xf32>
    %148 = vector.broadcast %140 : vector<128x1xf32> to vector<128x128xf32>
    %149 = arith.subf %132, %148 : vector<128x128xf32>
    %cst_55 = arith.constant 9.99999974E-6 : f32
    %150 = vector.broadcast %cst_55 : f32 to vector<128x1xf32>
    %151 = arith.addf %147, %150 : vector<128x1xf32>
    %152 = math.rsqrt %151 : vector<128x1xf32>
    %153 = vector.broadcast %152 : vector<128x1xf32> to vector<128x128xf32>
    %154 = arith.mulf %149, %153 : vector<128x128xf32>
    %155 = vector.broadcast %134 : vector<1x128xf32> to vector<128x128xf32>
    %156 = arith.mulf %154, %155 : vector<128x128xf32>
    %157 = vector.broadcast %136 : vector<1x128xf32> to vector<128x128xf32>
    %158 = arith.addf %156, %157 : vector<128x128xf32>
    %159 = arith.truncf %158 : vector<128x128xf32> to vector<128x128xbf16>
    %c0_56 = arith.constant 0 : index
    %c0_57 = arith.constant 0 : index
    %c0_58 = arith.constant 0 : index
    %160 = vector.load %arg10[%c0_56, %c0_57, %c0_58] : memref<1x128x512xbf16, #tpu.memory_space<vmem>>, vector<1x128x512xbf16>
    %161 = vector.shape_cast %160 : vector<1x128x512xbf16> to vector<128x512xbf16>
    %cst_59 = arith.constant dense<0.000000e+00> : vector<128x512xf32>
    %162 = tpu.matmul %159, %161, %cst_59 {dimension_numbers = #tpu.dot_dimension_numbers<[1], [0], [0], [1], [0, 0, 1, 1], [], []>} : vector<128x128xbf16>, vector<128x512xbf16>, vector<128x512xf32> -> vector<128x512xf32>
    %c0_60 = arith.constant 0 : index
    %c0_61 = arith.constant 0 : index
    %c0_62 = arith.constant 0 : index
    %163 = vector.load %arg11[%c0_60, %c0_61, %c0_62] : memref<1x1x512xf32, #tpu.memory_space<vmem>>, vector<1x1x512xf32>
    %164 = vector.shape_cast %163 : vector<1x1x512xf32> to vector<1x512xf32>
    %165 = vector.broadcast %164 : vector<1x512xf32> to vector<128x512xf32>
    %166 = arith.addf %162, %165 : vector<128x512xf32>
    %cst_63 = arith.constant 0.000000e+00 : f32
    %167 = vector.broadcast %cst_63 : f32 to vector<128x512xf32>
    %168 = arith.maximumf %166, %167 : vector<128x512xf32>
    %169 = arith.truncf %168 : vector<128x512xf32> to vector<128x512xbf16>
    %c0_64 = arith.constant 0 : index
    %c0_65 = arith.constant 0 : index
    %c0_66 = arith.constant 0 : index
    %170 = vector.load %arg12[%c0_64, %c0_65, %c0_66] : memref<1x512x128xbf16, #tpu.memory_space<vmem>>, vector<1x512x128xbf16>
    %171 = vector.shape_cast %170 : vector<1x512x128xbf16> to vector<512x128xbf16>
    %cst_67 = arith.constant dense<0.000000e+00> : vector<128x128xf32>
    %172 = tpu.matmul %169, %171, %cst_67 {dimension_numbers = #tpu.dot_dimension_numbers<[1], [0], [0], [1], [0, 0, 1, 1], [], []>} : vector<128x512xbf16>, vector<512x128xbf16>, vector<128x128xf32> -> vector<128x128xf32>
    %c0_68 = arith.constant 0 : index
    %c0_69 = arith.constant 0 : index
    %c0_70 = arith.constant 0 : index
    %173 = vector.load %arg13[%c0_68, %c0_69, %c0_70] : memref<1x1x128xf32, #tpu.memory_space<vmem>>, vector<1x1x128xf32>
    %174 = vector.shape_cast %173 : vector<1x1x128xf32> to vector<1x128xf32>
    %175 = vector.broadcast %174 : vector<1x128xf32> to vector<128x128xf32>
    %176 = arith.addf %172, %175 : vector<128x128xf32>
    %177 = arith.addf %132, %176 : vector<128x128xf32>
    %c0_71 = arith.constant 0 : index
    %c0_72 = arith.constant 0 : index
    %178 = vector.load %arg17[%c0_71, %c0_72] : memref<128x128xf32, #tpu.memory_space<vmem>>, vector<128x128xf32>
    tpu.vector_store %arg17[%c0_71, %c0_72], %177 {strides = array<i32>} : memref<128x128xf32, #tpu.memory_space<vmem>>, vector<128x128xf32>,
    %c3_i32 = arith.constant 3 : i32
    %179 = arith.cmpi eq, %arg0, %c3_i32 : i32
    %180 = arith.extui %179 : i1 to i32
    %c0_i32_73 = arith.constant 0 : i32
    %181 = arith.cmpi ne, %180, %c0_i32_73 : i32
    scf.if %181 {
      %182 = arith.truncf %177 : vector<128x128xf32> to vector<128x128xbf16>
      %c0_74 = arith.constant 0 : index
      %c0_75 = arith.constant 0 : index
      %183 = vector.load %arg14[%c0_74, %c0_75] : memref<128x128xbf16, #tpu.memory_space<vmem>>, vector<128x128xbf16>
      %cst_76 = arith.constant dense<0.000000e+00> : vector<128x128xf32>
      %184 = tpu.matmul %182, %183, %cst_76 {dimension_numbers = #tpu.dot_dimension_numbers<[1], [0], [0], [1], [0, 0, 1, 1], [], []>} : vector<128x128xbf16>, vector<128x128xbf16>, vector<128x128xf32> -> vector<128x128xf32>
      %c0_77 = arith.constant 0 : index
      %c0_78 = arith.constant 0 : index
      %185 = vector.load %arg15[%c0_77, %c0_78] : memref<1x128xf32, #tpu.memory_space<vmem>>, vector<1x128xf32>
      %186 = vector.broadcast %185 : vector<1x128xf32> to vector<128x128xf32>
      %187 = arith.addf %184, %186 : vector<128x128xf32>
      %c0_79 = arith.constant 0 : index
      %c0_80 = arith.constant 0 : index
      %188 = vector.load %arg16[%c0_79, %c0_80] : memref<128x128xf32, #tpu.memory_space<vmem>>, vector<128x128xf32>
      tpu.vector_store %arg16[%c0_79, %c0_80], %187 {strides = array<i32>} : memref<128x128xf32, #tpu.memory_space<vmem>>, vector<128x128xf32>,
    } else {
    }
    return
  }
  func.func @transform_0(%arg0: i32) -> (i32, i32) {
    %c0_i32 = arith.constant 0 : i32
    %c0_i32_0 = arith.constant 0 : i32
    %c0_i32_1 = arith.constant 0 : i32
    return %c0_i32, %c0_i32_0 : i32, i32
  }
  func.func @transform_1(%arg0: i32) -> (i32, i32) {
    %c0_i32 = arith.constant 0 : i32
    %c0_i32_0 = arith.constant 0 : i32
    %c0_i32_1 = arith.constant 0 : i32
    return %c0_i32, %c0_i32_0 : i32, i32
  }
  func.func @transform_2(%arg0: i32) -> (i32, i32, i32) {
    %c0_i32 = arith.constant 0 : i32
    %c0_i32_0 = arith.constant 0 : i32
    %c0_i32_1 = arith.constant 0 : i32
    return %arg0, %c0_i32, %c0_i32_0 : i32, i32, i32
  }
  func.func @transform_3(%arg0: i32) -> (i32, i32, i32) {
    %c0_i32 = arith.constant 0 : i32
    %c0_i32_0 = arith.constant 0 : i32
    %c0_i32_1 = arith.constant 0 : i32
    return %arg0, %c0_i32, %c0_i32_0 : i32, i32, i32
  }
  func.func @transform_4(%arg0: i32) -> (i32, i32, i32) {
    %c0_i32 = arith.constant 0 : i32
    %c0_i32_0 = arith.constant 0 : i32
    %c0_i32_1 = arith.constant 0 : i32
    return %arg0, %c0_i32, %c0_i32_0 : i32, i32, i32
  }
  func.func @transform_5(%arg0: i32) -> (i32, i32, i32) {
    %c0_i32 = arith.constant 0 : i32
    %c0_i32_0 = arith.constant 0 : i32
    %c0_i32_1 = arith.constant 0 : i32
    return %arg0, %c0_i32, %c0_i32_0 : i32, i32, i32
  }
  func.func @transform_6(%arg0: i32) -> (i32, i32, i32) {
    %c0_i32 = arith.constant 0 : i32
    %c0_i32_0 = arith.constant 0 : i32
    %c0_i32_1 = arith.constant 0 : i32
    return %arg0, %c0_i32, %c0_i32_0 : i32, i32, i32
  }
  func.func @transform_7(%arg0: i32) -> (i32, i32, i32) {
    %c0_i32 = arith.constant 0 : i32
    %c0_i32_0 = arith.constant 0 : i32
    %c0_i32_1 = arith.constant 0 : i32
    return %arg0, %c0_i32, %c0_i32_0 : i32, i32, i32
  }
  func.func @transform_8(%arg0: i32) -> (i32, i32, i32) {
    %c0_i32 = arith.constant 0 : i32
    %c0_i32_0 = arith.constant 0 : i32
    %c0_i32_1 = arith.constant 0 : i32
    return %arg0, %c0_i32, %c0_i32_0 : i32, i32, i32
  }
  func.func @transform_9(%arg0: i32) -> (i32, i32, i32) {
    %c0_i32 = arith.constant 0 : i32
    %c0_i32_0 = arith.constant 0 : i32
    %c0_i32_1 = arith.constant 0 : i32
    return %arg0, %c0_i32, %c0_i32_0 : i32, i32, i32
  }
  func.func @transform_10(%arg0: i32) -> (i32, i32, i32) {
    %c0_i32 = arith.constant 0 : i32
    %c0_i32_0 = arith.constant 0 : i32
    %c0_i32_1 = arith.constant 0 : i32
    return %arg0, %c0_i32, %c0_i32_0 : i32, i32, i32
  }
  func.func @transform_11(%arg0: i32) -> (i32, i32, i32) {
    %c0_i32 = arith.constant 0 : i32
    %c0_i32_0 = arith.constant 0 : i32
    %c0_i32_1 = arith.constant 0 : i32
    return %arg0, %c0_i32, %c0_i32_0 : i32, i32, i32
  }
  func.func @transform_12(%arg0: i32) -> (i32, i32, i32) {
    %c0_i32 = arith.constant 0 : i32
    %c0_i32_0 = arith.constant 0 : i32
    %c0_i32_1 = arith.constant 0 : i32
    return %arg0, %c0_i32, %c0_i32_0 : i32, i32, i32
  }
  func.func @transform_13(%arg0: i32) -> (i32, i32) {
    %c0_i32 = arith.constant 0 : i32
    %c0_i32_0 = arith.constant 0 : i32
    %c0_i32_1 = arith.constant 0 : i32
    return %c0_i32, %c0_i32_0 : i32, i32
  }
  func.func @transform_14(%arg0: i32) -> (i32, i32) {
    %c0_i32 = arith.constant 0 : i32
    %c0_i32_0 = arith.constant 0 : i32
    %c0_i32_1 = arith.constant 0 : i32
    return %c0_i32, %c0_i32_0 : i32, i32
  }
  func.func @transform_15(%arg0: i32) -> (i32, i32) {
    %c0_i32 = arith.constant 0 : i32
    %c0_i32_0 = arith.constant 0 : i32
    %c0_i32_1 = arith.constant 0 : i32
    return %c0_i32, %c0_i32_0 : i32, i32
  }
}

</mosaic_0001>

<llo_original>
// kernel: tpu_custom_call.1
$region0: #{tpu_custom_call.1}
  #allocation0 [shape = 'u32[]', space=smem, size = 0x4, offset = 0x4, fixed_abs, tag = 'smem constant byte address 0x4 - core index']
  #allocation1 [shape = 'u32[144,128]{1,0:T(1,128)}', space=vmem, size = 0x12000, scoped, tag = 'internal scratch']
  #allocation2 [shape = 'f32[128,128]{1,0:T(8,128)}', space=vmem, size = 0x10000, scoped, tag = 'scratch operand']
  %s0 = inlined_call_operand.hbm [shape: f32[128,128], index: 0, kind: input, shape index: {}]
  %s1 = inlined_call_operand.hbm [shape: f32[128,128], index: 1, kind: input, shape index: {}]
  %s2 = inlined_call_operand.hbm [shape: f32[4,1,128], index: 2, kind: input, shape index: {}]
  %s3 = inlined_call_operand.hbm [shape: f32[4,1,128], index: 3, kind: input, shape index: {}]
  %s4 = inlined_call_operand.hbm [shape: bf16[4,128,1536], index: 4, kind: input, shape index: {}]
  %s5 = inlined_call_operand.hbm [shape: bf16[4,512,128], index: 5, kind: input, shape index: {}]
  %s6 = inlined_call_operand.hbm [shape: f32[4,1,128], index: 6, kind: input, shape index: {}]
  %s7 = inlined_call_operand.hbm [shape: f32[4,1,128], index: 7, kind: input, shape index: {}]
  %s8 = inlined_call_operand.hbm [shape: f32[4,1,128], index: 8, kind: input, shape index: {}]
  %s9 = inlined_call_operand.hbm [shape: bf16[4,128,512], index: 9, kind: input, shape index: {}]
  %s10 = inlined_call_operand.hbm [shape: f32[4,1,512], index: 10, kind: input, shape index: {}]
  %s11 = inlined_call_operand.hbm [shape: bf16[4,512,128], index: 11, kind: input, shape index: {}]
  %s12 = inlined_call_operand.hbm [shape: f32[4,1,128], index: 12, kind: input, shape index: {}]
  %s13 = inlined_call_operand.hbm [shape: bf16[128,128], index: 13, kind: input, shape index: {}]
  %s14 = inlined_call_operand.hbm [shape: f32[1,128], index: 14, kind: input, shape index: {}]
  %s15 = inlined_call_operand.hbm [shape: f32[128,128], index: 15, kind: output, shape index: {}]
  %s16 = sld [smem:[#allocation0]]
  $region161: #{tpu_custom_call.1} parent=0
    _
  %s18 = ssub.s32 1, %s16
  %s19 = scalar_select 0, %s18, %s16
  $region1: #{tpu_custom_call.1} parent=0
    #allocation3 [shape = 'u8[65536]{0}', space=vmem, size = 0x10000, scoped, tag = 'input window, operand 0, single buffered']
    #allocation4 [shape = 's32[2]{0}', space=sflag, size = 0x8, scoped, tag = 'scoped memory for tpu_custom_call.1']
    #allocation5 [shape = 's32[2]{0}', space=sflag, size = 0x8, scoped, tag = 'scoped memory for tpu_custom_call.1']
    #allocation6 [shape = 'u8[65536]{0}', space=vmem, size = 0x10000, scoped, tag = 'input window, operand 1, single buffered']
    #allocation7 [shape = 's32[1]{0}', space=sflag, size = 0x4, scoped, tag = 'scoped memory for tpu_custom_call.1']
    #allocation8 [shape = 'u8[1024]{0}', space=vmem, size = 0x400, scoped, tag = 'input window, operand 2']
    #allocation9 [shape = 'u8[1024]{0}', space=vmem, size = 0x400, scoped, tag = 'input window, operand 3']
    #allocation10 [shape = 'u8[786432]{0}', space=vmem, size = 0xc0000, scoped, tag = 'input window, operand 4']
    #allocation11 [shape = 'u8[262144]{0}', space=vmem, size = 0x40000, scoped, tag = 'input window, operand 5']
    #allocation12 [shape = 'u8[1024]{0}', space=vmem, size = 0x400, scoped, tag = 'input window, operand 6']
    #allocation13 [shape = 'u8[1024]{0}', space=vmem, size = 0x400, scoped, tag = 'input window, operand 7']
    #allocation14 [shape = 'u8[1024]{0}', space=vmem, size = 0x400, scoped, tag = 'input window, operand 8']
    #allocation15 [shape = 'u8[262144]{0}', space=vmem, size = 0x40000, scoped, tag = 'input window, operand 9']
    #allocation16 [shape = 'u8[4096]{0}', space=vmem, size = 0x1000, scoped, tag = 'input window, operand 10']
    #allocation17 [shape = 'u8[262144]{0}', space=vmem, size = 0x40000, scoped, tag = 'input window, operand 11']
    #allocation18 [shape = 'u8[1024]{0}', space=vmem, size = 0x400, scoped, tag = 'input window, operand 12']
    #allocation19 [shape = 'u8[32768]{0}', space=vmem, size = 0x8000, scoped, tag = 'input window, operand 13, single buffered']
    #allocation20 [shape = 'u8[512]{0}', space=vmem, size = 0x400, scoped, tag = 'input window, operand 14, single buffered']
    #allocation21 [shape = 's32[1]{0}', space=sflag, size = 0x4, scoped, tag = 'scoped memory for tpu_custom_call.1']
    #allocation22 [shape = 'u8[65536]{0}', space=vmem, size = 0x10000, scoped, tag = 'output window, operand 0, single buffered']
    %20 = vsyncpa [#allocation4], 0
    %21 = vsyncpa [#allocation7], 0
    %22 = vsyncpa [#allocation21], 0
    %23 = vsyncpa [#allocation5], 0
    loop: start=0, step=1, limit=6
    $region2: #{tpu_custom_call.1} parent=1 // loop_pre_header
      _
    $region3: #{tpu_custom_call.1} parent=1 // loop_header
      %s25 = sphi 0, %s29
      %p26 = scmp.ge.s32.totalorder %s25, 6
      %s33 = sphi 0, %s33
      %s35 = sphi 0, %s33
      %s36 = sphi 0, %s35
      %s50 = sphi 0, %s36
      %s54 = sphi 0, %s54
      %s56 = sphi 0, %s54
      %s57 = sphi 0, %s56
      %s71 = sphi 0, %s57
      %s77 = sphi 0, %s79
      %s80 = sphi 0, %s77
      %s81 = sphi 0, %s80
      %s97 = sphi 0, %s81
      %s103 = sphi 0, %s105
      %s106 = sphi 0, %s103
      %s107 = sphi 0, %s106
      %s123 = sphi 0, %s107
      %s129 = sphi 0, %s131
      %s132 = sphi 0, %s129
      %s133 = sphi 0, %s132
      %s149 = sphi 0, %s133
      %s155 = sphi 0, %s157
      %s158 = sphi 0, %s155
      %s159 = sphi 0, %s158
      %s175 = sphi 0, %s159
      %s181 = sphi 0, %s183
      %s184 = sphi 0, %s181
      %s185 = sphi 0, %s184
      %s201 = sphi 0, %s185
      %s207 = sphi 0, %s209
      %s210 = sphi 0, %s207
      %s211 = sphi 0, %s210
      %s227 = sphi 0, %s211
      %s233 = sphi 0, %s235
      %s236 = sphi 0, %s233
      %s237 = sphi 0, %s236
      %s253 = sphi 0, %s237
      %s259 = sphi 0, %s261
      %s262 = sphi 0, %s259
      %s263 = sphi 0, %s262
      %s279 = sphi 0, %s263
      %s285 = sphi 0, %s287
      %s288 = sphi 0, %s285
      %s289 = sphi 0, %s288
      %s305 = sphi 0, %s289
      %s311 = sphi 0, %s313
      %s314 = sphi 0, %s311
      %s315 = sphi 0, %s314
      %s331 = sphi 0, %s315
      %s337 = sphi 0, %s339
      %s340 = sphi 0, %s337
      %s341 = sphi 0, %s340
      %s357 = sphi 0, %s341
      %s361 = sphi 0, %s361
      %s363 = sphi 0, %s361
      %s364 = sphi 0, %s363
      %s378 = sphi 0, %s364
      %s382 = sphi 0, %s382
      %s384 = sphi 0, %s382
      %s385 = sphi 0, %s384
      %s399 = sphi 0, %s385
      %s403 = sphi 0, %s403
      %s405 = sphi 0, %s403
      %s406 = sphi 0, %s405
      %s420 = sphi 0, %s406
    $region4: #{tpu_custom_call.1} parent=1 // loop_header_branch
      %28 = sbr.rel (%p26) target = $region8
    $region5: #{tpu_custom_call.1} parent=1 // loop_body
      %s30 = ssub.s32 %s25, 1
      %s31 = ssub.s32 %s25, 2
      %s32 = sadd.s32 %s25, 1
      %s34 = sadd.s32 %s33, 1
      %p37 = scmp.eq.s32.totalorder %s25, 3
      %p38 = scmp.ne.s32.totalorder %s33, %s35
      %p39 = scmp.eq.s32.totalorder %s25, 0
      %p40 = por %p38, %p39
      %p41 = scmp.ne.s32.totalorder %s33, %s35
      %p42 = scmp.eq.s32.totalorder %s30, 3
      %p43 = por %p41, %p42
      %p44 = scmp.ne.s32.totalorder %s35, %s36
      %p45 = scmp.eq.s32.totalorder %s30, 0
      %p46 = por %p44, %p45
      %p47 = scmp.ne.s32.totalorder %s35, %s36
      %p48 = scmp.eq.s32.totalorder %s31, 3
      %p49 = por %p47, %p48
      %p51 = scmp.ne.s32.totalorder %s36, %s50
      %p52 = scmp.eq.s32.totalorder %s31, 0
      %p53 = por %p51, %p52
      %s55 = sadd.s32 %s54, 1
      %p58 = scmp.eq.s32.totalorder %s25, 3
      %p59 = scmp.ne.s32.totalorder %s54, %s56
      %p60 = scmp.eq.s32.totalorder %s25, 0
      %p61 = por %p59, %p60
      %p62 = scmp.ne.s32.totalorder %s54, %s56
      %p63 = scmp.eq.s32.totalorder %s30, 3
      %p64 = por %p62, %p63
      %p65 = scmp.ne.s32.totalorder %s56, %s57
      %p66 = scmp.eq.s32.totalorder %s30, 0
      %p67 = por %p65, %p66
      %p68 = scmp.ne.s32.totalorder %s56, %s57
      %p69 = scmp.eq.s32.totalorder %s31, 3
      %p70 = por %p68, %p69
      %p72 = scmp.ne.s32.totalorder %s57, %s71
      %p73 = scmp.eq.s32.totalorder %s31, 0
      %p74 = por %p72, %p73
      %s75 = ssub.s32 %s25, %s32
      %p76 = scmp.eq.s32.totalorder %s75, 0
      %s78 = sadd.s32 %s77, 1
      %s79 = scalar_select %p76, %s77, %s78
      %p82 = pneg %p76
      %p83 = scmp.eq.s32.totalorder %s25, 3
      %p84 = por %p82, %p83
      %p85 = scmp.ne.s32.totalorder %s77, %s80
      %p86 = scmp.eq.s32.totalorder %s25, 0
      %p87 = por %p85, %p86
      %p88 = scmp.ne.s32.totalorder %s77, %s80
      %p89 = scmp.eq.s32.totalorder %s30, 3
      %p90 = por %p88, %p89
      %p91 = scmp.ne.s32.totalorder %s80, %s81
      %p92 = scmp.eq.s32.totalorder %s30, 0
      %p93 = por %p91, %p92
      %p94 = scmp.ne.s32.totalorder %s80, %s81
      %p95 = scmp.eq.s32.totalorder %s31, 3
      %p96 = por %p94, %p95
      %p98 = scmp.ne.s32.totalorder %s81, %s97
      %p99 = scmp.eq.s32.totalorder %s31, 0
      %p100 = por %p98, %p99
      %s101 = ssub.s32 %s25, %s32
      %p102 = scmp.eq.s32.totalorder %s101, 0
      %s104 = sadd.s32 %s103, 1
      %s105 = scalar_select %p102, %s103, %s104
      %p108 = pneg %p102
      %p109 = scmp.eq.s32.totalorder %s25, 3
      %p110 = por %p108, %p109
      %p111 = scmp.ne.s32.totalorder %s103, %s106
      %p112 = scmp.eq.s32.totalorder %s25, 0
      %p113 = por %p111, %p112
      %p114 = scmp.ne.s32.totalorder %s103, %s106
      %p115 = scmp.eq.s32.totalorder %s30, 3
      %p116 = por %p114, %p115
      %p117 = scmp.ne.s32.totalorder %s106, %s107
      %p118 = scmp.eq.s32.totalorder %s30, 0
      %p119 = por %p117, %p118
      %p120 = scmp.ne.s32.totalorder %s106, %s107
      %p121 = scmp.eq.s32.totalorder %s31, 3
      %p122 = por %p120, %p121
      %p124 = scmp.ne.s32.totalorder %s107, %s123
      %p125 = scmp.eq.s32.totalorder %s31, 0
      %p126 = por %p124, %p125
      %s127 = ssub.s32 %s25, %s32
      %p128 = scmp.eq.s32.totalorder %s127, 0
      %s130 = sadd.s32 %s129, 1
      %s131 = scalar_select %p128, %s129, %s130
      %p134 = pneg %p128
      %p135 = scmp.eq.s32.totalorder %s25, 3
      %p136 = por %p134, %p135
      %p137 = scmp.ne.s32.totalorder %s129, %s132
      %p138 = scmp.eq.s32.totalorder %s25, 0
      %p139 = por %p137, %p138
      %p140 = scmp.ne.s32.totalorder %s129, %s132
      %p141 = scmp.eq.s32.totalorder %s30, 3
      %p142 = por %p140, %p141
      %p143 = scmp.ne.s32.totalorder %s132, %s133
      %p144 = scmp.eq.s32.totalorder %s30, 0
      %p145 = por %p143, %p144
      %p146 = scmp.ne.s32.totalorder %s132, %s133
      %p147 = scmp.eq.s32.totalorder %s31, 3
      %p148 = por %p146, %p147
      %p150 = scmp.ne.s32.totalorder %s133, %s149
      %p151 = scmp.eq.s32.totalorder %s31, 0
      %p152 = por %p150, %p151
      %s153 = ssub.s32 %s25, %s32
      %p154 = scmp.eq.s32.totalorder %s153, 0
      %s156 = sadd.s32 %s155, 1
      %s157 = scalar_select %p154, %s155, %s156
      %p160 = pneg %p154
      %p161 = scmp.eq.s32.totalorder %s25, 3
      %p162 = por %p160, %p161
      %p163 = scmp.ne.s32.totalorder %s155, %s158
      %p164 = scmp.eq.s32.totalorder %s25, 0
      %p165 = por %p163, %p164
      %p166 = scmp.ne.s32.totalorder %s155, %s158
      %p167 = scmp.eq.s32.totalorder %s30, 3
      %p168 = por %p166, %p167
      %p169 = scmp.ne.s32.totalorder %s158, %s159
      %p170 = scmp.eq.s32.totalorder %s30, 0
      %p171 = por %p169, %p170
      %p172 = scmp.ne.s32.totalorder %s158, %s159
      %p173 = scmp.eq.s32.totalorder %s31, 3
      %p174 = por %p172, %p173
      %p176 = scmp.ne.s32.totalorder %s159, %s175
      %p177 = scmp.eq.s32.totalorder %s31, 0
      %p178 = por %p176, %p177
      %s179 = ssub.s32 %s25, %s32
      %p180 = scmp.eq.s32.totalorder %s179, 0
      %s182 = sadd.s32 %s181, 1
      %s183 = scalar_select %p180, %s181, %s182
      %p186 = pneg %p180
      %p187 = scmp.eq.s32.totalorder %s25, 3
      %p188 = por %p186, %p187
      %p189 = scmp.ne.s32.totalorder %s181, %s184
      %p190 = scmp.eq.s32.totalorder %s25, 0
      %p191 = por %p189, %p190
      %p192 = scmp.ne.s32.totalorder %s181, %s184
      %p193 = scmp.eq.s32.totalorder %s30, 3
      %p194 = por %p192, %p193
      %p195 = scmp.ne.s32.totalorder %s184, %s185
      %p196 = scmp.eq.s32.totalorder %s30, 0
      %p197 = por %p195, %p196
      %p198 = scmp.ne.s32.totalorder %s184, %s185
      %p199 = scmp.eq.s32.totalorder %s31, 3
      %p200 = por %p198, %p199
      %p202 = scmp.ne.s32.totalorder %s185, %s201
      %p203 = scmp.eq.s32.totalorder %s31, 0
      %p204 = por %p202, %p203
      %s205 = ssub.s32 %s25, %s32
      %p206 = scmp.eq.s32.totalorder %s205, 0
      %s208 = sadd.s32 %s207, 1
      %s209 = scalar_select %p206, %s207, %s208
      %p212 = pneg %p206
      %p213 = scmp.eq.s32.totalorder %s25, 3
      %p214 = por %p212, %p213
      %p215 = scmp.ne.s32.totalorder %s207, %s210
      %p216 = scmp.eq.s32.totalorder %s25, 0
      %p217 = por %p215, %p216
      %p218 = scmp.ne.s32.totalorder %s207, %s210
      %p219 = scmp.eq.s32.totalorder %s30, 3
      %p220 = por %p218, %p219
      %p221 = scmp.ne.s32.totalorder %s210, %s211
      %p222 = scmp.eq.s32.totalorder %s30, 0
      %p223 = por %p221, %p222
      %p224 = scmp.ne.s32.totalorder %s210, %s211
      %p225 = scmp.eq.s32.totalorder %s31, 3
      %p226 = por %p224, %p225
      %p228 = scmp.ne.s32.totalorder %s211, %s227
      %p229 = scmp.eq.s32.totalorder %s31, 0
      %p230 = por %p228, %p229
      %s231 = ssub.s32 %s25, %s32
      %p232 = scmp.eq.s32.totalorder %s231, 0
      %s234 = sadd.s32 %s233, 1
      %s235 = scalar_select %p232, %s233, %s234
      %p238 = pneg %p232
      %p239 = scmp.eq.s32.totalorder %s25, 3
      %p240 = por %p238, %p239
      %p241 = scmp.ne.s32.totalorder %s233, %s236
      %p242 = scmp.eq.s32.totalorder %s25, 0
      %p243 = por %p241, %p242
      %p244 = scmp.ne.s32.totalorder %s233, %s236
      %p245 = scmp.eq.s32.totalorder %s30, 3
      %p246 = por %p244, %p245
      %p247 = scmp.ne.s32.totalorder %s236, %s237
      %p248 = scmp.eq.s32.totalorder %s30, 0
      %p249 = por %p247, %p248
      %p250 = scmp.ne.s32.totalorder %s236, %s237
      %p251 = scmp.eq.s32.totalorder %s31, 3
      %p252 = por %p250, %p251
      %p254 = scmp.ne.s32.totalorder %s237, %s253
      %p255 = scmp.eq.s32.totalorder %s31, 0
      %p256 = por %p254, %p255
      %s257 = ssub.s32 %s25, %s32
      %p258 = scmp.eq.s32.totalorder %s257, 0
      %s260 = sadd.s32 %s259, 1
      %s261 = scalar_select %p258, %s259, %s260
      %p264 = pneg %p258
      %p265 = scmp.eq.s32.totalorder %s25, 3
      %p266 = por %p264, %p265
      %p267 = scmp.ne.s32.totalorder %s259, %s262
      %p268 = scmp.eq.s32.totalorder %s25, 0
      %p269 = por %p267, %p268
      %p270 = scmp.ne.s32.totalorder %s259, %s262
      %p271 = scmp.eq.s32.totalorder %s30, 3
      %p272 = por %p270, %p271
      %p273 = scmp.ne.s32.totalorder %s262, %s263
      %p274 = scmp.eq.s32.totalorder %s30, 0
      %p275 = por %p273, %p274
      %p276 = scmp.ne.s32.totalorder %s262, %s263
      %p277 = scmp.eq.s32.totalorder %s31, 3
      %p278 = por %p276, %p277
      %p280 = scmp.ne.s32.totalorder %s263, %s279
      %p281 = scmp.eq.s32.totalorder %s31, 0
      %p282 = por %p280, %p281
      %s283 = ssub.s32 %s25, %s32
      %p284 = scmp.eq.s32.totalorder %s283, 0
      %s286 = sadd.s32 %s285, 1
      %s287 = scalar_select %p284, %s285, %s286
      %p290 = pneg %p284
      %p291 = scmp.eq.s32.totalorder %s25, 3
      %p292 = por %p290, %p291
      %p293 = scmp.ne.s32.totalorder %s285, %s288
      %p294 = scmp.eq.s32.totalorder %s25, 0
      %p295 = por %p293, %p294
      %p296 = scmp.ne.s32.totalorder %s285, %s288
      %p297 = scmp.eq.s32.totalorder %s30, 3
      %p298 = por %p296, %p297
      %p299 = scmp.ne.s32.totalorder %s288, %s289
      %p300 = scmp.eq.s32.totalorder %s30, 0
      %p301 = por %p299, %p300
      %p302 = scmp.ne.s32.totalorder %s288, %s289
      %p303 = scmp.eq.s32.totalorder %s31, 3
      %p304 = por %p302, %p303
      %p306 = scmp.ne.s32.totalorder %s289, %s305
      %p307 = scmp.eq.s32.totalorder %s31, 0
      %p308 = por %p306, %p307
      %s309 = ssub.s32 %s25, %s32
      %p310 = scmp.eq.s32.totalorder %s309, 0
      %s312 = sadd.s32 %s311, 1
      %s313 = scalar_select %p310, %s311, %s312
      %p316 = pneg %p310
      %p317 = scmp.eq.s32.totalorder %s25, 3
      %p318 = por %p316, %p317
      %p319 = scmp.ne.s32.totalorder %s311, %s314
      %p320 = scmp.eq.s32.totalorder %s25, 0
      %p321 = por %p319, %p320
      %p322 = scmp.ne.s32.totalorder %s311, %s314
      %p323 = scmp.eq.s32.totalorder %s30, 3
      %p324 = por %p322, %p323
      %p325 = scmp.ne.s32.totalorder %s314, %s315
      %p326 = scmp.eq.s32.totalorder %s30, 0
      %p327 = por %p325, %p326
      %p328 = scmp.ne.s32.totalorder %s314, %s315
      %p329 = scmp.eq.s32.totalorder %s31, 3
      %p330 = por %p328, %p329
      %p332 = scmp.ne.s32.totalorder %s315, %s331
      %p333 = scmp.eq.s32.totalorder %s31, 0
      %p334 = por %p332, %p333
      %s335 = ssub.s32 %s25, %s32
      %p336 = scmp.eq.s32.totalorder %s335, 0
      %s338 = sadd.s32 %s337, 1
      %s339 = scalar_select %p336, %s337, %s338
      %p342 = pneg %p336
      %p343 = scmp.eq.s32.totalorder %s25, 3
      %p344 = por %p342, %p343
      %p345 = scmp.ne.s32.totalorder %s337, %s340
      %p346 = scmp.eq.s32.totalorder %s25, 0
      %p347 = por %p345, %p346
      %p348 = scmp.ne.s32.totalorder %s337, %s340
      %p349 = scmp.eq.s32.totalorder %s30, 3
      %p350 = por %p348, %p349
      %p351 = scmp.ne.s32.totalorder %s340, %s341
      %p352 = scmp.eq.s32.totalorder %s30, 0
      %p353 = por %p351, %p352
      %p354 = scmp.ne.s32.totalorder %s340, %s341
      %p355 = scmp.eq.s32.totalorder %s31, 3
      %p356 = por %p354, %p355
      %p358 = scmp.ne.s32.totalorder %s341, %s357
      %p359 = scmp.eq.s32.totalorder %s31, 0
      %p360 = por %p358, %p359
      %s362 = sadd.s32 %s361, 1
      %p365 = scmp.eq.s32.totalorder %s25, 3
      %p366 = scmp.ne.s32.totalorder %s361, %s363
      %p367 = scmp.eq.s32.totalorder %s25, 0
      %p368 = por %p366, %p367
      %p369 = scmp.ne.s32.totalorder %s361, %s363
      %p370 = scmp.eq.s32.totalorder %s30, 3
      %p371 = por %p369, %p370
      %p372 = scmp.ne.s32.totalorder %s363, %s364
      %p373 = scmp.eq.s32.totalorder %s30, 0
      %p374 = por %p372, %p373
      %p375 = scmp.ne.s32.totalorder %s363, %s364
      %p376 = scmp.eq.s32.totalorder %s31, 3
      %p377 = por %p375, %p376
      %p379 = scmp.ne.s32.totalorder %s364, %s378
      %p380 = scmp.eq.s32.totalorder %s31, 0
      %p381 = por %p379, %p380
      %s383 = sadd.s32 %s382, 1
      %p386 = scmp.eq.s32.totalorder %s25, 3
      %p387 = scmp.ne.s32.totalorder %s382, %s384
      %p388 = scmp.eq.s32.totalorder %s25, 0
      %p389 = por %p387, %p388
      %p390 = scmp.ne.s32.totalorder %s382, %s384
      %p391 = scmp.eq.s32.totalorder %s30, 3
      %p392 = por %p390, %p391
      %p393 = scmp.ne.s32.totalorder %s384, %s385
      %p394 = scmp.eq.s32.totalorder %s30, 0
      %p395 = por %p393, %p394
      %p396 = scmp.ne.s32.totalorder %s384, %s385
      %p397 = scmp.eq.s32.totalorder %s31, 3
      %p398 = por %p396, %p397
      %p400 = scmp.ne.s32.totalorder %s385, %s399
      %p401 = scmp.eq.s32.totalorder %s31, 0
      %p402 = por %p400, %p401
      %s404 = sadd.s32 %s403, 1
      %p407 = scmp.eq.s32.totalorder %s25, 3
      %p408 = scmp.ne.s32.totalorder %s403, %s405
      %p409 = scmp.eq.s32.totalorder %s25, 0
      %p410 = por %p408, %p409
      %p411 = scmp.ne.s32.totalorder %s403, %s405
      %p412 = scmp.eq.s32.totalorder %s30, 3
      %p413 = por %p411, %p412
      %p414 = scmp.ne.s32.totalorder %s405, %s406
      %p415 = scmp.eq.s32.totalorder %s30, 0
      %p416 = por %p414, %p415
      %p417 = scmp.ne.s32.totalorder %s405, %s406
      %p418 = scmp.eq.s32.totalorder %s31, 3
      %p419 = por %p417, %p418
      %p421 = scmp.ne.s32.totalorder %s406, %s420
      %p422 = scmp.eq.s32.totalorder %s31, 0
      %p423 = por %p421, %p422
      %p424 = scmp.le.s32.totalorder 1, %s25
      %p425 = scmp.lt.s32.totalorder %s25, 5
      %p426 = pnand %p424, %p425
      %p427 = pneg %p426
      // Predicated region
      $region9: #{tpu_custom_call.1} parent=5 // pred_check
        _
      $region10: #{tpu_custom_call.1} parent=5 // pred_check_branch
        %429 = sbr.rel (%p426) target = $region12
      $region11: #{tpu_custom_call.1} parent=5 // pred_region
        %s430 = ssub.s32 %s25, 1
        // Predicated region
        $region13: #{tpu_custom_call.1} parent=11 // pred_check
          %p431 = pneg %p46
        $region14: #{tpu_custom_call.1} parent=11 // pred_check_branch
          %433 = sbr.rel (%p431) target = $region16
        $region15: #{tpu_custom_call.1} parent=11 // pred_region
          %s435 = ssub.s32 2048, 2048
          %436 = vsyncadd [#allocation4], %s435
          %s437 = sshll.u32 [#allocation3], 4
          %s438 = int_to_ptr.vmem [resolvable:$true] %s437
          %443 = dma.hbm_to_vmem [thread:$0]  %s0, 2048, %s438, [#allocation4], 128, 128, 8
        $region16: #{tpu_custom_call.1} parent=11 // pred_fallthru
          _
        // Predicated region
        $region17: #{tpu_custom_call.1} parent=11 // pred_check
          %p444 = pneg %p67
        $region18: #{tpu_custom_call.1} parent=11 // pred_check_branch
          %446 = sbr.rel (%p444) target = $region20
        $region19: #{tpu_custom_call.1} parent=11 // pred_region
          %s448 = ssub.s32 2048, 2048
          %449 = vsyncadd [#allocation7], %s448
          %s450 = sshll.u32 [#allocation6], 4
          %s451 = int_to_ptr.vmem [resolvable:$true] %s450
          %456 = dma.hbm_to_vmem [thread:$0]  %s1, 2048, %s451, [#allocation7], 128, 128, 8
        $region20: #{tpu_custom_call.1} parent=11 // pred_fallthru
          _
        // Predicated region
        $region21: #{tpu_custom_call.1} parent=11 // pred_check
          %p457 = pneg %p374
        $region22: #{tpu_custom_call.1} parent=11 // pred_check_branch
          %459 = sbr.rel (%p457) target = $region24
        $region23: #{tpu_custom_call.1} parent=11 // pred_region
          %s461 = ssub.s32 1024, 1024
          %462 = vsyncadd [#allocation7], %s461
          %s463 = sshll.u32 [#allocation19], 4
          %s464 = int_to_ptr.vmem [resolvable:$true] %s463
          %469 = dma.hbm_to_vmem [thread:$0]  %s13, 1024, %s464, [#allocation7], 64, 64, 4
        $region24: #{tpu_custom_call.1} parent=11 // pred_fallthru
          _
        // Predicated region
        $region25: #{tpu_custom_call.1} parent=11 // pred_check
          %p470 = pneg %p395
        $region26: #{tpu_custom_call.1} parent=11 // pred_check_branch
          %472 = sbr.rel (%p470) target = $region28
        $region27: #{tpu_custom_call.1} parent=11 // pred_region
          %s474 = ssub.s32 16, 16
          %475 = vsyncadd [#allocation21], %s474
          %s477 = sshll.u32 [#allocation20], 4
          %s478 = int_to_ptr.vmem [resolvable:$true] %s477
          %480 = dma.hbm_to_vmem [thread:$0]  %s14, 16, %s478, [#allocation21]
        $region28: #{tpu_custom_call.1} parent=11 // pred_fallthru
          _
      $region12: #{tpu_custom_call.1} parent=5 // pred_fallthru
        _
      %p481 = scmp.lt.s32.totalorder %s25, 4
      // Predicated region
      $region29: #{tpu_custom_call.1} parent=5 // pred_check
        %p482 = pneg %p481
      $region30: #{tpu_custom_call.1} parent=5 // pred_check_branch
        %484 = sbr.rel (%p482) target = $region32
      $region31: #{tpu_custom_call.1} parent=5 // pred_region
        // Predicated region
        $region33: #{tpu_custom_call.1} parent=31 // pred_check
          %p485 = pneg %p87
        $region34: #{tpu_custom_call.1} parent=31 // pred_check_branch
          %487 = sbr.rel (%p485) target = $region36
        $region35: #{tpu_custom_call.1} parent=31 // pred_region
          %s488 = sand.u32 %s25, 1
          %s489 = scalar_lea.sflag [#allocation4], %s488
          %s490 = sand.u32 %s77, 1
          %s491 = scalar_lea.vmem [#allocation8], %s490
          %s493 = ssub.s32 16, 16
          %494 = vsyncadd %s489, %s493
          %s495 = smul.addr %s25, 16
          %s496 = scalar_lea.hbm %s2, %s495
          %s498 = sshll.u32 %s491, 4
          %s499 = int_to_ptr.vmem [resolvable:$true] %s498
          %501 = dma.hbm_to_vmem [thread:$0]  %s496, 16, %s499, %s489
        $region36: #{tpu_custom_call.1} parent=31 // pred_fallthru
          _
        // Predicated region
        $region37: #{tpu_custom_call.1} parent=31 // pred_check
          %p502 = pneg %p113
        $region38: #{tpu_custom_call.1} parent=31 // pred_check_branch
          %504 = sbr.rel (%p502) target = $region40
        $region39: #{tpu_custom_call.1} parent=31 // pred_region
          %s505 = sand.u32 %s25, 1
          %s506 = scalar_lea.sflag [#allocation4], %s505
          %s507 = sand.u32 %s103, 1
          %s508 = scalar_lea.vmem [#allocation9], %s507
          %s510 = ssub.s32 16, 16
          %511 = vsyncadd %s506, %s510
          %s512 = smul.addr %s25, 16
          %s513 = scalar_lea.hbm %s3, %s512
          %s515 = sshll.u32 %s508, 4
          %s516 = int_to_ptr.vmem [resolvable:$true] %s515
          %518 = dma.hbm_to_vmem [thread:$0]  %s513, 16, %s516, %s506
        $region40: #{tpu_custom_call.1} parent=31 // pred_fallthru
          _
        // Predicated region
        $region41: #{tpu_custom_call.1} parent=31 // pred_check
          %p519 = pneg %p139
        $region42: #{tpu_custom_call.1} parent=31 // pred_check_branch
          %521 = sbr.rel (%p519) target = $region44
        $region43: #{tpu_custom_call.1} parent=31 // pred_region
          %s522 = sand.u32 %s25, 1
          %s523 = scalar_lea.sflag [#allocation4], %s522
          %s524 = sand.u32 %s129, 1
          %s525 = smul.addr %s524, 768
          %s526 = scalar_lea.vmem [#allocation10], %s525
          %s528 = ssub.s32 12288, 12288
          %529 = vsyncadd %s523, %s528
          %s530 = smul.addr %s25, 192
          %s531 = smul.addr %s530, 64
          %s532 = scalar_lea.hbm %s4, %s531
          %s533 = sshll.u32 %s526, 4
          %s534 = int_to_ptr.vmem [resolvable:$true] %s533
          %539 = dma.hbm_to_vmem [thread:$0]  %s532, 12288, %s534, %s523, 768, 768, 48
        $region44: #{tpu_custom_call.1} parent=31 // pred_fallthru
          _
        // Predicated region
        $region45: #{tpu_custom_call.1} parent=31 // pred_check
          %p540 = pneg %p165
        $region46: #{tpu_custom_call.1} parent=31 // pred_check_branch
          %542 = sbr.rel (%p540) target = $region48
        $region47: #{tpu_custom_call.1} parent=31 // pred_region
          %s543 = sand.u32 %s25, 1
          %s544 = scalar_lea.sflag [#allocation4], %s543
          %s545 = sand.u32 %s155, 1
          %s546 = smul.addr %s545, 256
          %s547 = scalar_lea.vmem [#allocation11], %s546
          %s549 = ssub.s32 4096, 4096
          %550 = vsyncadd %s544, %s549
          %s551 = smul.addr %s25, 64
          %s552 = smul.addr %s551, 64
          %s553 = scalar_lea.hbm %s5, %s552
          %s554 = sshll.u32 %s547, 4
          %s555 = int_to_ptr.vmem [resolvable:$true] %s554
          %560 = dma.hbm_to_vmem [thread:$0]  %s553, 4096, %s555, %s544, 64, 64, 4
        $region48: #{tpu_custom_call.1} parent=31 // pred_fallthru
          _
        // Predicated region
        $region49: #{tpu_custom_call.1} parent=31 // pred_check
          %p561 = pneg %p191
        $region50: #{tpu_custom_call.1} parent=31 // pred_check_branch
          %563 = sbr.rel (%p561) target = $region52
        $region51: #{tpu_custom_call.1} parent=31 // pred_region
          %s564 = sand.u32 %s25, 1
          %s565 = scalar_lea.sflag [#allocation4], %s564
          %s566 = sand.u32 %s181, 1
          %s567 = scalar_lea.vmem [#allocation12], %s566
          %s569 = ssub.s32 16, 16
          %570 = vsyncadd %s565, %s569
          %s571 = smul.addr %s25, 16
          %s572 = scalar_lea.hbm %s6, %s571
          %s574 = sshll.u32 %s567, 4
          %s575 = int_to_ptr.vmem [resolvable:$true] %s574
          %577 = dma.hbm_to_vmem [thread:$0]  %s572, 16, %s575, %s565
        $region52: #{tpu_custom_call.1} parent=31 // pred_fallthru
          _
        // Predicated region
        $region53: #{tpu_custom_call.1} parent=31 // pred_check
          %p578 = pneg %p217
        $region54: #{tpu_custom_call.1} parent=31 // pred_check_branch
          %580 = sbr.rel (%p578) target = $region56
        $region55: #{tpu_custom_call.1} parent=31 // pred_region
          %s581 = sand.u32 %s25, 1
          %s582 = scalar_lea.sflag [#allocation4], %s581
          %s583 = sand.u32 %s207, 1
          %s584 = scalar_lea.vmem [#allocation13], %s583
          %s586 = ssub.s32 16, 16
          %587 = vsyncadd %s582, %s586
          %s588 = smul.addr %s25, 16
          %s589 = scalar_lea.hbm %s7, %s588
          %s591 = sshll.u32 %s584, 4
          %s592 = int_to_ptr.vmem [resolvable:$true] %s591
          %594 = dma.hbm_to_vmem [thread:$0]  %s589, 16, %s592, %s582
        $region56: #{tpu_custom_call.1} parent=31 // pred_fallthru
          _
        // Predicated region
        $region57: #{tpu_custom_call.1} parent=31 // pred_check
          %p595 = pneg %p243
        $region58: #{tpu_custom_call.1} parent=31 // pred_check_branch
          %597 = sbr.rel (%p595) target = $region60
        $region59: #{tpu_custom_call.1} parent=31 // pred_region
          %s598 = sand.u32 %s25, 1
          %s599 = scalar_lea.sflag [#allocation4], %s598
          %s600 = sand.u32 %s233, 1
          %s601 = scalar_lea.vmem [#allocation14], %s600
          %s603 = ssub.s32 16, 16
          %604 = vsyncadd %s599, %s603
          %s605 = smul.addr %s25, 16
          %s606 = scalar_lea.hbm %s8, %s605
          %s608 = sshll.u32 %s601, 4
          %s609 = int_to_ptr.vmem [resolvable:$true] %s608
          %611 = dma.hbm_to_vmem [thread:$0]  %s606, 16, %s609, %s599
        $region60: #{tpu_custom_call.1} parent=31 // pred_fallthru
          _
        // Predicated region
        $region61: #{tpu_custom_call.1} parent=31 // pred_check
          %p612 = pneg %p269
        $region62: #{tpu_custom_call.1} parent=31 // pred_check_branch
          %614 = sbr.rel (%p612) target = $region64
        $region63: #{tpu_custom_call.1} parent=31 // pred_region
          %s615 = sand.u32 %s25, 1
          %s616 = scalar_lea.sflag [#allocation4], %s615
          %s617 = sand.u32 %s259, 1
          %s618 = smul.addr %s617, 256
          %s619 = scalar_lea.vmem [#allocation15], %s618
          %s621 = ssub.s32 4096, 4096
          %622 = vsyncadd %s616, %s621
          %s623 = smul.addr %s25, 64
          %s624 = smul.addr %s623, 64
          %s625 = scalar_lea.hbm %s9, %s624
          %s626 = sshll.u32 %s619, 4
          %s627 = int_to_ptr.vmem [resolvable:$true] %s626
          %632 = dma.hbm_to_vmem [thread:$0]  %s625, 4096, %s627, %s616, 256, 256, 16
        $region64: #{tpu_custom_call.1} parent=31 // pred_fallthru
          _
        // Predicated region
        $region65: #{tpu_custom_call.1} parent=31 // pred_check
          %p633 = pneg %p295
        $region66: #{tpu_custom_call.1} parent=31 // pred_check_branch
          %635 = sbr.rel (%p633) target = $region68
        $region67: #{tpu_custom_call.1} parent=31 // pred_region
          %s636 = sand.u32 %s25, 1
          %s637 = scalar_lea.sflag [#allocation4], %s636
          %s638 = sand.u32 %s285, 1
          %s639 = smul.addr %s638, 4
          %s640 = scalar_lea.vmem [#allocation16], %s639
          %s642 = ssub.s32 64, 64
          %643 = vsyncadd %s637, %s642
          %s644 = smul.addr %s25, 4
          %s645 = smul.addr %s644, 16
          %s646 = scalar_lea.hbm %s10, %s645
          %s648 = sshll.u32 %s640, 4
          %s649 = int_to_ptr.vmem [resolvable:$true] %s648
          %651 = dma.hbm_to_vmem [thread:$0]  %s646, 64, %s649, %s637
        $region68: #{tpu_custom_call.1} parent=31 // pred_fallthru
          _
        // Predicated region
        $region69: #{tpu_custom_call.1} parent=31 // pred_check
          %p652 = pneg %p321
        $region70: #{tpu_custom_call.1} parent=31 // pred_check_branch
          %654 = sbr.rel (%p652) target = $region72
        $region71: #{tpu_custom_call.1} parent=31 // pred_region
          %s655 = sand.u32 %s25, 1
          %s656 = scalar_lea.sflag [#allocation4], %s655
          %s657 = sand.u32 %s311, 1
          %s658 = smul.addr %s657, 256
          %s659 = scalar_lea.vmem [#allocation17], %s658
          %s661 = ssub.s32 4096, 4096
          %662 = vsyncadd %s656, %s661
          %s663 = smul.addr %s25, 64
          %s664 = smul.addr %s663, 64
          %s665 = scalar_lea.hbm %s11, %s664
          %s666 = sshll.u32 %s659, 4
          %s667 = int_to_ptr.vmem [resolvable:$true] %s666
          %672 = dma.hbm_to_vmem [thread:$0]  %s665, 4096, %s667, %s656, 64, 64, 4
        $region72: #{tpu_custom_call.1} parent=31 // pred_fallthru
          _
        // Predicated region
        $region73: #{tpu_custom_call.1} parent=31 // pred_check
          %p673 = pneg %p347
        $region74: #{tpu_custom_call.1} parent=31 // pred_check_branch
          %675 = sbr.rel (%p673) target = $region76
        $region75: #{tpu_custom_call.1} parent=31 // pred_region
          %s676 = sand.u32 %s25, 1
          %s677 = scalar_lea.sflag [#allocation4], %s676
          %s678 = sand.u32 %s337, 1
          %s679 = scalar_lea.vmem [#allocation18], %s678
          %s681 = ssub.s32 16, 16
          %682 = vsyncadd %s677, %s681
          %s683 = smul.addr %s25, 16
          %s684 = scalar_lea.hbm %s12, %s683
          %s686 = sshll.u32 %s679, 4
          %s687 = int_to_ptr.vmem [resolvable:$true] %s686
          %689 = dma.hbm_to_vmem [thread:$0]  %s684, 16, %s687, %s677
        $region76: #{tpu_custom_call.1} parent=31 // pred_fallthru
          _
      $region32: #{tpu_custom_call.1} parent=5 // pred_fallthru
        _
      %p690 = scmp.le.s32.totalorder 1, %s25
      %p691 = scmp.lt.s32.totalorder %s25, 5
      %p692 = pnand %p690, %p691
      %p693 = pneg %p692
      // Predicated region
      $region77: #{tpu_custom_call.1} parent=5 // pred_check
        _
      $region78: #{tpu_custom_call.1} parent=5 // pred_check_branch
        %695 = sbr.rel (%p692) target = $region80
      $region79: #{tpu_custom_call.1} parent=5 // pred_region
        %s696 = ssub.s32 %s25, 1
        // Predicated region
        $region81: #{tpu_custom_call.1} parent=79 // pred_check
          %p697 = pneg %p46
        $region82: #{tpu_custom_call.1} parent=79 // pred_check_branch
          %699 = sbr.rel (%p697) target = $region84
        $region83: #{tpu_custom_call.1} parent=79 // pred_region
          %700 = dma.done [#allocation4], 2048
        $region84: #{tpu_custom_call.1} parent=79 // pred_fallthru
          _
        // Predicated region
        $region85: #{tpu_custom_call.1} parent=79 // pred_check
          %p701 = pneg %p67
        $region86: #{tpu_custom_call.1} parent=79 // pred_check_branch
          %703 = sbr.rel (%p701) target = $region88
        $region87: #{tpu_custom_call.1} parent=79 // pred_region
          %704 = dma.done [#allocation7], 2048
        $region88: #{tpu_custom_call.1} parent=79 // pred_fallthru
          _
        %s705 = sand.u32 %s30, 1
        %s706 = scalar_lea.sflag [#allocation4], %s705
        %s707 = sand.u32 %s80, 1
        %s708 = scalar_lea.vmem [#allocation8], %s707
        // Predicated region
        $region89: #{tpu_custom_call.1} parent=79 // pred_check
          %p709 = pneg %p93
        $region90: #{tpu_custom_call.1} parent=79 // pred_check_branch
          %711 = sbr.rel (%p709) target = $region92
        $region91: #{tpu_custom_call.1} parent=79 // pred_region
          %712 = dma.done %s706, 16
        $region92: #{tpu_custom_call.1} parent=79 // pred_fallthru
          _
        %s713 = sand.u32 %s30, 1
        %s714 = scalar_lea.sflag [#allocation4], %s713
        %s715 = sand.u32 %s106, 1
        %s716 = scalar_lea.vmem [#allocation9], %s715
        // Predicated region
        $region93: #{tpu_custom_call.1} parent=79 // pred_check
          %p717 = pneg %p119
        $region94: #{tpu_custom_call.1} parent=79 // pred_check_branch
          %719 = sbr.rel (%p717) target = $region96
        $region95: #{tpu_custom_call.1} parent=79 // pred_region
          %720 = dma.done %s714, 16
        $region96: #{tpu_custom_call.1} parent=79 // pred_fallthru
          _
        %s721 = sand.u32 %s30, 1
        %s722 = scalar_lea.sflag [#allocation4], %s721
        %s723 = sand.u32 %s132, 1
        %s724 = smul.addr %s723, 768
        %s725 = scalar_lea.vmem [#allocation10], %s724
        // Predicated region
        $region97: #{tpu_custom_call.1} parent=79 // pred_check
          %p726 = pneg %p145
        $region98: #{tpu_custom_call.1} parent=79 // pred_check_branch
          %728 = sbr.rel (%p726) target = $region100
        $region99: #{tpu_custom_call.1} parent=79 // pred_region
          %729 = dma.done %s722, 12288
        $region100: #{tpu_custom_call.1} parent=79 // pred_fallthru
          _
        %s730 = sand.u32 %s30, 1
        %s731 = scalar_lea.sflag [#allocation4], %s730
        %s732 = sand.u32 %s158, 1
        %s733 = smul.addr %s732, 256
        %s734 = scalar_lea.vmem [#allocation11], %s733
        // Predicated region
        $region101: #{tpu_custom_call.1} parent=79 // pred_check
          %p735 = pneg %p171
        $region102: #{tpu_custom_call.1} parent=79 // pred_check_branch
          %737 = sbr.rel (%p735) target = $region104
        $region103: #{tpu_custom_call.1} parent=79 // pred_region
          %738 = dma.done %s731, 4096
        $region104: #{tpu_custom_call.1} parent=79 // pred_fallthru
          _
        %s739 = sand.u32 %s30, 1
        %s740 = scalar_lea.sflag [#allocation4], %s739
        %s741 = sand.u32 %s184, 1
        %s742 = scalar_lea.vmem [#allocation12], %s741
        // Predicated region
        $region105: #{tpu_custom_call.1} parent=79 // pred_check
          %p743 = pneg %p197
        $region106: #{tpu_custom_call.1} parent=79 // pred_check_branch
          %745 = sbr.rel (%p743) target = $region108
        $region107: #{tpu_custom_call.1} parent=79 // pred_region
          %746 = dma.done %s740, 16
        $region108: #{tpu_custom_call.1} parent=79 // pred_fallthru
          _
        %s747 = sand.u32 %s30, 1
        %s748 = scalar_lea.sflag [#allocation4], %s747
        %s749 = sand.u32 %s210, 1
        %s750 = scalar_lea.vmem [#allocation13], %s749
        // Predicated region
        $region109: #{tpu_custom_call.1} parent=79 // pred_check
          %p751 = pneg %p223
        $region110: #{tpu_custom_call.1} parent=79 // pred_check_branch
          %753 = sbr.rel (%p751) target = $region112
        $region111: #{tpu_custom_call.1} parent=79 // pred_region
          %754 = dma.done %s748, 16
        $region112: #{tpu_custom_call.1} parent=79 // pred_fallthru
          _
        %s755 = sand.u32 %s30, 1
        %s756 = scalar_lea.sflag [#allocation4], %s755
        %s757 = sand.u32 %s236, 1
        %s758 = scalar_lea.vmem [#allocation14], %s757
        // Predicated region
        $region113: #{tpu_custom_call.1} parent=79 // pred_check
          %p759 = pneg %p249
        $region114: #{tpu_custom_call.1} parent=79 // pred_check_branch
          %761 = sbr.rel (%p759) target = $region116
        $region115: #{tpu_custom_call.1} parent=79 // pred_region
          %762 = dma.done %s756, 16
        $region116: #{tpu_custom_call.1} parent=79 // pred_fallthru
          _
        %s763 = sand.u32 %s30, 1
        %s764 = scalar_lea.sflag [#allocation4], %s763
        %s765 = sand.u32 %s262, 1
        %s766 = smul.addr %s765, 256
        %s767 = scalar_lea.vmem [#allocation15], %s766
        // Predicated region
        $region117: #{tpu_custom_call.1} parent=79 // pred_check
          %p768 = pneg %p275
        $region118: #{tpu_custom_call.1} parent=79 // pred_check_branch
          %770 = sbr.rel (%p768) target = $region120
        $region119: #{tpu_custom_call.1} parent=79 // pred_region
          %771 = dma.done %s764, 4096
        $region120: #{tpu_custom_call.1} parent=79 // pred_fallthru
          _
        %s772 = sand.u32 %s30, 1
        %s773 = scalar_lea.sflag [#allocation4], %s772
        %s774 = sand.u32 %s288, 1
        %s775 = smul.addr %s774, 4
        %s776 = scalar_lea.vmem [#allocation16], %s775
        // Predicated region
        $region121: #{tpu_custom_call.1} parent=79 // pred_check
          %p777 = pneg %p301
        $region122: #{tpu_custom_call.1} parent=79 // pred_check_branch
          %779 = sbr.rel (%p777) target = $region124
        $region123: #{tpu_custom_call.1} parent=79 // pred_region
          %780 = dma.done %s773, 64
        $region124: #{tpu_custom_call.1} parent=79 // pred_fallthru
          _
        %s781 = sand.u32 %s30, 1
        %s782 = scalar_lea.sflag [#allocation4], %s781
        %s783 = sand.u32 %s314, 1
        %s784 = smul.addr %s783, 256
        %s785 = scalar_lea.vmem [#allocation17], %s784
        // Predicated region
        $region125: #{tpu_custom_call.1} parent=79 // pred_check
          %p786 = pneg %p327
        $region126: #{tpu_custom_call.1} parent=79 // pred_check_branch
          %788 = sbr.rel (%p786) target = $region128
        $region127: #{tpu_custom_call.1} parent=79 // pred_region
          %789 = dma.done %s782, 4096
        $region128: #{tpu_custom_call.1} parent=79 // pred_fallthru
          _
        %s790 = sand.u32 %s30, 1
        %s791 = scalar_lea.sflag [#allocation4], %s790
        %s792 = sand.u32 %s340, 1
        %s793 = scalar_lea.vmem [#allocation18], %s792
        // Predicated region
        $region129: #{tpu_custom_call.1} parent=79 // pred_check
          %p794 = pneg %p353
        $region130: #{tpu_custom_call.1} parent=79 // pred_check_branch
          %796 = sbr.rel (%p794) target = $region132
        $region131: #{tpu_custom_call.1} parent=79 // pred_region
          %797 = dma.done %s791, 16
        $region132: #{tpu_custom_call.1} parent=79 // pred_fallthru
          _
        // Predicated region
        $region133: #{tpu_custom_call.1} parent=79 // pred_check
          %p798 = pneg %p374
        $region134: #{tpu_custom_call.1} parent=79 // pred_check_branch
          %800 = sbr.rel (%p798) target = $region136
        $region135: #{tpu_custom_call.1} parent=79 // pred_region
          %801 = dma.done [#allocation7], 1024
        $region136: #{tpu_custom_call.1} parent=79 // pred_fallthru
          _
        // Predicated region
        $region137: #{tpu_custom_call.1} parent=79 // pred_check
          %p802 = pneg %p395
        $region138: #{tpu_custom_call.1} parent=79 // pred_check_branch
          %804 = sbr.rel (%p802) target = $region140
        $region139: #{tpu_custom_call.1} parent=79 // pred_region
          %805 = dma.done [#allocation21], 16
        $region140: #{tpu_custom_call.1} parent=79 // pred_fallthru
          _
        %p806 = pneg %p46
        %p807 = pneg %p43
        %p808 = pneg %p67
        %p809 = pneg %p64
        %s810 = sand.u32 %s30, 1
        %s811 = scalar_lea.sflag [#allocation4], %s810
        %s812 = sand.u32 %s80, 1
        %s813 = scalar_lea.vmem [#allocation8], %s812
        %p814 = pneg %p93
        %p815 = pneg %p90
        %s816 = sand.u32 %s30, 1
        %s817 = scalar_lea.sflag [#allocation4], %s816
        %s818 = sand.u32 %s106, 1
        %s819 = scalar_lea.vmem [#allocation9], %s818
        %p820 = pneg %p119
        %p821 = pneg %p116
        %s822 = sand.u32 %s30, 1
        %s823 = scalar_lea.sflag [#allocation4], %s822
        %s824 = sand.u32 %s132, 1
        %s825 = smul.addr %s824, 768
        %s826 = scalar_lea.vmem [#allocation10], %s825
        %p827 = pneg %p145
        %p828 = pneg %p142
        %s829 = sand.u32 %s30, 1
        %s830 = scalar_lea.sflag [#allocation4], %s829
        %s831 = sand.u32 %s158, 1
        %s832 = smul.addr %s831, 256
        %s833 = scalar_lea.vmem [#allocation11], %s832
        %p834 = pneg %p171
        %p835 = pneg %p168
        %s836 = sand.u32 %s30, 1
        %s837 = scalar_lea.sflag [#allocation4], %s836
        %s838 = sand.u32 %s184, 1
        %s839 = scalar_lea.vmem [#allocation12], %s838
        %p840 = pneg %p197
        %p841 = pneg %p194
        %s842 = sand.u32 %s30, 1
        %s843 = scalar_lea.sflag [#allocation4], %s842
        %s844 = sand.u32 %s210, 1
        %s845 = scalar_lea.vmem [#allocation13], %s844
        %p846 = pneg %p223
        %p847 = pneg %p220
        %s848 = sand.u32 %s30, 1
        %s849 = scalar_lea.sflag [#allocation4], %s848
        %s850 = sand.u32 %s236, 1
        %s851 = scalar_lea.vmem [#allocation14], %s850
        %p852 = pneg %p249
        %p853 = pneg %p246
        %s854 = sand.u32 %s30, 1
        %s855 = scalar_lea.sflag [#allocation4], %s854
        %s856 = sand.u32 %s262, 1
        %s857 = smul.addr %s856, 256
        %s858 = scalar_lea.vmem [#allocation15], %s857
        %p859 = pneg %p275
        %p860 = pneg %p272
        %s861 = sand.u32 %s30, 1
        %s862 = scalar_lea.sflag [#allocation4], %s861
        %s863 = sand.u32 %s288, 1
        %s864 = smul.addr %s863, 4
        %s865 = scalar_lea.vmem [#allocation16], %s864
        %p866 = pneg %p301
        %p867 = pneg %p298
        %s868 = sand.u32 %s30, 1
        %s869 = scalar_lea.sflag [#allocation4], %s868
        %s870 = sand.u32 %s314, 1
        %s871 = smul.addr %s870, 256
        %s872 = scalar_lea.vmem [#allocation17], %s871
        %p873 = pneg %p327
        %p874 = pneg %p324
        %s875 = sand.u32 %s30, 1
        %s876 = scalar_lea.sflag [#allocation4], %s875
        %s877 = sand.u32 %s340, 1
        %s878 = scalar_lea.vmem [#allocation18], %s877
        %p879 = pneg %p353
        %p880 = pneg %p350
        %p881 = pneg %p374
        %p882 = pneg %p371
        %p883 = pneg %p395
        %p884 = pneg %p392
        %p885 = pneg %p416
        %p886 = pneg %p413
        %p888 = scmp.eq.s32.totalorder %s30, 0
        // Predicated region
        $region141: #{tpu_custom_call.1} parent=79 // pred_check
          %p889 = pneg %p888
        $region142: #{tpu_custom_call.1} parent=79 // pred_check_branch
          %891 = sbr.rel (%p889) target = $region144
        $region143: #{tpu_custom_call.1} parent=79 // pred_region
          %v892 = vld [vmem:[#allocation3] sm:$0xff]
          %v893 = vld [vmem:[#allocation3 + $0x8] sm:$0xff]
          %v894 = vld [vmem:[#allocation3 + $0x10] sm:$0xff]
          %v895 = vld [vmem:[#allocation3 + $0x18] sm:$0xff]
          %v896 = vld [vmem:[#allocation3 + $0x20] sm:$0xff]
          %v897 = vld [vmem:[#allocation3 + $0x28] sm:$0xff]
          %v898 = vld [vmem:[#allocation3 + $0x30] sm:$0xff]
          %v899 = vld [vmem:[#allocation3 + $0x38] sm:$0xff]
          %v900 = vld [vmem:[#allocation3 + $0x40] sm:$0xff]
          %v901 = vld [vmem:[#allocation3 + $0x48] sm:$0xff]
          %v902 = vld [vmem:[#allocation3 + $0x50] sm:$0xff]
          %v903 = vld [vmem:[#allocation3 + $0x58] sm:$0xff]
          %v904 = vld [vmem:[#allocation3 + $0x60] sm:$0xff]
          %v905 = vld [vmem:[#allocation3 + $0x68] sm:$0xff]
          %v906 = vld [vmem:[#allocation3 + $0x70] sm:$0xff]
          %v907 = vld [vmem:[#allocation3 + $0x78] sm:$0xff]
          %908 = vst [vmem:[#allocation2] sm:$0xff] %v892
          %909 = vst [vmem:[#allocation2 + $0x8] sm:$0xff] %v893
          %910 = vst [vmem:[#allocation2 + $0x10] sm:$0xff] %v894
          %911 = vst [vmem:[#allocation2 + $0x18] sm:$0xff] %v895
          %912 = vst [vmem:[#allocation2 + $0x20] sm:$0xff] %v896
          %913 = vst [vmem:[#allocation2 + $0x28] sm:$0xff] %v897
          %914 = vst [vmem:[#allocation2 + $0x30] sm:$0xff] %v898
          %915 = vst [vmem:[#allocation2 + $0x38] sm:$0xff] %v899
          %916 = vst [vmem:[#allocation2 + $0x40] sm:$0xff] %v900
          %917 = vst [vmem:[#allocation2 + $0x48] sm:$0xff] %v901
          %918 = vst [vmem:[#allocation2 + $0x50] sm:$0xff] %v902
          %919 = vst [vmem:[#allocation2 + $0x58] sm:$0xff] %v903
          %920 = vst [vmem:[#allocation2 + $0x60] sm:$0xff] %v904
          %921 = vst [vmem:[#allocation2 + $0x68] sm:$0xff] %v905
          %922 = vst [vmem:[#allocation2 + $0x70] sm:$0xff] %v906
          %923 = vst [vmem:[#allocation2 + $0x78] sm:$0xff] %v907
        $region144: #{tpu_custom_call.1} parent=79 // pred_fallthru
          _
        %v924 = vld [vmem:[#allocation2] sm:$0xff]
        %v925 = vld [vmem:[#allocation2 + $0x8] sm:$0xff]
        %v926 = vld [vmem:[#allocation2 + $0x10] sm:$0xff]
        %v927 = vld [vmem:[#allocation2 + $0x18] sm:$0xff]
        %v928 = vld [vmem:[#allocation2 + $0x20] sm:$0xff]
        %v929 = vld [vmem:[#allocation2 + $0x28] sm:$0xff]
        %v930 = vld [vmem:[#allocation2 + $0x30] sm:$0xff]
        %v931 = vld [vmem:[#allocation2 + $0x38] sm:$0xff]
        %v932 = vld [vmem:[#allocation2 + $0x40] sm:$0xff]
        %v933 = vld [vmem:[#allocation2 + $0x48] sm:$0xff]
        %v934 = vld [vmem:[#allocation2 + $0x50] sm:$0xff]
        %v935 = vld [vmem:[#allocation2 + $0x58] sm:$0xff]
        %v936 = vld [vmem:[#allocation2 + $0x60] sm:$0xff]
        %v937 = vld [vmem:[#allocation2 + $0x68] sm:$0xff]
        %v938 = vld [vmem:[#allocation2 + $0x70] sm:$0xff]
        %v939 = vld [vmem:[#allocation2 + $0x78] sm:$0xff]
        %v940 = vld [vmem:[#allocation6] sm:$0xff]
        %v941 = vld [vmem:[#allocation6 + $0x8] sm:$0xff]
        %v942 = vld [vmem:[#allocation6 + $0x10] sm:$0xff]
        %v943 = vld [vmem:[#allocation6 + $0x18] sm:$0xff]
        %v944 = vld [vmem:[#allocation6 + $0x20] sm:$0xff]
        %v945 = vld [vmem:[#allocation6 + $0x28] sm:$0xff]
        %v946 = vld [vmem:[#allocation6 + $0x30] sm:$0xff]
        %v947 = vld [vmem:[#allocation6 + $0x38] sm:$0xff]
        %v948 = vld [vmem:[#allocation6 + $0x40] sm:$0xff]
        %v949 = vld [vmem:[#allocation6 + $0x48] sm:$0xff]
        %v950 = vld [vmem:[#allocation6 + $0x50] sm:$0xff]
        %v951 = vld [vmem:[#allocation6 + $0x58] sm:$0xff]
        %v952 = vld [vmem:[#allocation6 + $0x60] sm:$0xff]
        %v953 = vld [vmem:[#allocation6 + $0x68] sm:$0xff]
        %v954 = vld [vmem:[#allocation6 + $0x70] sm:$0xff]
        %v955 = vld [vmem:[#allocation6 + $0x78] sm:$0xff]
        %v956 = vld [vmem:[%s708] sm:$0x1]
        %v957 = vld [vmem:[%s716] sm:$0x1]
        %958 = vadd.xlane.f32.xlu0 %v924
        %v959 = vpop.xlane.xlu0 %958
        %960 = vadd.xlane.f32.xlu0 %v925
        %v961 = vpop.xlane.xlu0 %960
        %962 = vadd.xlane.f32.xlu0 %v926
        %v963 = vpop.xlane.xlu0 %962
        %964 = vadd.xlane.f32.xlu0 %v927
        %v965 = vpop.xlane.xlu0 %964
        %966 = vadd.xlane.f32.xlu0 %v928
        %v967 = vpop.xlane.xlu0 %966
        %968 = vadd.xlane.f32.xlu0 %v929
        %v969 = vpop.xlane.xlu0 %968
        %970 = vadd.xlane.f32.xlu0 %v930
        %v971 = vpop.xlane.xlu0 %970
        %972 = vadd.xlane.f32.xlu0 %v931
        %v973 = vpop.xlane.xlu0 %972
        %974 = vadd.xlane.f32.xlu0 %v932
        %v975 = vpop.xlane.xlu0 %974
        %976 = vadd.xlane.f32.xlu0 %v933
        %v977 = vpop.xlane.xlu0 %976
        %978 = vadd.xlane.f32.xlu0 %v934
        %v979 = vpop.xlane.xlu0 %978
        %980 = vadd.xlane.f32.xlu0 %v935
        %v981 = vpop.xlane.xlu0 %980
        %982 = vadd.xlane.f32.xlu0 %v936
        %v983 = vpop.xlane.xlu0 %982
        %984 = vadd.xlane.f32.xlu0 %v937
        %v985 = vpop.xlane.xlu0 %984
        %986 = vadd.xlane.f32.xlu0 %v938
        %v987 = vpop.xlane.xlu0 %986
        %988 = vadd.xlane.f32.xlu0 %v939
        %v989 = vpop.xlane.xlu0 %988
        %v990 = vrcp.pop 128.0
        %v991 = vmul.f32 %v959, %v990
        %v992 = vmul.f32 %v961, %v990
        %v993 = vmul.f32 %v963, %v990
        %v994 = vmul.f32 %v965, %v990
        %v995 = vmul.f32 %v967, %v990
        %v996 = vmul.f32 %v969, %v990
        %v997 = vmul.f32 %v971, %v990
        %v998 = vmul.f32 %v973, %v990
        %v999 = vmul.f32 %v975, %v990
        %v1000 = vmul.f32 %v977, %v990
        %v1001 = vmul.f32 %v979, %v990
        %v1002 = vmul.f32 %v981, %v990
        %v1003 = vmul.f32 %v983, %v990
        %v1004 = vmul.f32 %v985, %v990
        %v1005 = vmul.f32 %v987, %v990
        %v1006 = vmul.f32 %v989, %v990
        %v1007 = vsub.f32 %v924, %v991
        %v1008 = vsub.f32 %v925, %v992
        %v1009 = vsub.f32 %v926, %v993
        %v1010 = vsub.f32 %v927, %v994
        %v1011 = vsub.f32 %v928, %v995
        %v1012 = vsub.f32 %v929, %v996
        %v1013 = vsub.f32 %v930, %v997
        %v1014 = vsub.f32 %v931, %v998
        %v1015 = vsub.f32 %v932, %v999
        %v1016 = vsub.f32 %v933, %v1000
        %v1017 = vsub.f32 %v934, %v1001
        %v1018 = vsub.f32 %v935, %v1002
        %v1019 = vsub.f32 %v936, %v1003
        %v1020 = vsub.f32 %v937, %v1004
        %v1021 = vsub.f32 %v938, %v1005
        %v1022 = vsub.f32 %v939, %v1006
        %v1023 = vmul.f32 %v1007, %v1007
        %v1024 = vmul.f32 %v1008, %v1008
        %v1025 = vmul.f32 %v1009, %v1009
        %v1026 = vmul.f32 %v1010, %v1010
        %v1027 = vmul.f32 %v1011, %v1011
        %v1028 = vmul.f32 %v1012, %v1012
        %v1029 = vmul.f32 %v1013, %v1013
        %v1030 = vmul.f32 %v1014, %v1014
        %v1031 = vmul.f32 %v1015, %v1015
        %v1032 = vmul.f32 %v1016, %v1016
        %v1033 = vmul.f32 %v1017, %v1017
        %v1034 = vmul.f32 %v1018, %v1018
        %v1035 = vmul.f32 %v1019, %v1019
        %v1036 = vmul.f32 %v1020, %v1020
        %v1037 = vmul.f32 %v1021, %v1021
        %v1038 = vmul.f32 %v1022, %v1022
        %1039 = vadd.xlane.f32.xlu0 %v1023
        %v1040 = vpop.xlane.xlu0 %1039
        %1041 = vadd.xlane.f32.xlu0 %v1024
        %v1042 = vpop.xlane.xlu0 %1041
        %1043 = vadd.xlane.f32.xlu0 %v1025
        %v1044 = vpop.xlane.xlu0 %1043
        %1045 = vadd.xlane.f32.xlu0 %v1026
        %v1046 = vpop.xlane.xlu0 %1045
        %1047 = vadd.xlane.f32.xlu0 %v1027
        %v1048 = vpop.xlane.xlu0 %1047
        %1049 = vadd.xlane.f32.xlu0 %v1028
        %v1050 = vpop.xlane.xlu0 %1049
        %1051 = vadd.xlane.f32.xlu0 %v1029
        %v1052 = vpop.xlane.xlu0 %1051
        %1053 = vadd.xlane.f32.xlu0 %v1030
        %v1054 = vpop.xlane.xlu0 %1053
        %1055 = vadd.xlane.f32.xlu0 %v1031
        %v1056 = vpop.xlane.xlu0 %1055
        %1057 = vadd.xlane.f32.xlu0 %v1032
        %v1058 = vpop.xlane.xlu0 %1057
        %1059 = vadd.xlane.f32.xlu0 %v1033
        %v1060 = vpop.xlane.xlu0 %1059
        %1061 = vadd.xlane.f32.xlu0 %v1034
        %v1062 = vpop.xlane.xlu0 %1061
        %1063 = vadd.xlane.f32.xlu0 %v1035
        %v1064 = vpop.xlane.xlu0 %1063
        %1065 = vadd.xlane.f32.xlu0 %v1036
        %v1066 = vpop.xlane.xlu0 %1065
        %1067 = vadd.xlane.f32.xlu0 %v1037
        %v1068 = vpop.xlane.xlu0 %1067
        %1069 = vadd.xlane.f32.xlu0 %v1038
        %v1070 = vpop.xlane.xlu0 %1069
        %v1071 = vmul.f32 %v1040, %v990
        %v1072 = vmul.f32 %v1042, %v990
        %v1073 = vmul.f32 %v1044, %v990
        %v1074 = vmul.f32 %v1046, %v990
        %v1075 = vmul.f32 %v1048, %v990
        %v1076 = vmul.f32 %v1050, %v990
        %v1077 = vmul.f32 %v1052, %v990
        %v1078 = vmul.f32 %v1054, %v990
        %v1079 = vmul.f32 %v1056, %v990
        %v1080 = vmul.f32 %v1058, %v990
        %v1081 = vmul.f32 %v1060, %v990
        %v1082 = vmul.f32 %v1062, %v990
        %v1083 = vmul.f32 %v1064, %v990
        %v1084 = vmul.f32 %v1066, %v990
        %v1085 = vmul.f32 %v1068, %v990
        %v1086 = vmul.f32 %v1070, %v990
        %v1087 = vadd.f32 %v1071, 1e-05
        %v1088 = vadd.f32 %v1072, 1e-05
        %v1089 = vadd.f32 %v1073, 1e-05
        %v1090 = vadd.f32 %v1074, 1e-05
        %v1091 = vadd.f32 %v1075, 1e-05
        %v1092 = vadd.f32 %v1076, 1e-05
        %v1093 = vadd.f32 %v1077, 1e-05
        %v1094 = vadd.f32 %v1078, 1e-05
        %v1095 = vadd.f32 %v1079, 1e-05
        %v1096 = vadd.f32 %v1080, 1e-05
        %v1097 = vadd.f32 %v1081, 1e-05
        %v1098 = vadd.f32 %v1082, 1e-05
        %v1099 = vadd.f32 %v1083, 1e-05
        %v1100 = vadd.f32 %v1084, 1e-05
        %v1101 = vadd.f32 %v1085, 1e-05
        %v1102 = vadd.f32 %v1086, 1e-05
        %v1103 = vrsqrt.pop %v1087
        %v1104 = vrsqrt.pop %v1088
        %v1105 = vrsqrt.pop %v1089
        %v1106 = vrsqrt.pop %v1090
        %v1107 = vrsqrt.pop %v1091
        %v1108 = vrsqrt.pop %v1092
        %v1109 = vrsqrt.pop %v1093
        %v1110 = vrsqrt.pop %v1094
        %v1111 = vrsqrt.pop %v1095
        %v1112 = vrsqrt.pop %v1096
        %v1113 = vrsqrt.pop %v1097
        %v1114 = vrsqrt.pop %v1098
        %v1115 = vrsqrt.pop %v1099
        %v1116 = vrsqrt.pop %v1100
        %v1117 = vrsqrt.pop %v1101
        %v1118 = vrsqrt.pop %v1102
        %v1119 = vmul.f32 %v1007, %v1103
        %v1120 = vmul.f32 %v1008, %v1104
        %v1121 = vmul.f32 %v1009, %v1105
        %v1122 = vmul.f32 %v1010, %v1106
        %v1123 = vmul.f32 %v1011, %v1107
        %v1124 = vmul.f32 %v1012, %v1108
        %v1125 = vmul.f32 %v1013, %v1109
        %v1126 = vmul.f32 %v1014, %v1110
        %v1127 = vmul.f32 %v1015, %v1111
        %v1128 = vmul.f32 %v1016, %v1112
        %v1129 = vmul.f32 %v1017, %v1113
        %v1130 = vmul.f32 %v1018, %v1114
        %v1131 = vmul.f32 %v1019, %v1115
        %v1132 = vmul.f32 %v1020, %v1116
        %v1133 = vmul.f32 %v1021, %v1117
        %v1134 = vmul.f32 %v1022, %v1118
        %v1136 = vlaneseq
        %v1137 = vshrl.u32 %v1136, 7
        %v1138 = vsub.s32 0, %v1137
        %v1139 = vrot.slane %v956, %v1138
        %v1141 = vmul.f32 %v1119, %v1139
        %v1142 = vmul.f32 %v1120, %v1139
        %v1143 = vmul.f32 %v1121, %v1139
        %v1144 = vmul.f32 %v1122, %v1139
        %v1145 = vmul.f32 %v1123, %v1139
        %v1146 = vmul.f32 %v1124, %v1139
        %v1147 = vmul.f32 %v1125, %v1139
        %v1148 = vmul.f32 %v1126, %v1139
        %v1149 = vmul.f32 %v1127, %v1139
        %v1150 = vmul.f32 %v1128, %v1139
        %v1151 = vmul.f32 %v1129, %v1139
        %v1152 = vmul.f32 %v1130, %v1139
        %v1153 = vmul.f32 %v1131, %v1139
        %v1154 = vmul.f32 %v1132, %v1139
        %v1155 = vmul.f32 %v1133, %v1139
        %v1156 = vmul.f32 %v1134, %v1139
        %v1158 = vlaneseq
        %v1159 = vshrl.u32 %v1158, 7
        %v1160 = vsub.s32 0, %v1159
        %v1161 = vrot.slane %v957, %v1160
        %v1163 = vadd.f32 %v1141, %v1161
        %v1164 = vadd.f32 %v1142, %v1161
        %v1165 = vadd.f32 %v1143, %v1161
        %v1166 = vadd.f32 %v1144, %v1161
        %v1167 = vadd.f32 %v1145, %v1161
        %v1168 = vadd.f32 %v1146, %v1161
        %v1169 = vadd.f32 %v1147, %v1161
        %v1170 = vadd.f32 %v1148, %v1161
        %v1171 = vadd.f32 %v1149, %v1161
        %v1172 = vadd.f32 %v1150, %v1161
        %v1173 = vadd.f32 %v1151, %v1161
        %v1174 = vadd.f32 %v1152, %v1161
        %v1175 = vadd.f32 %v1153, %v1161
        %v1176 = vadd.f32 %v1154, %v1161
        %v1177 = vadd.f32 %v1155, %v1161
        %v1178 = vadd.f32 %v1156, %v1161
        %v1179 = vpack.c.bf16 %v1164, %v1163
        %v1180 = vpack.c.bf16 %v1166, %v1165
        %v1181 = vpack.c.bf16 %v1168, %v1167
        %v1182 = vpack.c.bf16 %v1170, %v1169
        %v1183 = vpack.c.bf16 %v1172, %v1171
        %v1184 = vpack.c.bf16 %v1174, %v1173
        %v1185 = vpack.c.bf16 %v1176, %v1175
        %v1186 = vpack.c.bf16 %v1178, %v1177
        %v1187 = vld [vmem:[%s725] sm:$0xff]
        %v1188 = vld [vmem:[%s725 + $0x8] sm:$0xff]
        %v1189 = vld [vmem:[%s725 + $0x10] sm:$0xff]
        %v1190 = vld [vmem:[%s725 + $0x18] sm:$0xff]
        %v1191 = vld [vmem:[%s725 + $0x20] sm:$0xff]
        %v1192 = vld [vmem:[%s725 + $0x28] sm:$0xff]
        %v1193 = vld [vmem:[%s725 + $0x30] sm:$0xff]
        %v1194 = vld [vmem:[%s725 + $0x38] sm:$0xff]
        %v1195 = vld [vmem:[%s725 + $0x40] sm:$0xff]
        %v1196 = vld [vmem:[%s725 + $0x48] sm:$0xff]
        %v1197 = vld [vmem:[%s725 + $0x50] sm:$0xff]
        %v1198 = vld [vmem:[%s725 + $0x58] sm:$0xff]
        %v1199 = vld [vmem:[%s725 + $0x60] sm:$0xff]
        %v1200 = vld [vmem:[%s725 + $0x68] sm:$0xff]
        %v1201 = vld [vmem:[%s725 + $0x70] sm:$0xff]
        %v1202 = vld [vmem:[%s725 + $0x78] sm:$0xff]
        %v1203 = vld [vmem:[%s725 + $0x80] sm:$0xff]
        %v1204 = vld [vmem:[%s725 + $0x88] sm:$0xff]
        %v1205 = vld [vmem:[%s725 + $0x90] sm:$0xff]
        %v1206 = vld [vmem:[%s725 + $0x98] sm:$0xff]
        %v1207 = vld [vmem:[%s725 + $0xa0] sm:$0xff]
        %v1208 = vld [vmem:[%s725 + $0xa8] sm:$0xff]
        %v1209 = vld [vmem:[%s725 + $0xb0] sm:$0xff]
        %v1210 = vld [vmem:[%s725 + $0xb8] sm:$0xff]
        %v1211 = vld [vmem:[%s725 + $0xc0] sm:$0xff]
        %v1212 = vld [vmem:[%s725 + $0xc8] sm:$0xff]
        %v1213 = vld [vmem:[%s725 + $0xd0] sm:$0xff]
        %v1214 = vld [vmem:[%s725 + $0xd8] sm:$0xff]
        %v1215 = vld [vmem:[%s725 + $0xe0] sm:$0xff]
        %v1216 = vld [vmem:[%s725 + $0xe8] sm:$0xff]
        %v1217 = vld [vmem:[%s725 + $0xf0] sm:$0xff]
        %v1218 = vld [vmem:[%s725 + $0xf8] sm:$0xff]
        %v1219 = vld [vmem:[%s725 + $0x100] sm:$0xff]
        %v1220 = vld [vmem:[%s725 + $0x108] sm:$0xff]
        %v1221 = vld [vmem:[%s725 + $0x110] sm:$0xff]
        %v1222 = vld [vmem:[%s725 + $0x118] sm:$0xff]
        %v1223 = vld [vmem:[%s725 + $0x120] sm:$0xff]
        %v1224 = vld [vmem:[%s725 + $0x128] sm:$0xff]
        %v1225 = vld [vmem:[%s725 + $0x130] sm:$0xff]
        %v1226 = vld [vmem:[%s725 + $0x138] sm:$0xff]
        %v1227 = vld [vmem:[%s725 + $0x140] sm:$0xff]
        %v1228 = vld [vmem:[%s725 + $0x148] sm:$0xff]
        %v1229 = vld [vmem:[%s725 + $0x150] sm:$0xff]
        %v1230 = vld [vmem:[%s725 + $0x158] sm:$0xff]
        %v1231 = vld [vmem:[%s725 + $0x160] sm:$0xff]
        %v1232 = vld [vmem:[%s725 + $0x168] sm:$0xff]
        %v1233 = vld [vmem:[%s725 + $0x170] sm:$0xff]
        %v1234 = vld [vmem:[%s725 + $0x178] sm:$0xff]
        %v1235 = vld [vmem:[%s725 + $0x180] sm:$0xff]
        %v1236 = vld [vmem:[%s725 + $0x188] sm:$0xff]
        %v1237 = vld [vmem:[%s725 + $0x190] sm:$0xff]
        %v1238 = vld [vmem:[%s725 + $0x198] sm:$0xff]
        %v1239 = vld [vmem:[%s725 + $0x1a0] sm:$0xff]
        %v1240 = vld [vmem:[%s725 + $0x1a8] sm:$0xff]
        %v1241 = vld [vmem:[%s725 + $0x1b0] sm:$0xff]
        %v1242 = vld [vmem:[%s725 + $0x1b8] sm:$0xff]
        %v1243 = vld [vmem:[%s725 + $0x1c0] sm:$0xff]
        %v1244 = vld [vmem:[%s725 + $0x1c8] sm:$0xff]
        %v1245 = vld [vmem:[%s725 + $0x1d0] sm:$0xff]
        %v1246 = vld [vmem:[%s725 + $0x1d8] sm:$0xff]
        %v1247 = vld [vmem:[%s725 + $0x1e0] sm:$0xff]
        %v1248 = vld [vmem:[%s725 + $0x1e8] sm:$0xff]
        %v1249 = vld [vmem:[%s725 + $0x1f0] sm:$0xff]
        %v1250 = vld [vmem:[%s725 + $0x1f8] sm:$0xff]
        %v1251 = vld [vmem:[%s725 + $0x200] sm:$0xff]
        %v1252 = vld [vmem:[%s725 + $0x208] sm:$0xff]
        %v1253 = vld [vmem:[%s725 + $0x210] sm:$0xff]
        %v1254 = vld [vmem:[%s725 + $0x218] sm:$0xff]
        %v1255 = vld [vmem:[%s725 + $0x220] sm:$0xff]
        %v1256 = vld [vmem:[%s725 + $0x228] sm:$0xff]
        %v1257 = vld [vmem:[%s725 + $0x230] sm:$0xff]
        %v1258 = vld [vmem:[%s725 + $0x238] sm:$0xff]
        %v1259 = vld [vmem:[%s725 + $0x240] sm:$0xff]
        %v1260 = vld [vmem:[%s725 + $0x248] sm:$0xff]
        %v1261 = vld [vmem:[%s725 + $0x250] sm:$0xff]
        %v1262 = vld [vmem:[%s725 + $0x258] sm:$0xff]
        %v1263 = vld [vmem:[%s725 + $0x260] sm:$0xff]
        %v1264 = vld [vmem:[%s725 + $0x268] sm:$0xff]
        %v1265 = vld [vmem:[%s725 + $0x270] sm:$0xff]
        %v1266 = vld [vmem:[%s725 + $0x278] sm:$0xff]
        %v1267 = vld [vmem:[%s725 + $0x280] sm:$0xff]
        %v1268 = vld [vmem:[%s725 + $0x288] sm:$0xff]
        %v1269 = vld [vmem:[%s725 + $0x290] sm:$0xff]
        %v1270 = vld [vmem:[%s725 + $0x298] sm:$0xff]
        %v1271 = vld [vmem:[%s725 + $0x2a0] sm:$0xff]
        %v1272 = vld [vmem:[%s725 + $0x2a8] sm:$0xff]
        %v1273 = vld [vmem:[%s725 + $0x2b0] sm:$0xff]
        %v1274 = vld [vmem:[%s725 + $0x2b8] sm:$0xff]
        %v1275 = vld [vmem:[%s725 + $0x2c0] sm:$0xff]
        %v1276 = vld [vmem:[%s725 + $0x2c8] sm:$0xff]
        %v1277 = vld [vmem:[%s725 + $0x2d0] sm:$0xff]
        %v1278 = vld [vmem:[%s725 + $0x2d8] sm:$0xff]
        %v1279 = vld [vmem:[%s725 + $0x2e0] sm:$0xff]
        %v1280 = vld [vmem:[%s725 + $0x2e8] sm:$0xff]
        %v1281 = vld [vmem:[%s725 + $0x2f0] sm:$0xff]
        %v1282 = vld [vmem:[%s725 + $0x2f8] sm:$0xff]
        %v1379 = vunpack.c.l.b16 %v1187
        %v1380 = vunpack.c.h.b16 %v1187
        %v1381 = vunpack.c.l.b16 %v1188
        %v1382 = vunpack.c.h.b16 %v1188
        %v1383 = vunpack.c.l.b16 %v1189
        %v1384 = vunpack.c.h.b16 %v1189
        %v1385 = vunpack.c.l.b16 %v1190
        %v1386 = vunpack.c.h.b16 %v1190
        %v1387 = vunpack.c.l.b16 %v1191
        %v1388 = vunpack.c.h.b16 %v1191
        %v1389 = vunpack.c.l.b16 %v1192
        %v1390 = vunpack.c.h.b16 %v1192
        %v1391 = vunpack.c.l.b16 %v1193
        %v1392 = vunpack.c.h.b16 %v1193
        %v1393 = vunpack.c.l.b16 %v1194
        %v1394 = vunpack.c.h.b16 %v1194
        %v1395 = vunpack.c.l.b16 %v1195
        %v1396 = vunpack.c.h.b16 %v1195
        %v1397 = vunpack.c.l.b16 %v1196
        %v1398 = vunpack.c.h.b16 %v1196
        %v1399 = vunpack.c.l.b16 %v1197
        %v1400 = vunpack.c.h.b16 %v1197
        %v1401 = vunpack.c.l.b16 %v1198
        %v1402 = vunpack.c.h.b16 %v1198
        %v1403 = vunpack.c.l.b16 %v1199
        %v1404 = vunpack.c.h.b16 %v1199
        %v1405 = vunpack.c.l.b16 %v1200
        %v1406 = vunpack.c.h.b16 %v1200
        %v1407 = vunpack.c.l.b16 %v1201
        %v1408 = vunpack.c.h.b16 %v1201
        %v1409 = vunpack.c.l.b16 %v1202
        %v1410 = vunpack.c.h.b16 %v1202
        %v1411 = vunpack.c.l.b16 %v1203
        %v1412 = vunpack.c.h.b16 %v1203
        %v1413 = vunpack.c.l.b16 %v1204
        %v1414 = vunpack.c.h.b16 %v1204
        %v1415 = vunpack.c.l.b16 %v1205
        %v1416 = vunpack.c.h.b16 %v1205
        %v1417 = vunpack.c.l.b16 %v1206
        %v1418 = vunpack.c.h.b16 %v1206
        %v1419 = vunpack.c.l.b16 %v1207
        %v1420 = vunpack.c.h.b16 %v1207
        %v1421 = vunpack.c.l.b16 %v1208
        %v1422 = vunpack.c.h.b16 %v1208
        %v1423 = vunpack.c.l.b16 %v1209
        %v1424 = vunpack.c.h.b16 %v1209
        %v1425 = vunpack.c.l.b16 %v1210
        %v1426 = vunpack.c.h.b16 %v1210
        %v1427 = vunpack.c.l.b16 %v1211
        %v1428 = vunpack.c.h.b16 %v1211
        %v1429 = vunpack.c.l.b16 %v1212
        %v1430 = vunpack.c.h.b16 %v1212
        %v1431 = vunpack.c.l.b16 %v1213
        %v1432 = vunpack.c.h.b16 %v1213
        %v1433 = vunpack.c.l.b16 %v1214
        %v1434 = vunpack.c.h.b16 %v1214
        %v1435 = vunpack.c.l.b16 %v1215
        %v1436 = vunpack.c.h.b16 %v1215
        %v1437 = vunpack.c.l.b16 %v1216
        %v1438 = vunpack.c.h.b16 %v1216
        %v1439 = vunpack.c.l.b16 %v1217
        %v1440 = vunpack.c.h.b16 %v1217
        %v1441 = vunpack.c.l.b16 %v1218
        %v1442 = vunpack.c.h.b16 %v1218
        %v1443 = vunpack.c.l.b16 %v1219
        %v1444 = vunpack.c.h.b16 %v1219
        %v1445 = vunpack.c.l.b16 %v1220
        %v1446 = vunpack.c.h.b16 %v1220
        %v1447 = vunpack.c.l.b16 %v1221
        %v1448 = vunpack.c.h.b16 %v1221
        %v1449 = vunpack.c.l.b16 %v1222
        %v1450 = vunpack.c.h.b16 %v1222
        %v1451 = vunpack.c.l.b16 %v1223
        %v1452 = vunpack.c.h.b16 %v1223
        %v1453 = vunpack.c.l.b16 %v1224
        %v1454 = vunpack.c.h.b16 %v1224
        %v1455 = vunpack.c.l.b16 %v1225
        %v1456 = vunpack.c.h.b16 %v1225
        %v1457 = vunpack.c.l.b16 %v1226
        %v1458 = vunpack.c.h.b16 %v1226
        %v1459 = vunpack.c.l.b16 %v1227
        %v1460 = vunpack.c.h.b16 %v1227
        %v1461 = vunpack.c.l.b16 %v1228
        %v1462 = vunpack.c.h.b16 %v1228
        %v1463 = vunpack.c.l.b16 %v1229
        %v1464 = vunpack.c.h.b16 %v1229
        %v1465 = vunpack.c.l.b16 %v1230
        %v1466 = vunpack.c.h.b16 %v1230
        %v1467 = vunpack.c.l.b16 %v1231
        %v1468 = vunpack.c.h.b16 %v1231
        %v1469 = vunpack.c.l.b16 %v1232
        %v1470 = vunpack.c.h.b16 %v1232
        %v1471 = vunpack.c.l.b16 %v1233
        %v1472 = vunpack.c.h.b16 %v1233
        %v1473 = vunpack.c.l.b16 %v1234
        %v1474 = vunpack.c.h.b16 %v1234
        %v1475 = vunpack.c.l.b16 %v1235
        %v1476 = vunpack.c.h.b16 %v1235
        %v1477 = vunpack.c.l.b16 %v1236
        %v1478 = vunpack.c.h.b16 %v1236
        %v1479 = vunpack.c.l.b16 %v1237
        %v1480 = vunpack.c.h.b16 %v1237
        %v1481 = vunpack.c.l.b16 %v1238
        %v1482 = vunpack.c.h.b16 %v1238
        %v1483 = vunpack.c.l.b16 %v1239
        %v1484 = vunpack.c.h.b16 %v1239
        %v1485 = vunpack.c.l.b16 %v1240
        %v1486 = vunpack.c.h.b16 %v1240
        %v1487 = vunpack.c.l.b16 %v1241
        %v1488 = vunpack.c.h.b16 %v1241
        %v1489 = vunpack.c.l.b16 %v1242
        %v1490 = vunpack.c.h.b16 %v1242
        %v1491 = vunpack.c.l.b16 %v1243
        %v1492 = vunpack.c.h.b16 %v1243
        %v1493 = vunpack.c.l.b16 %v1244
        %v1494 = vunpack.c.h.b16 %v1244
        %v1495 = vunpack.c.l.b16 %v1245
        %v1496 = vunpack.c.h.b16 %v1245
        %v1497 = vunpack.c.l.b16 %v1246
        %v1498 = vunpack.c.h.b16 %v1246
        %v1499 = vunpack.c.l.b16 %v1247
        %v1500 = vunpack.c.h.b16 %v1247
        %v1501 = vunpack.c.l.b16 %v1248
        %v1502 = vunpack.c.h.b16 %v1248
        %v1503 = vunpack.c.l.b16 %v1249
        %v1504 = vunpack.c.h.b16 %v1249
        %v1505 = vunpack.c.l.b16 %v1250
        %v1506 = vunpack.c.h.b16 %v1250
        %v1507 = vunpack.c.l.b16 %v1251
        %v1508 = vunpack.c.h.b16 %v1251
        %v1509 = vunpack.c.l.b16 %v1252
        %v1510 = vunpack.c.h.b16 %v1252
        %v1511 = vunpack.c.l.b16 %v1253
        %v1512 = vunpack.c.h.b16 %v1253
        %v1513 = vunpack.c.l.b16 %v1254
        %v1514 = vunpack.c.h.b16 %v1254
        %v1515 = vunpack.c.l.b16 %v1255
        %v1516 = vunpack.c.h.b16 %v1255
        %v1517 = vunpack.c.l.b16 %v1256
        %v1518 = vunpack.c.h.b16 %v1256
        %v1519 = vunpack.c.l.b16 %v1257
        %v1520 = vunpack.c.h.b16 %v1257
        %v1521 = vunpack.c.l.b16 %v1258
        %v1522 = vunpack.c.h.b16 %v1258
        %v1523 = vunpack.c.l.b16 %v1259
        %v1524 = vunpack.c.h.b16 %v1259
        %v1525 = vunpack.c.l.b16 %v1260
        %v1526 = vunpack.c.h.b16 %v1260
        %v1527 = vunpack.c.l.b16 %v1261
        %v1528 = vunpack.c.h.b16 %v1261
        %v1529 = vunpack.c.l.b16 %v1262
        %v1530 = vunpack.c.h.b16 %v1262
        %v1531 = vunpack.c.l.b16 %v1263
        %v1532 = vunpack.c.h.b16 %v1263
        %v1533 = vunpack.c.l.b16 %v1264
        %v1534 = vunpack.c.h.b16 %v1264
        %v1535 = vunpack.c.l.b16 %v1265
        %v1536 = vunpack.c.h.b16 %v1265
        %v1537 = vunpack.c.l.b16 %v1266
        %v1538 = vunpack.c.h.b16 %v1266
        %v1539 = vunpack.c.l.b16 %v1267
        %v1540 = vunpack.c.h.b16 %v1267
        %v1541 = vunpack.c.l.b16 %v1268
        %v1542 = vunpack.c.h.b16 %v1268
        %v1543 = vunpack.c.l.b16 %v1269
        %v1544 = vunpack.c.h.b16 %v1269
        %v1545 = vunpack.c.l.b16 %v1270
        %v1546 = vunpack.c.h.b16 %v1270
        %v1547 = vunpack.c.l.b16 %v1271
        %v1548 = vunpack.c.h.b16 %v1271
        %v1549 = vunpack.c.l.b16 %v1272
        %v1550 = vunpack.c.h.b16 %v1272
        %v1551 = vunpack.c.l.b16 %v1273
        %v1552 = vunpack.c.h.b16 %v1273
        %v1553 = vunpack.c.l.b16 %v1274
        %v1554 = vunpack.c.h.b16 %v1274
        %v1555 = vunpack.c.l.b16 %v1275
        %v1556 = vunpack.c.h.b16 %v1275
        %v1557 = vunpack.c.l.b16 %v1276
        %v1558 = vunpack.c.h.b16 %v1276
        %v1559 = vunpack.c.l.b16 %v1277
        %v1560 = vunpack.c.h.b16 %v1277
        %v1561 = vunpack.c.l.b16 %v1278
        %v1562 = vunpack.c.h.b16 %v1278
        %v1563 = vunpack.c.l.b16 %v1279
        %v1564 = vunpack.c.h.b16 %v1279
        %v1565 = vunpack.c.l.b16 %v1280
        %v1566 = vunpack.c.h.b16 %v1280
        %v1567 = vunpack.c.l.b16 %v1281
        %v1568 = vunpack.c.h.b16 %v1281
        %v1569 = vunpack.c.l.b16 %v1282
        %v1570 = vunpack.c.h.b16 %v1282
        %v1571 = vpack.c.b16 %v1391, %v1379
        %v1572 = vpack.c.b16 %v1392, %v1380
        %v1573 = vpack.c.b16 %v1393, %v1381
        %v1574 = vpack.c.b16 %v1394, %v1382
        %v1575 = vpack.c.b16 %v1395, %v1383
        %v1576 = vpack.c.b16 %v1396, %v1384
        %v1577 = vpack.c.b16 %v1397, %v1385
        %v1578 = vpack.c.b16 %v1398, %v1386
        %v1579 = vpack.c.b16 %v1399, %v1387
        %v1580 = vpack.c.b16 %v1400, %v1388
        %v1581 = vpack.c.b16 %v1401, %v1389
        %v1582 = vpack.c.b16 %v1402, %v1390
        %v1583 = vpack.c.b16 %v1415, %v1403
        %v1584 = vpack.c.b16 %v1416, %v1404
        %v1585 = vpack.c.b16 %v1417, %v1405
        %v1586 = vpack.c.b16 %v1418, %v1406
        %v1587 = vpack.c.b16 %v1419, %v1407
        %v1588 = vpack.c.b16 %v1420, %v1408
        %v1589 = vpack.c.b16 %v1421, %v1409
        %v1590 = vpack.c.b16 %v1422, %v1410
        %v1591 = vpack.c.b16 %v1423, %v1411
        %v1592 = vpack.c.b16 %v1424, %v1412
        %v1593 = vpack.c.b16 %v1425, %v1413
        %v1594 = vpack.c.b16 %v1426, %v1414
        %v1595 = vpack.c.b16 %v1439, %v1427
        %v1596 = vpack.c.b16 %v1440, %v1428
        %v1597 = vpack.c.b16 %v1441, %v1429
        %v1598 = vpack.c.b16 %v1442, %v1430
        %v1599 = vpack.c.b16 %v1443, %v1431
        %v1600 = vpack.c.b16 %v1444, %v1432
        %v1601 = vpack.c.b16 %v1445, %v1433
        %v1602 = vpack.c.b16 %v1446, %v1434
        %v1603 = vpack.c.b16 %v1447, %v1435
        %v1604 = vpack.c.b16 %v1448, %v1436
        %v1605 = vpack.c.b16 %v1449, %v1437
        %v1606 = vpack.c.b16 %v1450, %v1438
        %v1607 = vpack.c.b16 %v1463, %v1451
        %v1608 = vpack.c.b16 %v1464, %v1452
        %v1609 = vpack.c.b16 %v1465, %v1453
        %v1610 = vpack.c.b16 %v1466, %v1454
        %v1611 = vpack.c.b16 %v1467, %v1455
        %v1612 = vpack.c.b16 %v1468, %v1456
        %v1613 = vpack.c.b16 %v1469, %v1457
        %v1614 = vpack.c.b16 %v1470, %v1458
        %v1615 = vpack.c.b16 %v1471, %v1459
        %v1616 = vpack.c.b16 %v1472, %v1460
        %v1617 = vpack.c.b16 %v1473, %v1461
        %v1618 = vpack.c.b16 %v1474, %v1462
        %v1619 = vpack.c.b16 %v1487, %v1475
        %v1620 = vpack.c.b16 %v1488, %v1476
        %v1621 = vpack.c.b16 %v1489, %v1477
        %v1622 = vpack.c.b16 %v1490, %v1478
        %v1623 = vpack.c.b16 %v1491, %v1479
        %v1624 = vpack.c.b16 %v1492, %v1480
        %v1625 = vpack.c.b16 %v1493, %v1481
        %v1626 = vpack.c.b16 %v1494, %v1482
        %v1627 = vpack.c.b16 %v1495, %v1483
        %v1628 = vpack.c.b16 %v1496, %v1484
        %v1629 = vpack.c.b16 %v1497, %v1485
        %v1630 = vpack.c.b16 %v1498, %v1486
        %v1631 = vpack.c.b16 %v1511, %v1499
        %v1632 = vpack.c.b16 %v1512, %v1500
        %v1633 = vpack.c.b16 %v1513, %v1501
        %v1634 = vpack.c.b16 %v1514, %v1502
        %v1635 = vpack.c.b16 %v1515, %v1503
        %v1636 = vpack.c.b16 %v1516, %v1504
        %v1637 = vpack.c.b16 %v1517, %v1505
        %v1638 = vpack.c.b16 %v1518, %v1506
        %v1639 = vpack.c.b16 %v1519, %v1507
        %v1640 = vpack.c.b16 %v1520, %v1508
        %v1641 = vpack.c.b16 %v1521, %v1509
        %v1642 = vpack.c.b16 %v1522, %v1510
        %v1643 = vpack.c.b16 %v1535, %v1523
        %v1644 = vpack.c.b16 %v1536, %v1524
        %v1645 = vpack.c.b16 %v1537, %v1525
        %v1646 = vpack.c.b16 %v1538, %v1526
        %v1647 = vpack.c.b16 %v1539, %v1527
        %v1648 = vpack.c.b16 %v1540, %v1528
        %v1649 = vpack.c.b16 %v1541, %v1529
        %v1650 = vpack.c.b16 %v1542, %v1530
        %v1651 = vpack.c.b16 %v1543, %v1531
        %v1652 = vpack.c.b16 %v1544, %v1532
        %v1653 = vpack.c.b16 %v1545, %v1533
        %v1654 = vpack.c.b16 %v1546, %v1534
        %v1655 = vpack.c.b16 %v1559, %v1547
        %v1656 = vpack.c.b16 %v1560, %v1548
        %v1657 = vpack.c.b16 %v1561, %v1549
        %v1658 = vpack.c.b16 %v1562, %v1550
        %v1659 = vpack.c.b16 %v1563, %v1551
        %v1660 = vpack.c.b16 %v1564, %v1552
        %v1661 = vpack.c.b16 %v1565, %v1553
        %v1662 = vpack.c.b16 %v1566, %v1554
        %v1663 = vpack.c.b16 %v1567, %v1555
        %v1664 = vpack.c.b16 %v1568, %v1556
        %v1665 = vpack.c.b16 %v1569, %v1557
        %v1666 = vpack.c.b16 %v1570, %v1558
        %1763 = vmatprep.subr.bf16.mxu0 %v1656
        %1764 = vmatpush1.bf16.msra.mxu0 %v1655
        %1765 = vmatprep.subr.bf16.mxu0 %v1644
        %1766 = vmatpush1.bf16.msra.mxu0 %v1643
        %1767 = vmatprep.subr.bf16.mxu0 %v1632
        %1768 = vmatpush1.bf16.msra.mxu0 %v1631
        %1769 = vmatprep.subr.bf16.mxu0 %v1620
        %1770 = vmatpush1.bf16.msra.mxu0 %v1619
        %1771 = vmatprep.subr.bf16.mxu0 %v1608
        %1772 = vmatpush1.bf16.msra.mxu0 %v1607
        %1773 = vmatprep.subr.bf16.mxu0 %v1596
        %1774 = vmatpush1.bf16.msra.mxu0 %v1595
        %1775 = vmatprep.subr.bf16.mxu0 %v1584
        %1776 = vmatpush1.bf16.msra.mxu0 %v1583
        %1777 = vmatprep.subr.bf16.mxu0 %v1572
        %1778 = vmatpush1.bf16.msra.mxu0 %v1571
        %1779 = vmatprep.subr.bf16.mxu0 0
        %1780 = vmatpush2.bf16.msra.mxu0 0
        %1781 = vmatprep.subr.bf16.mxu0 0
        %1782 = vmatpush2.bf16.msra.mxu0 0
        %1783 = vmatprep.subr.bf16.mxu0 0
        %1784 = vmatpush2.bf16.msra.mxu0 0
        %1785 = vmatprep.subr.bf16.mxu0 0
        %1786 = vmatpush2.bf16.msra.mxu0 0
        %1787 = vmatprep.subr.bf16.mxu0 0
        %1788 = vmatpush2.bf16.msra.mxu0 0
        %1789 = vmatprep.subr.bf16.mxu0 0
        %1790 = vmatpush2.bf16.msra.mxu0 0
        %1791 = vmatprep.subr.bf16.mxu0 0
        %1792 = vmatpush2.bf16.msra.mxu0 0
        %1793 = vmatprep.subr.bf16.mxu0 0
        %1794 = vmatpush2.bf16.msra.mxu0 0
        %1795 = vmatprep.mubr.bf16.mxu0 0
        %1796 = vmatmul.mubr.bf16.gmra.mxu0 %v1179
        %v1797 = vpop.f32.mrf.mxu0
        %v1798 = vadd.f32 0.0, %v1797
        %v1799 = vpop.f32.mrf.mxu0
        %v1800 = vadd.f32 0.0, %v1799
        %v1801 = vpop.f32.mrf.mxu0
        %v1802 = vadd.f32 0.0, %v1801
        %v1803 = vpop.f32.mrf.mxu0
        %v1804 = vadd.f32 0.0, %v1803
        %1805 = vmatprep.mubr.bf16.mxu0 0
        %1806 = vmatmul.mubr.bf16.gmra.mxu0 %v1180
        %v1807 = vpop.f32.mrf.mxu0
        %v1808 = vadd.f32 0.0, %v1807
        %v1809 = vpop.f32.mrf.mxu0
        %v1810 = vadd.f32 0.0, %v1809
        %v1811 = vpop.f32.mrf.mxu0
        %v1812 = vadd.f32 0.0, %v1811
        %v1813 = vpop.f32.mrf.mxu0
        %v1814 = vadd.f32 0.0, %v1813
        %1815 = vmatprep.mubr.bf16.mxu0 0
        %1816 = vmatmul.mubr.bf16.gmra.mxu0 %v1181
        %v1817 = vpop.f32.mrf.mxu0
        %v1818 = vadd.f32 0.0, %v1817
        %v1819 = vpop.f32.mrf.mxu0
        %v1820 = vadd.f32 0.0, %v1819
        %v1821 = vpop.f32.mrf.mxu0
        %v1822 = vadd.f32 0.0, %v1821
        %v1823 = vpop.f32.mrf.mxu0
        %v1824 = vadd.f32 0.0, %v1823
        %1825 = vmatprep.mubr.bf16.mxu0 0
        %1826 = vmatmul.mubr.bf16.gmra.mxu0 %v1182
        %v1827 = vpop.f32.mrf.mxu0
        %v1828 = vadd.f32 0.0, %v1827
        %v1829 = vpop.f32.mrf.mxu0
        %v1830 = vadd.f32 0.0, %v1829
        %v1831 = vpop.f32.mrf.mxu0
        %v1832 = vadd.f32 0.0, %v1831
        %v1833 = vpop.f32.mrf.mxu0
        %v1834 = vadd.f32 0.0, %v1833
        %1835 = vmatprep.mubr.bf16.mxu0 0
        %1836 = vmatmul.mubr.bf16.gmra.mxu0 %v1183
        %v1837 = vpop.f32.mrf.mxu0
        %v1838 = vadd.f32 0.0, %v1837
        %v1839 = vpop.f32.mrf.mxu0
        %v1840 = vadd.f32 0.0, %v1839
        %v1841 = vpop.f32.mrf.mxu0
        %v1842 = vadd.f32 0.0, %v1841
        %v1843 = vpop.f32.mrf.mxu0
        %v1844 = vadd.f32 0.0, %v1843
        %1845 = vmatprep.mubr.bf16.mxu0 0
        %1846 = vmatmul.mubr.bf16.gmra.mxu0 %v1184
        %v1847 = vpop.f32.mrf.mxu0
        %v1848 = vadd.f32 0.0, %v1847
        %v1849 = vpop.f32.mrf.mxu0
        %v1850 = vadd.f32 0.0, %v1849
        %v1851 = vpop.f32.mrf.mxu0
        %v1852 = vadd.f32 0.0, %v1851
        %v1853 = vpop.f32.mrf.mxu0
        %v1854 = vadd.f32 0.0, %v1853
        %1855 = vmatprep.mubr.bf16.mxu0 0
        %1856 = vmatmul.mubr.bf16.gmra.mxu0 %v1185
        %v1857 = vpop.f32.mrf.mxu0
        %v1858 = vadd.f32 0.0, %v1857
        %v1859 = vpop.f32.mrf.mxu0
        %v1860 = vadd.f32 0.0, %v1859
        %v1861 = vpop.f32.mrf.mxu0
        %v1862 = vadd.f32 0.0, %v1861
        %v1863 = vpop.f32.mrf.mxu0
        %v1864 = vadd.f32 0.0, %v1863
        %1865 = vmatprep.mubr.bf16.mxu0 0
        %1866 = vmatmul.mubr.bf16.gmra.mxu0 %v1186
        %v1867 = vpop.f32.mrf.mxu0
        %v1868 = vadd.f32 0.0, %v1867
        %v1869 = vpop.f32.mrf.mxu0
        %v1870 = vadd.f32 0.0, %v1869
        %v1871 = vpop.f32.mrf.mxu0
        %v1872 = vadd.f32 0.0, %v1871
        %v1873 = vpop.f32.mrf.mxu0
        %v1874 = vadd.f32 0.0, %v1873
        %1875 = vdwg.mxu0
        %1876 = vmatprep.subr.bf16.mxu0 %v1658
        %1877 = vmatpush1.bf16.msra.mxu0 %v1657
        %1878 = vmatprep.subr.bf16.mxu0 %v1646
        %1879 = vmatpush1.bf16.msra.mxu0 %v1645
        %1880 = vmatprep.subr.bf16.mxu0 %v1634
        %1881 = vmatpush1.bf16.msra.mxu0 %v1633
        %1882 = vmatprep.subr.bf16.mxu0 %v1622
        %1883 = vmatpush1.bf16.msra.mxu0 %v1621
        %1884 = vmatprep.subr.bf16.mxu0 %v1610
        %1885 = vmatpush1.bf16.msra.mxu0 %v1609
        %1886 = vmatprep.subr.bf16.mxu0 %v1598
        %1887 = vmatpush1.bf16.msra.mxu0 %v1597
        %1888 = vmatprep.subr.bf16.mxu0 %v1586
        %1889 = vmatpush1.bf16.msra.mxu0 %v1585
        %1890 = vmatprep.subr.bf16.mxu0 %v1574
        %1891 = vmatpush1.bf16.msra.mxu0 %v1573
        %1892 = vmatprep.subr.bf16.mxu0 0
        %1893 = vmatpush2.bf16.msra.mxu0 0
        %1894 = vmatprep.subr.bf16.mxu0 0
        %1895 = vmatpush2.bf16.msra.mxu0 0
        %1896 = vmatprep.subr.bf16.mxu0 0
        %1897 = vmatpush2.bf16.msra.mxu0 0
        %1898 = vmatprep.subr.bf16.mxu0 0
        %1899 = vmatpush2.bf16.msra.mxu0 0
        %1900 = vmatprep.subr.bf16.mxu0 0
        %1901 = vmatpush2.bf16.msra.mxu0 0
        %1902 = vmatprep.subr.bf16.mxu0 0
        %1903 = vmatpush2.bf16.msra.mxu0 0
        %1904 = vmatprep.subr.bf16.mxu0 0
        %1905 = vmatpush2.bf16.msra.mxu0 0
        %1906 = vmatprep.subr.bf16.mxu0 0
        %1907 = vmatpush2.bf16.msra.mxu0 0
        %1908 = vmatprep.mubr.bf16.mxu0 0
        %1909 = vmatmul.mubr.bf16.gmra.mxu0 %v1179
        %v1910 = vpop.f32.mrf.mxu0
        %v1911 = vadd.f32 0.0, %v1910
        %v1912 = vpop.f32.mrf.mxu0
        %v1913 = vadd.f32 0.0, %v1912
        %v1914 = vpop.f32.mrf.mxu0
        %v1915 = vadd.f32 0.0, %v1914
        %v1916 = vpop.f32.mrf.mxu0
        %v1917 = vadd.f32 0.0, %v1916
        %1918 = vmatprep.mubr.bf16.mxu0 0
        %1919 = vmatmul.mubr.bf16.gmra.mxu0 %v1180
        %v1920 = vpop.f32.mrf.mxu0
        %v1921 = vadd.f32 0.0, %v1920
        %v1922 = vpop.f32.mrf.mxu0
        %v1923 = vadd.f32 0.0, %v1922
        %v1924 = vpop.f32.mrf.mxu0
        %v1925 = vadd.f32 0.0, %v1924
        %v1926 = vpop.f32.mrf.mxu0
        %v1927 = vadd.f32 0.0, %v1926
        %1928 = vmatprep.mubr.bf16.mxu0 0
        %1929 = vmatmul.mubr.bf16.gmra.mxu0 %v1181
        %v1930 = vpop.f32.mrf.mxu0
        %v1931 = vadd.f32 0.0, %v1930
        %v1932 = vpop.f32.mrf.mxu0
        %v1933 = vadd.f32 0.0, %v1932
        %v1934 = vpop.f32.mrf.mxu0
        %v1935 = vadd.f32 0.0, %v1934
        %v1936 = vpop.f32.mrf.mxu0
        %v1937 = vadd.f32 0.0, %v1936
        %1938 = vmatprep.mubr.bf16.mxu0 0
        %1939 = vmatmul.mubr.bf16.gmra.mxu0 %v1182
        %v1940 = vpop.f32.mrf.mxu0
        %v1941 = vadd.f32 0.0, %v1940
        %v1942 = vpop.f32.mrf.mxu0
        %v1943 = vadd.f32 0.0, %v1942
        %v1944 = vpop.f32.mrf.mxu0
        %v1945 = vadd.f32 0.0, %v1944
        %v1946 = vpop.f32.mrf.mxu0
        %v1947 = vadd.f32 0.0, %v1946
        %1948 = vmatprep.mubr.bf16.mxu0 0
        %1949 = vmatmul.mubr.bf16.gmra.mxu0 %v1183
        %v1950 = vpop.f32.mrf.mxu0
        %v1951 = vadd.f32 0.0, %v1950
        %v1952 = vpop.f32.mrf.mxu0
        %v1953 = vadd.f32 0.0, %v1952
        %v1954 = vpop.f32.mrf.mxu0
        %v1955 = vadd.f32 0.0, %v1954
        %v1956 = vpop.f32.mrf.mxu0
        %v1957 = vadd.f32 0.0, %v1956
        %1958 = vmatprep.mubr.bf16.mxu0 0
        %1959 = vmatmul.mubr.bf16.gmra.mxu0 %v1184
        %v1960 = vpop.f32.mrf.mxu0
        %v1961 = vadd.f32 0.0, %v1960
        %v1962 = vpop.f32.mrf.mxu0
        %v1963 = vadd.f32 0.0, %v1962
        %v1964 = vpop.f32.mrf.mxu0
        %v1965 = vadd.f32 0.0, %v1964
        %v1966 = vpop.f32.mrf.mxu0
        %v1967 = vadd.f32 0.0, %v1966
        %1968 = vmatprep.mubr.bf16.mxu0 0
        %1969 = vmatmul.mubr.bf16.gmra.mxu0 %v1185
        %v1970 = vpop.f32.mrf.mxu0
        %v1971 = vadd.f32 0.0, %v1970
        %v1972 = vpop.f32.mrf.mxu0
        %v1973 = vadd.f32 0.0, %v1972
        %v1974 = vpop.f32.mrf.mxu0
        %v1975 = vadd.f32 0.0, %v1974
        %v1976 = vpop.f32.mrf.mxu0
        %v1977 = vadd.f32 0.0, %v1976
        %1978 = vmatprep.mubr.bf16.mxu0 0
        %1979 = vmatmul.mubr.bf16.gmra.mxu0 %v1186
        %v1980 = vpop.f32.mrf.mxu0
        %v1981 = vadd.f32 0.0, %v1980
        %v1982 = vpop.f32.mrf.mxu0
        %v1983 = vadd.f32 0.0, %v1982
        %v1984 = vpop.f32.mrf.mxu0
        %v1985 = vadd.f32 0.0, %v1984
        %v1986 = vpop.f32.mrf.mxu0
        %v1987 = vadd.f32 0.0, %v1986
        %1988 = vdwg.mxu0
        %1989 = vmatprep.subr.bf16.mxu0 %v1660
        %1990 = vmatpush1.bf16.msra.mxu0 %v1659
        %1991 = vmatprep.subr.bf16.mxu0 %v1648
        %1992 = vmatpush1.bf16.msra.mxu0 %v1647
        %1993 = vmatprep.subr.bf16.mxu0 %v1636
        %1994 = vmatpush1.bf16.msra.mxu0 %v1635
        %1995 = vmatprep.subr.bf16.mxu0 %v1624
        %1996 = vmatpush1.bf16.msra.mxu0 %v1623
        %1997 = vmatprep.subr.bf16.mxu0 %v1612
        %1998 = vmatpush1.bf16.msra.mxu0 %v1611
        %1999 = vmatprep.subr.bf16.mxu0 %v1600
        %2000 = vmatpush1.bf16.msra.mxu0 %v1599
        %2001 = vmatprep.subr.bf16.mxu0 %v1588
        %2002 = vmatpush1.bf16.msra.mxu0 %v1587
        %2003 = vmatprep.subr.bf16.mxu0 %v1576
        %2004 = vmatpush1.bf16.msra.mxu0 %v1575
        %2005 = vmatprep.subr.bf16.mxu0 0
        %2006 = vmatpush2.bf16.msra.mxu0 0
        %2007 = vmatprep.subr.bf16.mxu0 0
        %2008 = vmatpush2.bf16.msra.mxu0 0
        %2009 = vmatprep.subr.bf16.mxu0 0
        %2010 = vmatpush2.bf16.msra.mxu0 0
        %2011 = vmatprep.subr.bf16.mxu0 0
        %2012 = vmatpush2.bf16.msra.mxu0 0
        %2013 = vmatprep.subr.bf16.mxu0 0
        %2014 = vmatpush2.bf16.msra.mxu0 0
        %2015 = vmatprep.subr.bf16.mxu0 0
        %2016 = vmatpush2.bf16.msra.mxu0 0
        %2017 = vmatprep.subr.bf16.mxu0 0
        %2018 = vmatpush2.bf16.msra.mxu0 0
        %2019 = vmatprep.subr.bf16.mxu0 0
        %2020 = vmatpush2.bf16.msra.mxu0 0
        %2021 = vmatprep.mubr.bf16.mxu0 0
        %2022 = vmatmul.mubr.bf16.gmra.mxu0 %v1179
        %v2023 = vpop.f32.mrf.mxu0
        %v2024 = vadd.f32 0.0, %v2023
        %v2025 = vpop.f32.mrf.mxu0
        %v2026 = vadd.f32 0.0, %v2025
        %v2027 = vpop.f32.mrf.mxu0
        %v2028 = vadd.f32 0.0, %v2027
        %v2029 = vpop.f32.mrf.mxu0
        %v2030 = vadd.f32 0.0, %v2029
        %2031 = vmatprep.mubr.bf16.mxu0 0
        %2032 = vmatmul.mubr.bf16.gmra.mxu0 %v1180
        %v2033 = vpop.f32.mrf.mxu0
        %v2034 = vadd.f32 0.0, %v2033
        %v2035 = vpop.f32.mrf.mxu0
        %v2036 = vadd.f32 0.0, %v2035
        %v2037 = vpop.f32.mrf.mxu0
        %v2038 = vadd.f32 0.0, %v2037
        %v2039 = vpop.f32.mrf.mxu0
        %v2040 = vadd.f32 0.0, %v2039
        %2041 = vmatprep.mubr.bf16.mxu0 0
        %2042 = vmatmul.mubr.bf16.gmra.mxu0 %v1181
        %v2043 = vpop.f32.mrf.mxu0
        %v2044 = vadd.f32 0.0, %v2043
        %v2045 = vpop.f32.mrf.mxu0
        %v2046 = vadd.f32 0.0, %v2045
        %v2047 = vpop.f32.mrf.mxu0
        %v2048 = vadd.f32 0.0, %v2047
        %v2049 = vpop.f32.mrf.mxu0
        %v2050 = vadd.f32 0.0, %v2049
        %2051 = vmatprep.mubr.bf16.mxu0 0
        %2052 = vmatmul.mubr.bf16.gmra.mxu0 %v1182
        %v2053 = vpop.f32.mrf.mxu0
        %v2054 = vadd.f32 0.0, %v2053
        %v2055 = vpop.f32.mrf.mxu0
        %v2056 = vadd.f32 0.0, %v2055
        %v2057 = vpop.f32.mrf.mxu0
        %v2058 = vadd.f32 0.0, %v2057
        %v2059 = vpop.f32.mrf.mxu0
        %v2060 = vadd.f32 0.0, %v2059
        %2061 = vmatprep.mubr.bf16.mxu0 0
        %2062 = vmatmul.mubr.bf16.gmra.mxu0 %v1183
        %v2063 = vpop.f32.mrf.mxu0
        %v2064 = vadd.f32 0.0, %v2063
        %v2065 = vpop.f32.mrf.mxu0
        %v2066 = vadd.f32 0.0, %v2065
        %v2067 = vpop.f32.mrf.mxu0
        %v2068 = vadd.f32 0.0, %v2067
        %v2069 = vpop.f32.mrf.mxu0
        %v2070 = vadd.f32 0.0, %v2069
        %2071 = vmatprep.mubr.bf16.mxu0 0
        %2072 = vmatmul.mubr.bf16.gmra.mxu0 %v1184
        %v2073 = vpop.f32.mrf.mxu0
        %v2074 = vadd.f32 0.0, %v2073
        %v2075 = vpop.f32.mrf.mxu0
        %v2076 = vadd.f32 0.0, %v2075
        %v2077 = vpop.f32.mrf.mxu0
        %v2078 = vadd.f32 0.0, %v2077
        %v2079 = vpop.f32.mrf.mxu0
        %v2080 = vadd.f32 0.0, %v2079
        %2081 = vmatprep.mubr.bf16.mxu0 0
        %2082 = vmatmul.mubr.bf16.gmra.mxu0 %v1185
        %v2083 = vpop.f32.mrf.mxu0
        %v2084 = vadd.f32 0.0, %v2083
        %v2085 = vpop.f32.mrf.mxu0
        %v2086 = vadd.f32 0.0, %v2085
        %v2087 = vpop.f32.mrf.mxu0
        %v2088 = vadd.f32 0.0, %v2087
        %v2089 = vpop.f32.mrf.mxu0
        %v2090 = vadd.f32 0.0, %v2089
        %2091 = vmatprep.mubr.bf16.mxu0 0
        %2092 = vmatmul.mubr.bf16.gmra.mxu0 %v1186
        %v2093 = vpop.f32.mrf.mxu0
        %v2094 = vadd.f32 0.0, %v2093
        %v2095 = vpop.f32.mrf.mxu0
        %v2096 = vadd.f32 0.0, %v2095
        %v2097 = vpop.f32.mrf.mxu0
        %v2098 = vadd.f32 0.0, %v2097
        %v2099 = vpop.f32.mrf.mxu0
        %v2100 = vadd.f32 0.0, %v2099
        %2101 = vdwg.mxu0
        %2102 = vmatprep.subr.bf16.mxu0 %v1662
        %2103 = vmatpush1.bf16.msra.mxu0 %v1661
        %2104 = vmatprep.subr.bf16.mxu0 %v1650
        %2105 = vmatpush1.bf16.msra.mxu0 %v1649
        %2106 = vmatprep.subr.bf16.mxu0 %v1638
        %2107 = vmatpush1.bf16.msra.mxu0 %v1637
        %2108 = vmatprep.subr.bf16.mxu0 %v1626
        %2109 = vmatpush1.bf16.msra.mxu0 %v1625
        %2110 = vmatprep.subr.bf16.mxu0 %v1614
        %2111 = vmatpush1.bf16.msra.mxu0 %v1613
        %2112 = vmatprep.subr.bf16.mxu0 %v1602
        %2113 = vmatpush1.bf16.msra.mxu0 %v1601
        %2114 = vmatprep.subr.bf16.mxu0 %v1590
        %2115 = vmatpush1.bf16.msra.mxu0 %v1589
        %2116 = vmatprep.subr.bf16.mxu0 %v1578
        %2117 = vmatpush1.bf16.msra.mxu0 %v1577
        %2118 = vmatprep.subr.bf16.mxu0 0
        %2119 = vmatpush2.bf16.msra.mxu0 0
        %2120 = vmatprep.subr.bf16.mxu0 0
        %2121 = vmatpush2.bf16.msra.mxu0 0
        %2122 = vmatprep.subr.bf16.mxu0 0
        %2123 = vmatpush2.bf16.msra.mxu0 0
        %2124 = vmatprep.subr.bf16.mxu0 0
        %2125 = vmatpush2.bf16.msra.mxu0 0
        %2126 = vmatprep.subr.bf16.mxu0 0
        %2127 = vmatpush2.bf16.msra.mxu0 0
        %2128 = vmatprep.subr.bf16.mxu0 0
        %2129 = vmatpush2.bf16.msra.mxu0 0
        %2130 = vmatprep.subr.bf16.mxu0 0
        %2131 = vmatpush2.bf16.msra.mxu0 0
        %2132 = vmatprep.subr.bf16.mxu0 0
        %2133 = vmatpush2.bf16.msra.mxu0 0
        %2134 = vmatprep.mubr.bf16.mxu0 0
        %2135 = vmatmul.mubr.bf16.gmra.mxu0 %v1179
        %v2136 = vpop.f32.mrf.mxu0
        %v2137 = vadd.f32 0.0, %v2136
        %v2138 = vpop.f32.mrf.mxu0
        %v2139 = vadd.f32 0.0, %v2138
        %v2140 = vpop.f32.mrf.mxu0
        %v2141 = vadd.f32 0.0, %v2140
        %v2142 = vpop.f32.mrf.mxu0
        %v2143 = vadd.f32 0.0, %v2142
        %2144 = vmatprep.mubr.bf16.mxu0 0
        %2145 = vmatmul.mubr.bf16.gmra.mxu0 %v1180
        %v2146 = vpop.f32.mrf.mxu0
        %v2147 = vadd.f32 0.0, %v2146
        %v2148 = vpop.f32.mrf.mxu0
        %v2149 = vadd.f32 0.0, %v2148
        %v2150 = vpop.f32.mrf.mxu0
        %v2151 = vadd.f32 0.0, %v2150
        %v2152 = vpop.f32.mrf.mxu0
        %v2153 = vadd.f32 0.0, %v2152
        %2154 = vmatprep.mubr.bf16.mxu0 0
        %2155 = vmatmul.mubr.bf16.gmra.mxu0 %v1181
        %v2156 = vpop.f32.mrf.mxu0
        %v2157 = vadd.f32 0.0, %v2156
        %v2158 = vpop.f32.mrf.mxu0
        %v2159 = vadd.f32 0.0, %v2158
        %v2160 = vpop.f32.mrf.mxu0
        %v2161 = vadd.f32 0.0, %v2160
        %v2162 = vpop.f32.mrf.mxu0
        %v2163 = vadd.f32 0.0, %v2162
        %2164 = vmatprep.mubr.bf16.mxu0 0
        %2165 = vmatmul.mubr.bf16.gmra.mxu0 %v1182
        %v2166 = vpop.f32.mrf.mxu0
        %v2167 = vadd.f32 0.0, %v2166
        %v2168 = vpop.f32.mrf.mxu0
        %v2169 = vadd.f32 0.0, %v2168
        %v2170 = vpop.f32.mrf.mxu0
        %v2171 = vadd.f32 0.0, %v2170
        %v2172 = vpop.f32.mrf.mxu0
        %v2173 = vadd.f32 0.0, %v2172
        %2174 = vmatprep.mubr.bf16.mxu0 0
        %2175 = vmatmul.mubr.bf16.gmra.mxu0 %v1183
        %v2176 = vpop.f32.mrf.mxu0
        %v2177 = vadd.f32 0.0, %v2176
        %v2178 = vpop.f32.mrf.mxu0
        %v2179 = vadd.f32 0.0, %v2178
        %v2180 = vpop.f32.mrf.mxu0
        %v2181 = vadd.f32 0.0, %v2180
        %v2182 = vpop.f32.mrf.mxu0
        %v2183 = vadd.f32 0.0, %v2182
        %2184 = vmatprep.mubr.bf16.mxu0 0
        %2185 = vmatmul.mubr.bf16.gmra.mxu0 %v1184
        %v2186 = vpop.f32.mrf.mxu0
        %v2187 = vadd.f32 0.0, %v2186
        %v2188 = vpop.f32.mrf.mxu0
        %v2189 = vadd.f32 0.0, %v2188
        %v2190 = vpop.f32.mrf.mxu0
        %v2191 = vadd.f32 0.0, %v2190
        %v2192 = vpop.f32.mrf.mxu0
        %v2193 = vadd.f32 0.0, %v2192
        %2194 = vmatprep.mubr.bf16.mxu0 0
        %2195 = vmatmul.mubr.bf16.gmra.mxu0 %v1185
        %v2196 = vpop.f32.mrf.mxu0
        %v2197 = vadd.f32 0.0, %v2196
        %v2198 = vpop.f32.mrf.mxu0
        %v2199 = vadd.f32 0.0, %v2198
        %v2200 = vpop.f32.mrf.mxu0
        %v2201 = vadd.f32 0.0, %v2200
        %v2202 = vpop.f32.mrf.mxu0
        %v2203 = vadd.f32 0.0, %v2202
        %2204 = vmatprep.mubr.bf16.mxu0 0
        %2205 = vmatmul.mubr.bf16.gmra.mxu0 %v1186
        %v2206 = vpop.f32.mrf.mxu0
        %v2207 = vadd.f32 0.0, %v2206
        %v2208 = vpop.f32.mrf.mxu0
        %v2209 = vadd.f32 0.0, %v2208
        %v2210 = vpop.f32.mrf.mxu0
        %v2211 = vadd.f32 0.0, %v2210
        %v2212 = vpop.f32.mrf.mxu0
        %v2213 = vadd.f32 0.0, %v2212
        %2214 = vdwg.mxu0
        %2215 = vmatprep.subr.bf16.mxu0 %v1664
        %2216 = vmatpush1.bf16.msra.mxu0 %v1663
        %2217 = vmatprep.subr.bf16.mxu0 %v1652
        %2218 = vmatpush1.bf16.msra.mxu0 %v1651
        %2219 = vmatprep.subr.bf16.mxu0 %v1640
        %2220 = vmatpush1.bf16.msra.mxu0 %v1639
        %2221 = vmatprep.subr.bf16.mxu0 %v1628
        %2222 = vmatpush1.bf16.msra.mxu0 %v1627
        %2223 = vmatprep.subr.bf16.mxu0 %v1616
        %2224 = vmatpush1.bf16.msra.mxu0 %v1615
        %2225 = vmatprep.subr.bf16.mxu0 %v1604
        %2226 = vmatpush1.bf16.msra.mxu0 %v1603
        %2227 = vmatprep.subr.bf16.mxu0 %v1592
        %2228 = vmatpush1.bf16.msra.mxu0 %v1591
        %2229 = vmatprep.subr.bf16.mxu0 %v1580
        %2230 = vmatpush1.bf16.msra.mxu0 %v1579
        %2231 = vmatprep.subr.bf16.mxu0 0
        %2232 = vmatpush2.bf16.msra.mxu0 0
        %2233 = vmatprep.subr.bf16.mxu0 0
        %2234 = vmatpush2.bf16.msra.mxu0 0
        %2235 = vmatprep.subr.bf16.mxu0 0
        %2236 = vmatpush2.bf16.msra.mxu0 0
        %2237 = vmatprep.subr.bf16.mxu0 0
        %2238 = vmatpush2.bf16.msra.mxu0 0
        %2239 = vmatprep.subr.bf16.mxu0 0
        %2240 = vmatpush2.bf16.msra.mxu0 0
        %2241 = vmatprep.subr.bf16.mxu0 0
        %2242 = vmatpush2.bf16.msra.mxu0 0
        %2243 = vmatprep.subr.bf16.mxu0 0
        %2244 = vmatpush2.bf16.msra.mxu0 0
        %2245 = vmatprep.subr.bf16.mxu0 0
        %2246 = vmatpush2.bf16.msra.mxu0 0
        %2247 = vmatprep.mubr.bf16.mxu0 0
        %2248 = vmatmul.mubr.bf16.gmra.mxu0 %v1179
        %v2249 = vpop.f32.mrf.mxu0
        %v2250 = vadd.f32 0.0, %v2249
        %v2251 = vpop.f32.mrf.mxu0
        %v2252 = vadd.f32 0.0, %v2251
        %v2253 = vpop.f32.mrf.mxu0
        %v2254 = vadd.f32 0.0, %v2253
        %v2255 = vpop.f32.mrf.mxu0
        %v2256 = vadd.f32 0.0, %v2255
        %2257 = vmatprep.mubr.bf16.mxu0 0
        %2258 = vmatmul.mubr.bf16.gmra.mxu0 %v1180
        %v2259 = vpop.f32.mrf.mxu0
        %v2260 = vadd.f32 0.0, %v2259
        %v2261 = vpop.f32.mrf.mxu0
        %v2262 = vadd.f32 0.0, %v2261
        %v2263 = vpop.f32.mrf.mxu0
        %v2264 = vadd.f32 0.0, %v2263
        %v2265 = vpop.f32.mrf.mxu0
        %v2266 = vadd.f32 0.0, %v2265
        %2267 = vmatprep.mubr.bf16.mxu0 0
        %2268 = vmatmul.mubr.bf16.gmra.mxu0 %v1181
        %v2269 = vpop.f32.mrf.mxu0
        %v2270 = vadd.f32 0.0, %v2269
        %v2271 = vpop.f32.mrf.mxu0
        %v2272 = vadd.f32 0.0, %v2271
        %v2273 = vpop.f32.mrf.mxu0
        %v2274 = vadd.f32 0.0, %v2273
        %v2275 = vpop.f32.mrf.mxu0
        %v2276 = vadd.f32 0.0, %v2275
        %2277 = vmatprep.mubr.bf16.mxu0 0
        %2278 = vmatmul.mubr.bf16.gmra.mxu0 %v1182
        %v2279 = vpop.f32.mrf.mxu0
        %v2280 = vadd.f32 0.0, %v2279
        %v2281 = vpop.f32.mrf.mxu0
        %v2282 = vadd.f32 0.0, %v2281
        %v2283 = vpop.f32.mrf.mxu0
        %v2284 = vadd.f32 0.0, %v2283
        %v2285 = vpop.f32.mrf.mxu0
        %v2286 = vadd.f32 0.0, %v2285
        %2287 = vmatprep.mubr.bf16.mxu0 0
        %2288 = vmatmul.mubr.bf16.gmra.mxu0 %v1183
        %v2289 = vpop.f32.mrf.mxu0
        %v2290 = vadd.f32 0.0, %v2289
        %v2291 = vpop.f32.mrf.mxu0
        %v2292 = vadd.f32 0.0, %v2291
        %v2293 = vpop.f32.mrf.mxu0
        %v2294 = vadd.f32 0.0, %v2293
        %v2295 = vpop.f32.mrf.mxu0
        %v2296 = vadd.f32 0.0, %v2295
        %2297 = vmatprep.mubr.bf16.mxu0 0
        %2298 = vmatmul.mubr.bf16.gmra.mxu0 %v1184
        %v2299 = vpop.f32.mrf.mxu0
        %v2300 = vadd.f32 0.0, %v2299
        %v2301 = vpop.f32.mrf.mxu0
        %v2302 = vadd.f32 0.0, %v2301
        %v2303 = vpop.f32.mrf.mxu0
        %v2304 = vadd.f32 0.0, %v2303
        %v2305 = vpop.f32.mrf.mxu0
        %v2306 = vadd.f32 0.0, %v2305
        %2307 = vmatprep.mubr.bf16.mxu0 0
        %2308 = vmatmul.mubr.bf16.gmra.mxu0 %v1185
        %v2309 = vpop.f32.mrf.mxu0
        %v2310 = vadd.f32 0.0, %v2309
        %v2311 = vpop.f32.mrf.mxu0
        %v2312 = vadd.f32 0.0, %v2311
        %v2313 = vpop.f32.mrf.mxu0
        %v2314 = vadd.f32 0.0, %v2313
        %v2315 = vpop.f32.mrf.mxu0
        %v2316 = vadd.f32 0.0, %v2315
        %2317 = vmatprep.mubr.bf16.mxu0 0
        %2318 = vmatmul.mubr.bf16.gmra.mxu0 %v1186
        %v2319 = vpop.f32.mrf.mxu0
        %v2320 = vadd.f32 0.0, %v2319
        %v2321 = vpop.f32.mrf.mxu0
        %v2322 = vadd.f32 0.0, %v2321
        %v2323 = vpop.f32.mrf.mxu0
        %v2324 = vadd.f32 0.0, %v2323
        %v2325 = vpop.f32.mrf.mxu0
        %v2326 = vadd.f32 0.0, %v2325
        %2327 = vdwg.mxu0
        %2328 = vmatprep.subr.bf16.mxu0 %v1666
        %2329 = vmatpush1.bf16.msra.mxu0 %v1665
        %2330 = vmatprep.subr.bf16.mxu0 %v1654
        %2331 = vmatpush1.bf16.msra.mxu0 %v1653
        %2332 = vmatprep.subr.bf16.mxu0 %v1642
        %2333 = vmatpush1.bf16.msra.mxu0 %v1641
        %2334 = vmatprep.subr.bf16.mxu0 %v1630
        %2335 = vmatpush1.bf16.msra.mxu0 %v1629
        %2336 = vmatprep.subr.bf16.mxu0 %v1618
        %2337 = vmatpush1.bf16.msra.mxu0 %v1617
        %2338 = vmatprep.subr.bf16.mxu0 %v1606
        %2339 = vmatpush1.bf16.msra.mxu0 %v1605
        %2340 = vmatprep.subr.bf16.mxu0 %v1594
        %2341 = vmatpush1.bf16.msra.mxu0 %v1593
        %2342 = vmatprep.subr.bf16.mxu0 %v1582
        %2343 = vmatpush1.bf16.msra.mxu0 %v1581
        %2344 = vmatprep.subr.bf16.mxu0 0
        %2345 = vmatpush2.bf16.msra.mxu0 0
        %2346 = vmatprep.subr.bf16.mxu0 0
        %2347 = vmatpush2.bf16.msra.mxu0 0
        %2348 = vmatprep.subr.bf16.mxu0 0
        %2349 = vmatpush2.bf16.msra.mxu0 0
        %2350 = vmatprep.subr.bf16.mxu0 0
        %2351 = vmatpush2.bf16.msra.mxu0 0
        %2352 = vmatprep.subr.bf16.mxu0 0
        %2353 = vmatpush2.bf16.msra.mxu0 0
        %2354 = vmatprep.subr.bf16.mxu0 0
        %2355 = vmatpush2.bf16.msra.mxu0 0
        %2356 = vmatprep.subr.bf16.mxu0 0
        %2357 = vmatpush2.bf16.msra.mxu0 0
        %2358 = vmatprep.subr.bf16.mxu0 0
        %2359 = vmatpush2.bf16.msra.mxu0 0
        %2360 = vmatprep.mubr.bf16.mxu0 0
        %2361 = vmatmul.mubr.bf16.gmra.mxu0 %v1179
        %v2362 = vpop.f32.mrf.mxu0
        %v2363 = vadd.f32 0.0, %v2362
        %v2364 = vpop.f32.mrf.mxu0
        %v2365 = vadd.f32 0.0, %v2364
        %v2366 = vpop.f32.mrf.mxu0
        %v2367 = vadd.f32 0.0, %v2366
        %v2368 = vpop.f32.mrf.mxu0
        %v2369 = vadd.f32 0.0, %v2368
        %2370 = vmatprep.mubr.bf16.mxu0 0
        %2371 = vmatmul.mubr.bf16.gmra.mxu0 %v1180
        %v2372 = vpop.f32.mrf.mxu0
        %v2373 = vadd.f32 0.0, %v2372
        %v2374 = vpop.f32.mrf.mxu0
        %v2375 = vadd.f32 0.0, %v2374
        %v2376 = vpop.f32.mrf.mxu0
        %v2377 = vadd.f32 0.0, %v2376
        %v2378 = vpop.f32.mrf.mxu0
        %v2379 = vadd.f32 0.0, %v2378
        %2380 = vmatprep.mubr.bf16.mxu0 0
        %2381 = vmatmul.mubr.bf16.gmra.mxu0 %v1181
        %v2382 = vpop.f32.mrf.mxu0
        %v2383 = vadd.f32 0.0, %v2382
        %v2384 = vpop.f32.mrf.mxu0
        %v2385 = vadd.f32 0.0, %v2384
        %v2386 = vpop.f32.mrf.mxu0
        %v2387 = vadd.f32 0.0, %v2386
        %v2388 = vpop.f32.mrf.mxu0
        %v2389 = vadd.f32 0.0, %v2388
        %2390 = vmatprep.mubr.bf16.mxu0 0
        %2391 = vmatmul.mubr.bf16.gmra.mxu0 %v1182
        %v2392 = vpop.f32.mrf.mxu0
        %v2393 = vadd.f32 0.0, %v2392
        %v2394 = vpop.f32.mrf.mxu0
        %v2395 = vadd.f32 0.0, %v2394
        %v2396 = vpop.f32.mrf.mxu0
        %v2397 = vadd.f32 0.0, %v2396
        %v2398 = vpop.f32.mrf.mxu0
        %v2399 = vadd.f32 0.0, %v2398
        %2400 = vmatprep.mubr.bf16.mxu0 0
        %2401 = vmatmul.mubr.bf16.gmra.mxu0 %v1183
        %v2402 = vpop.f32.mrf.mxu0
        %v2403 = vadd.f32 0.0, %v2402
        %v2404 = vpop.f32.mrf.mxu0
        %v2405 = vadd.f32 0.0, %v2404
        %v2406 = vpop.f32.mrf.mxu0
        %v2407 = vadd.f32 0.0, %v2406
        %v2408 = vpop.f32.mrf.mxu0
        %v2409 = vadd.f32 0.0, %v2408
        %2410 = vmatprep.mubr.bf16.mxu0 0
        %2411 = vmatmul.mubr.bf16.gmra.mxu0 %v1184
        %v2412 = vpop.f32.mrf.mxu0
        %v2413 = vadd.f32 0.0, %v2412
        %v2414 = vpop.f32.mrf.mxu0
        %v2415 = vadd.f32 0.0, %v2414
        %v2416 = vpop.f32.mrf.mxu0
        %v2417 = vadd.f32 0.0, %v2416
        %v2418 = vpop.f32.mrf.mxu0
        %v2419 = vadd.f32 0.0, %v2418
        %2420 = vmatprep.mubr.bf16.mxu0 0
        %2421 = vmatmul.mubr.bf16.gmra.mxu0 %v1185
        %v2422 = vpop.f32.mrf.mxu0
        %v2423 = vadd.f32 0.0, %v2422
        %v2424 = vpop.f32.mrf.mxu0
        %v2425 = vadd.f32 0.0, %v2424
        %v2426 = vpop.f32.mrf.mxu0
        %v2427 = vadd.f32 0.0, %v2426
        %v2428 = vpop.f32.mrf.mxu0
        %v2429 = vadd.f32 0.0, %v2428
        %2430 = vmatprep.mubr.bf16.mxu0 0
        %2431 = vmatmul.mubr.bf16.gmra.mxu0 %v1186
        %v2432 = vpop.f32.mrf.mxu0
        %v2433 = vadd.f32 0.0, %v2432
        %v2434 = vpop.f32.mrf.mxu0
        %v2435 = vadd.f32 0.0, %v2434
        %v2436 = vpop.f32.mrf.mxu0
        %v2437 = vadd.f32 0.0, %v2436
        %v2438 = vpop.f32.mrf.mxu0
        %v2439 = vadd.f32 0.0, %v2438
        %2440 = vdwg.mxu0
        %v2441 = vpack.c.bf16 %v1802, %v1798
        %v2442 = vpack.c.bf16 %v1812, %v1808
        %v2443 = vpack.c.bf16 %v1822, %v1818
        %v2444 = vpack.c.bf16 %v1832, %v1828
        %v2445 = vpack.c.bf16 %v1842, %v1838
        %v2446 = vpack.c.bf16 %v1852, %v1848
        %v2447 = vpack.c.bf16 %v1862, %v1858
        %v2448 = vpack.c.bf16 %v1872, %v1868
        %v2449 = vpack.c.bf16 %v2028, %v2024
        %v2450 = vpack.c.bf16 %v2038, %v2034
        %v2451 = vpack.c.bf16 %v2048, %v2044
        %v2452 = vpack.c.bf16 %v2058, %v2054
        %v2453 = vpack.c.bf16 %v2068, %v2064
        %v2454 = vpack.c.bf16 %v2078, %v2074
        %v2455 = vpack.c.bf16 %v2088, %v2084
        %v2456 = vpack.c.bf16 %v2098, %v2094
        %v2457 = vpack.c.bf16 %v2254, %v2250
        %v2458 = vpack.c.bf16 %v2264, %v2260
        %v2459 = vpack.c.bf16 %v2274, %v2270
        %v2460 = vpack.c.bf16 %v2284, %v2280
        %v2461 = vpack.c.bf16 %v2294, %v2290
        %v2462 = vpack.c.bf16 %v2304, %v2300
        %v2463 = vpack.c.bf16 %v2314, %v2310
        %v2464 = vpack.c.bf16 %v2324, %v2320
        %2465 = vmatprep.subr.bf16.mxu0 0
        %2466 = vmatpush1.bf16.xpose.msra.mxu0 %v2456
        %2467 = vmatprep.subr.bf16.mxu0 0
        %2468 = vmatpush1.bf16.xpose.msra.mxu0 %v2455
        %2469 = vmatprep.subr.bf16.mxu0 0
        %2470 = vmatpush1.bf16.xpose.msra.mxu0 %v2454
        %2471 = vmatprep.subr.bf16.mxu0 0
        %2472 = vmatpush1.bf16.xpose.msra.mxu0 %v2453
        %2473 = vmatprep.subr.bf16.mxu0 0
        %2474 = vmatpush1.bf16.xpose.msra.mxu0 %v2452
        %2475 = vmatprep.subr.bf16.mxu0 0
        %2476 = vmatpush1.bf16.xpose.msra.mxu0 %v2451
        %2477 = vmatprep.subr.bf16.mxu0 0
        %2478 = vmatpush1.bf16.xpose.msra.mxu0 %v2450
        %2479 = vmatprep.subr.bf16.mxu0 0
        %2480 = vmatpush1.bf16.xpose.msra.mxu0 %v2449
        %2481 = vmatprep.subr.bf16.mxu0 0
        %2482 = vmatpush2.bf16.xpose.msra.mxu0 0
        %2483 = vmatprep.subr.bf16.mxu0 0
        %2484 = vmatpush2.bf16.xpose.msra.mxu0 0
        %2485 = vmatprep.subr.bf16.mxu0 0
        %2486 = vmatpush2.bf16.xpose.msra.mxu0 0
        %2487 = vmatprep.subr.bf16.mxu0 0
        %2488 = vmatpush2.bf16.xpose.msra.mxu0 0
        %2489 = vmatprep.subr.bf16.mxu0 0
        %2490 = vmatpush2.bf16.xpose.msra.mxu0 0
        %2491 = vmatprep.subr.bf16.mxu0 0
        %2492 = vmatpush2.bf16.xpose.msra.mxu0 0
        %2493 = vmatprep.subr.bf16.mxu0 0
        %2494 = vmatpush2.bf16.xpose.msra.mxu0 0
        %2495 = vmatprep.subr.bf16.mxu0 0
        %2496 = vmatpush2.bf16.xpose.msra.mxu0 0
        %2497 = vmatprep.mubr.bf16.mxu0 0
        %2498 = vmatmul.mubr.bf16.gmra.mxu0 %v2441
        %v2499 = vpop.f32.mrf.mxu0
        %v2500 = vadd.f32 0.0, %v2499
        %v2501 = vpop.f32.mrf.mxu0
        %v2502 = vpop.f32.mrf.mxu0
        %v2503 = vadd.f32 0.0, %v2502
        %v2504 = vpop.f32.mrf.mxu0
        %2505 = vmatprep.mubr.bf16.mxu0 0
        %2506 = vmatmul.mubr.bf16.gmra.mxu0 %v2442
        %v2507 = vpop.f32.mrf.mxu0
        %v2508 = vadd.f32 0.0, %v2507
        %v2509 = vpop.f32.mrf.mxu0
        %v2510 = vpop.f32.mrf.mxu0
        %v2511 = vadd.f32 0.0, %v2510
        %v2512 = vpop.f32.mrf.mxu0
        %2513 = vmatprep.mubr.bf16.mxu0 0
        %2514 = vmatmul.mubr.bf16.gmra.mxu0 %v2443
        %v2515 = vpop.f32.mrf.mxu0
        %v2516 = vadd.f32 0.0, %v2515
        %v2517 = vpop.f32.mrf.mxu0
        %v2518 = vpop.f32.mrf.mxu0
        %v2519 = vadd.f32 0.0, %v2518
        %v2520 = vpop.f32.mrf.mxu0
        %2521 = vmatprep.mubr.bf16.mxu0 0
        %2522 = vmatmul.mubr.bf16.gmra.mxu0 %v2444
        %v2523 = vpop.f32.mrf.mxu0
        %v2524 = vadd.f32 0.0, %v2523
        %v2525 = vpop.f32.mrf.mxu0
        %v2526 = vpop.f32.mrf.mxu0
        %v2527 = vadd.f32 0.0, %v2526
        %v2528 = vpop.f32.mrf.mxu0
        %2529 = vmatprep.mubr.bf16.mxu0 0
        %2530 = vmatmul.mubr.bf16.gmra.mxu0 %v2445
        %v2531 = vpop.f32.mrf.mxu0
        %v2532 = vadd.f32 0.0, %v2531
        %v2533 = vpop.f32.mrf.mxu0
        %v2534 = vpop.f32.mrf.mxu0
        %v2535 = vadd.f32 0.0, %v2534
        %v2536 = vpop.f32.mrf.mxu0
        %2537 = vmatprep.mubr.bf16.mxu0 0
        %2538 = vmatmul.mubr.bf16.gmra.mxu0 %v2446
        %v2539 = vpop.f32.mrf.mxu0
        %v2540 = vadd.f32 0.0, %v2539
        %v2541 = vpop.f32.mrf.mxu0
        %v2542 = vpop.f32.mrf.mxu0
        %v2543 = vadd.f32 0.0, %v2542
        %v2544 = vpop.f32.mrf.mxu0
        %2545 = vmatprep.mubr.bf16.mxu0 0
        %2546 = vmatmul.mubr.bf16.gmra.mxu0 %v2447
        %v2547 = vpop.f32.mrf.mxu0
        %v2548 = vadd.f32 0.0, %v2547
        %v2549 = vpop.f32.mrf.mxu0
        %v2550 = vpop.f32.mrf.mxu0
        %v2551 = vadd.f32 0.0, %v2550
        %v2552 = vpop.f32.mrf.mxu0
        %2553 = vmatprep.mubr.bf16.mxu0 0
        %2554 = vmatmul.mubr.bf16.gmra.mxu0 %v2448
        %v2555 = vpop.f32.mrf.mxu0
        %v2556 = vadd.f32 0.0, %v2555
        %v2557 = vpop.f32.mrf.mxu0
        %v2558 = vpop.f32.mrf.mxu0
        %v2559 = vadd.f32 0.0, %v2558
        %v2560 = vpop.f32.mrf.mxu0
        %2561 = vdwg.mxu0
        %v2562 = vmul.f32 %v2500, 0.088388346
        %v2563 = vmul.f32 %v2503, 0.088388346
        %v2564 = vmul.f32 %v2508, 0.088388346
        %v2565 = vmul.f32 %v2511, 0.088388346
        %v2566 = vmul.f32 %v2516, 0.088388346
        %v2567 = vmul.f32 %v2519, 0.088388346
        %v2568 = vmul.f32 %v2524, 0.088388346
        %v2569 = vmul.f32 %v2527, 0.088388346
        %v2570 = vmul.f32 %v2532, 0.088388346
        %v2571 = vmul.f32 %v2535, 0.088388346
        %v2572 = vmul.f32 %v2540, 0.088388346
        %v2573 = vmul.f32 %v2543, 0.088388346
        %v2574 = vmul.f32 %v2548, 0.088388346
        %v2575 = vmul.f32 %v2551, 0.088388346
        %v2576 = vmul.f32 %v2556, 0.088388346
        %v2577 = vmul.f32 %v2559, 0.088388346
        %v2578 = vadd.f32 %v2562, %v940
        %v2579 = vadd.f32 %v2563, %v941
        %v2580 = vadd.f32 %v2564, %v942
        %v2581 = vadd.f32 %v2565, %v943
        %v2582 = vadd.f32 %v2566, %v944
        %v2583 = vadd.f32 %v2567, %v945
        %v2584 = vadd.f32 %v2568, %v946
        %v2585 = vadd.f32 %v2569, %v947
        %v2586 = vadd.f32 %v2570, %v948
        %v2587 = vadd.f32 %v2571, %v949
        %v2588 = vadd.f32 %v2572, %v950
        %v2589 = vadd.f32 %v2573, %v951
        %v2590 = vadd.f32 %v2574, %v952
        %v2591 = vadd.f32 %v2575, %v953
        %v2592 = vadd.f32 %v2576, %v954
        %v2593 = vadd.f32 %v2577, %v955
        %2594 = vmax.xlane.f32.xlu0 %v2578
        %v2595 = vpop.xlane.xlu0 %2594
        %2596 = vmax.xlane.f32.xlu0 %v2579
        %v2597 = vpop.xlane.xlu0 %2596
        %2598 = vmax.xlane.f32.xlu0 %v2580
        %v2599 = vpop.xlane.xlu0 %2598
        %2600 = vmax.xlane.f32.xlu0 %v2581
        %v2601 = vpop.xlane.xlu0 %2600
        %2602 = vmax.xlane.f32.xlu0 %v2582
        %v2603 = vpop.xlane.xlu0 %2602
        %2604 = vmax.xlane.f32.xlu0 %v2583
        %v2605 = vpop.xlane.xlu0 %2604
        %2606 = vmax.xlane.f32.xlu0 %v2584
        %v2607 = vpop.xlane.xlu0 %2606
        %2608 = vmax.xlane.f32.xlu0 %v2585
        %v2609 = vpop.xlane.xlu0 %2608
        %2610 = vmax.xlane.f32.xlu0 %v2586
        %v2611 = vpop.xlane.xlu0 %2610
        %2612 = vmax.xlane.f32.xlu0 %v2587
        %v2613 = vpop.xlane.xlu0 %2612
        %2614 = vmax.xlane.f32.xlu0 %v2588
        %v2615 = vpop.xlane.xlu0 %2614
        %2616 = vmax.xlane.f32.xlu0 %v2589
        %v2617 = vpop.xlane.xlu0 %2616
        %2618 = vmax.xlane.f32.xlu0 %v2590
        %v2619 = vpop.xlane.xlu0 %2618
        %2620 = vmax.xlane.f32.xlu0 %v2591
        %v2621 = vpop.xlane.xlu0 %2620
        %2622 = vmax.xlane.f32.xlu0 %v2592
        %v2623 = vpop.xlane.xlu0 %2622
        %2624 = vmax.xlane.f32.xlu0 %v2593
        %v2625 = vpop.xlane.xlu0 %2624
        %v2626 = vsub.f32 %v2578, %v2595
        %v2627 = vsub.f32 %v2579, %v2597
        %v2628 = vsub.f32 %v2580, %v2599
        %v2629 = vsub.f32 %v2581, %v2601
        %v2630 = vsub.f32 %v2582, %v2603
        %v2631 = vsub.f32 %v2583, %v2605
        %v2632 = vsub.f32 %v2584, %v2607
        %v2633 = vsub.f32 %v2585, %v2609
        %v2634 = vsub.f32 %v2586, %v2611
        %v2635 = vsub.f32 %v2587, %v2613
        %v2636 = vsub.f32 %v2588, %v2615
        %v2637 = vsub.f32 %v2589, %v2617
        %v2638 = vsub.f32 %v2590, %v2619
        %v2639 = vsub.f32 %v2591, %v2621
        %v2640 = vsub.f32 %v2592, %v2623
        %v2641 = vsub.f32 %v2593, %v2625
        %v2642 = vmul.f32 %v2626, 1.442695
        %v2643 = vpow.pop %v2642
        %v2644 = vmul.f32 %v2627, 1.442695
        %v2645 = vpow.pop %v2644
        %v2646 = vmul.f32 %v2628, 1.442695
        %v2647 = vpow.pop %v2646
        %v2648 = vmul.f32 %v2629, 1.442695
        %v2649 = vpow.pop %v2648
        %v2650 = vmul.f32 %v2630, 1.442695
        %v2651 = vpow.pop %v2650
        %v2652 = vmul.f32 %v2631, 1.442695
        %v2653 = vpow.pop %v2652
        %v2654 = vmul.f32 %v2632, 1.442695
        %v2655 = vpow.pop %v2654
        %v2656 = vmul.f32 %v2633, 1.442695
        %v2657 = vpow.pop %v2656
        %v2658 = vmul.f32 %v2634, 1.442695
        %v2659 = vpow.pop %v2658
        %v2660 = vmul.f32 %v2635, 1.442695
        %v2661 = vpow.pop %v2660
        %v2662 = vmul.f32 %v2636, 1.442695
        %v2663 = vpow.pop %v2662
        %v2664 = vmul.f32 %v2637, 1.442695
        %v2665 = vpow.pop %v2664
        %v2666 = vmul.f32 %v2638, 1.442695
        %v2667 = vpow.pop %v2666
        %v2668 = vmul.f32 %v2639, 1.442695
        %v2669 = vpow.pop %v2668
        %v2670 = vmul.f32 %v2640, 1.442695
        %v2671 = vpow.pop %v2670
        %v2672 = vmul.f32 %v2641, 1.442695
        %v2673 = vpow.pop %v2672
        %2674 = vadd.xlane.f32.xlu0 %v2643
        %v2675 = vpop.xlane.xlu0 %2674
        %2676 = vadd.xlane.f32.xlu0 %v2645
        %v2677 = vpop.xlane.xlu0 %2676
        %2678 = vadd.xlane.f32.xlu0 %v2647
        %v2679 = vpop.xlane.xlu0 %2678
        %2680 = vadd.xlane.f32.xlu0 %v2649
        %v2681 = vpop.xlane.xlu0 %2680
        %2682 = vadd.xlane.f32.xlu0 %v2651
        %v2683 = vpop.xlane.xlu0 %2682
        %2684 = vadd.xlane.f32.xlu0 %v2653
        %v2685 = vpop.xlane.xlu0 %2684
        %2686 = vadd.xlane.f32.xlu0 %v2655
        %v2687 = vpop.xlane.xlu0 %2686
        %2688 = vadd.xlane.f32.xlu0 %v2657
        %v2689 = vpop.xlane.xlu0 %2688
        %2690 = vadd.xlane.f32.xlu0 %v2659
        %v2691 = vpop.xlane.xlu0 %2690
        %2692 = vadd.xlane.f32.xlu0 %v2661
        %v2693 = vpop.xlane.xlu0 %2692
        %2694 = vadd.xlane.f32.xlu0 %v2663
        %v2695 = vpop.xlane.xlu0 %2694
        %2696 = vadd.xlane.f32.xlu0 %v2665
        %v2697 = vpop.xlane.xlu0 %2696
        %2698 = vadd.xlane.f32.xlu0 %v2667
        %v2699 = vpop.xlane.xlu0 %2698
        %2700 = vadd.xlane.f32.xlu0 %v2669
        %v2701 = vpop.xlane.xlu0 %2700
        %2702 = vadd.xlane.f32.xlu0 %v2671
        %v2703 = vpop.xlane.xlu0 %2702
        %2704 = vadd.xlane.f32.xlu0 %v2673
        %v2705 = vpop.xlane.xlu0 %2704
        %v2706 = vrcp.pop %v2675
        %v2707 = vrcp.pop %v2677
        %v2708 = vrcp.pop %v2679
        %v2709 = vrcp.pop %v2681
        %v2710 = vrcp.pop %v2683
        %v2711 = vrcp.pop %v2685
        %v2712 = vrcp.pop %v2687
        %v2713 = vrcp.pop %v2689
        %v2714 = vrcp.pop %v2691
        %v2715 = vrcp.pop %v2693
        %v2716 = vrcp.pop %v2695
        %v2717 = vrcp.pop %v2697
        %v2718 = vrcp.pop %v2699
        %v2719 = vrcp.pop %v2701
        %v2720 = vrcp.pop %v2703
        %v2721 = vrcp.pop %v2705
        %v2722 = vmul.f32 %v2643, %v2706
        %v2723 = vmul.f32 %v2645, %v2707
        %v2724 = vmul.f32 %v2647, %v2708
        %v2725 = vmul.f32 %v2649, %v2709
        %v2726 = vmul.f32 %v2651, %v2710
        %v2727 = vmul.f32 %v2653, %v2711
        %v2728 = vmul.f32 %v2655, %v2712
        %v2729 = vmul.f32 %v2657, %v2713
        %v2730 = vmul.f32 %v2659, %v2714
        %v2731 = vmul.f32 %v2661, %v2715
        %v2732 = vmul.f32 %v2663, %v2716
        %v2733 = vmul.f32 %v2665, %v2717
        %v2734 = vmul.f32 %v2667, %v2718
        %v2735 = vmul.f32 %v2669, %v2719
        %v2736 = vmul.f32 %v2671, %v2720
        %v2737 = vmul.f32 %v2673, %v2721
        %v2738 = vpack.c.bf16 %v2723, %v2722
        %v2739 = vpack.c.bf16 %v2725, %v2724
        %v2740 = vpack.c.bf16 %v2727, %v2726
        %v2741 = vpack.c.bf16 %v2729, %v2728
        %v2742 = vpack.c.bf16 %v2731, %v2730
        %v2743 = vpack.c.bf16 %v2733, %v2732
        %v2744 = vpack.c.bf16 %v2735, %v2734
        %v2745 = vpack.c.bf16 %v2737, %v2736
        %2746 = vmatprep.subr.bf16.mxu0 0
        %2747 = vmatpush1.bf16.msra.mxu0 %v2464
        %2748 = vmatprep.subr.bf16.mxu0 0
        %2749 = vmatpush1.bf16.msra.mxu0 %v2463
        %2750 = vmatprep.subr.bf16.mxu0 0
        %2751 = vmatpush1.bf16.msra.mxu0 %v2462
        %2752 = vmatprep.subr.bf16.mxu0 0
        %2753 = vmatpush1.bf16.msra.mxu0 %v2461
        %2754 = vmatprep.subr.bf16.mxu0 0
        %2755 = vmatpush1.bf16.msra.mxu0 %v2460
        %2756 = vmatprep.subr.bf16.mxu0 0
        %2757 = vmatpush1.bf16.msra.mxu0 %v2459
        %2758 = vmatprep.subr.bf16.mxu0 0
        %2759 = vmatpush1.bf16.msra.mxu0 %v2458
        %2760 = vmatprep.subr.bf16.mxu0 0
        %2761 = vmatpush1.bf16.msra.mxu0 %v2457
        %2762 = vmatprep.subr.bf16.mxu0 0
        %2763 = vmatpush2.bf16.msra.mxu0 0
        %2764 = vmatprep.subr.bf16.mxu0 0
        %2765 = vmatpush2.bf16.msra.mxu0 0
        %2766 = vmatprep.subr.bf16.mxu0 0
        %2767 = vmatpush2.bf16.msra.mxu0 0
        %2768 = vmatprep.subr.bf16.mxu0 0
        %2769 = vmatpush2.bf16.msra.mxu0 0
        %2770 = vmatprep.subr.bf16.mxu0 0
        %2771 = vmatpush2.bf16.msra.mxu0 0
        %2772 = vmatprep.subr.bf16.mxu0 0
        %2773 = vmatpush2.bf16.msra.mxu0 0
        %2774 = vmatprep.subr.bf16.mxu0 0
        %2775 = vmatpush2.bf16.msra.mxu0 0
        %2776 = vmatprep.subr.bf16.mxu0 0
        %2777 = vmatpush2.bf16.msra.mxu0 0
        %2778 = vmatprep.mubr.bf16.mxu0 0
        %2779 = vmatmul.mubr.bf16.gmra.mxu0 %v2738
        %v2780 = vpop.f32.mrf.mxu0
        %v2781 = vadd.f32 0.0, %v2780
        %v2782 = vpop.f32.mrf.mxu0
        %v2783 = vpop.f32.mrf.mxu0
        %v2784 = vadd.f32 0.0, %v2783
        %v2785 = vpop.f32.mrf.mxu0
        %2786 = vmatprep.mubr.bf16.mxu0 0
        %2787 = vmatmul.mubr.bf16.gmra.mxu0 %v2739
        %v2788 = vpop.f32.mrf.mxu0
        %v2789 = vadd.f32 0.0, %v2788
        %v2790 = vpop.f32.mrf.mxu0
        %v2791 = vpop.f32.mrf.mxu0
        %v2792 = vadd.f32 0.0, %v2791
        %v2793 = vpop.f32.mrf.mxu0
        %2794 = vmatprep.mubr.bf16.mxu0 0
        %2795 = vmatmul.mubr.bf16.gmra.mxu0 %v2740
        %v2796 = vpop.f32.mrf.mxu0
        %v2797 = vadd.f32 0.0, %v2796
        %v2798 = vpop.f32.mrf.mxu0
        %v2799 = vpop.f32.mrf.mxu0
        %v2800 = vadd.f32 0.0, %v2799
        %v2801 = vpop.f32.mrf.mxu0
        %2802 = vmatprep.mubr.bf16.mxu0 0
        %2803 = vmatmul.mubr.bf16.gmra.mxu0 %v2741
        %v2804 = vpop.f32.mrf.mxu0
        %v2805 = vadd.f32 0.0, %v2804
        %v2806 = vpop.f32.mrf.mxu0
        %v2807 = vpop.f32.mrf.mxu0
        %v2808 = vadd.f32 0.0, %v2807
        %v2809 = vpop.f32.mrf.mxu0
        %2810 = vmatprep.mubr.bf16.mxu0 0
        %2811 = vmatmul.mubr.bf16.gmra.mxu0 %v2742
        %v2812 = vpop.f32.mrf.mxu0
        %v2813 = vadd.f32 0.0, %v2812
        %v2814 = vpop.f32.mrf.mxu0
        %v2815 = vpop.f32.mrf.mxu0
        %v2816 = vadd.f32 0.0, %v2815
        %v2817 = vpop.f32.mrf.mxu0
        %2818 = vmatprep.mubr.bf16.mxu0 0
        %2819 = vmatmul.mubr.bf16.gmra.mxu0 %v2743
        %v2820 = vpop.f32.mrf.mxu0
        %v2821 = vadd.f32 0.0, %v2820
        %v2822 = vpop.f32.mrf.mxu0
        %v2823 = vpop.f32.mrf.mxu0
        %v2824 = vadd.f32 0.0, %v2823
        %v2825 = vpop.f32.mrf.mxu0
        %2826 = vmatprep.mubr.bf16.mxu0 0
        %2827 = vmatmul.mubr.bf16.gmra.mxu0 %v2744
        %v2828 = vpop.f32.mrf.mxu0
        %v2829 = vadd.f32 0.0, %v2828
        %v2830 = vpop.f32.mrf.mxu0
        %v2831 = vpop.f32.mrf.mxu0
        %v2832 = vadd.f32 0.0, %v2831
        %v2833 = vpop.f32.mrf.mxu0
        %2834 = vmatprep.mubr.bf16.mxu0 0
        %2835 = vmatmul.mubr.bf16.gmra.mxu0 %v2745
        %v2836 = vpop.f32.mrf.mxu0
        %v2837 = vadd.f32 0.0, %v2836
        %v2838 = vpop.f32.mrf.mxu0
        %v2839 = vpop.f32.mrf.mxu0
        %v2840 = vadd.f32 0.0, %v2839
        %v2841 = vpop.f32.mrf.mxu0
        %2842 = vdwg.mxu0
        %v2843 = vpack.c.bf16 %v1804, %v1800
        %v2844 = vpack.c.bf16 %v1814, %v1810
        %v2845 = vpack.c.bf16 %v1824, %v1820
        %v2846 = vpack.c.bf16 %v1834, %v1830
        %v2847 = vpack.c.bf16 %v1844, %v1840
        %v2848 = vpack.c.bf16 %v1854, %v1850
        %v2849 = vpack.c.bf16 %v1864, %v1860
        %v2850 = vpack.c.bf16 %v1874, %v1870
        %v2851 = vpack.c.bf16 %v2030, %v2026
        %v2852 = vpack.c.bf16 %v2040, %v2036
        %v2853 = vpack.c.bf16 %v2050, %v2046
        %v2854 = vpack.c.bf16 %v2060, %v2056
        %v2855 = vpack.c.bf16 %v2070, %v2066
        %v2856 = vpack.c.bf16 %v2080, %v2076
        %v2857 = vpack.c.bf16 %v2090, %v2086
        %v2858 = vpack.c.bf16 %v2100, %v2096
        %v2859 = vpack.c.bf16 %v2256, %v2252
        %v2860 = vpack.c.bf16 %v2266, %v2262
        %v2861 = vpack.c.bf16 %v2276, %v2272
        %v2862 = vpack.c.bf16 %v2286, %v2282
        %v2863 = vpack.c.bf16 %v2296, %v2292
        %v2864 = vpack.c.bf16 %v2306, %v2302
        %v2865 = vpack.c.bf16 %v2316, %v2312
        %v2866 = vpack.c.bf16 %v2326, %v2322
        %2867 = vmatprep.subr.bf16.mxu0 0
        %2868 = vmatpush1.bf16.xpose.msra.mxu0 %v2858
        %2869 = vmatprep.subr.bf16.mxu0 0
        %2870 = vmatpush1.bf16.xpose.msra.mxu0 %v2857
        %2871 = vmatprep.subr.bf16.mxu0 0
        %2872 = vmatpush1.bf16.xpose.msra.mxu0 %v2856
        %2873 = vmatprep.subr.bf16.mxu0 0
        %2874 = vmatpush1.bf16.xpose.msra.mxu0 %v2855
        %2875 = vmatprep.subr.bf16.mxu0 0
        %2876 = vmatpush1.bf16.xpose.msra.mxu0 %v2854
        %2877 = vmatprep.subr.bf16.mxu0 0
        %2878 = vmatpush1.bf16.xpose.msra.mxu0 %v2853
        %2879 = vmatprep.subr.bf16.mxu0 0
        %2880 = vmatpush1.bf16.xpose.msra.mxu0 %v2852
        %2881 = vmatprep.subr.bf16.mxu0 0
        %2882 = vmatpush1.bf16.xpose.msra.mxu0 %v2851
        %2883 = vmatprep.subr.bf16.mxu0 0
        %2884 = vmatpush2.bf16.xpose.msra.mxu0 0
        %2885 = vmatprep.subr.bf16.mxu0 0
        %2886 = vmatpush2.bf16.xpose.msra.mxu0 0
        %2887 = vmatprep.subr.bf16.mxu0 0
        %2888 = vmatpush2.bf16.xpose.msra.mxu0 0
        %2889 = vmatprep.subr.bf16.mxu0 0
        %2890 = vmatpush2.bf16.xpose.msra.mxu0 0
        %2891 = vmatprep.subr.bf16.mxu0 0
        %2892 = vmatpush2.bf16.xpose.msra.mxu0 0
        %2893 = vmatprep.subr.bf16.mxu0 0
        %2894 = vmatpush2.bf16.xpose.msra.mxu0 0
        %2895 = vmatprep.subr.bf16.mxu0 0
        %2896 = vmatpush2.bf16.xpose.msra.mxu0 0
        %2897 = vmatprep.subr.bf16.mxu0 0
        %2898 = vmatpush2.bf16.xpose.msra.mxu0 0
        %2899 = vmatprep.mubr.bf16.mxu0 0
        %2900 = vmatmul.mubr.bf16.gmra.mxu0 %v2843
        %v2901 = vpop.f32.mrf.mxu0
        %v2902 = vadd.f32 0.0, %v2901
        %v2903 = vpop.f32.mrf.mxu0
        %v2904 = vpop.f32.mrf.mxu0
        %v2905 = vadd.f32 0.0, %v2904
        %v2906 = vpop.f32.mrf.mxu0
        %2907 = vmatprep.mubr.bf16.mxu0 0
        %2908 = vmatmul.mubr.bf16.gmra.mxu0 %v2844
        %v2909 = vpop.f32.mrf.mxu0
        %v2910 = vadd.f32 0.0, %v2909
        %v2911 = vpop.f32.mrf.mxu0
        %v2912 = vpop.f32.mrf.mxu0
        %v2913 = vadd.f32 0.0, %v2912
        %v2914 = vpop.f32.mrf.mxu0
        %2915 = vmatprep.mubr.bf16.mxu0 0
        %2916 = vmatmul.mubr.bf16.gmra.mxu0 %v2845
        %v2917 = vpop.f32.mrf.mxu0
        %v2918 = vadd.f32 0.0, %v2917
        %v2919 = vpop.f32.mrf.mxu0
        %v2920 = vpop.f32.mrf.mxu0
        %v2921 = vadd.f32 0.0, %v2920
        %v2922 = vpop.f32.mrf.mxu0
        %2923 = vmatprep.mubr.bf16.mxu0 0
        %2924 = vmatmul.mubr.bf16.gmra.mxu0 %v2846
        %v2925 = vpop.f32.mrf.mxu0
        %v2926 = vadd.f32 0.0, %v2925
        %v2927 = vpop.f32.mrf.mxu0
        %v2928 = vpop.f32.mrf.mxu0
        %v2929 = vadd.f32 0.0, %v2928
        %v2930 = vpop.f32.mrf.mxu0
        %2931 = vmatprep.mubr.bf16.mxu0 0
        %2932 = vmatmul.mubr.bf16.gmra.mxu0 %v2847
        %v2933 = vpop.f32.mrf.mxu0
        %v2934 = vadd.f32 0.0, %v2933
        %v2935 = vpop.f32.mrf.mxu0
        %v2936 = vpop.f32.mrf.mxu0
        %v2937 = vadd.f32 0.0, %v2936
        %v2938 = vpop.f32.mrf.mxu0
        %2939 = vmatprep.mubr.bf16.mxu0 0
        %2940 = vmatmul.mubr.bf16.gmra.mxu0 %v2848
        %v2941 = vpop.f32.mrf.mxu0
        %v2942 = vadd.f32 0.0, %v2941
        %v2943 = vpop.f32.mrf.mxu0
        %v2944 = vpop.f32.mrf.mxu0
        %v2945 = vadd.f32 0.0, %v2944
        %v2946 = vpop.f32.mrf.mxu0
        %2947 = vmatprep.mubr.bf16.mxu0 0
        %2948 = vmatmul.mubr.bf16.gmra.mxu0 %v2849
        %v2949 = vpop.f32.mrf.mxu0
        %v2950 = vadd.f32 0.0, %v2949
        %v2951 = vpop.f32.mrf.mxu0
        %v2952 = vpop.f32.mrf.mxu0
        %v2953 = vadd.f32 0.0, %v2952
        %v2954 = vpop.f32.mrf.mxu0
        %2955 = vmatprep.mubr.bf16.mxu0 0
        %2956 = vmatmul.mubr.bf16.gmra.mxu0 %v2850
        %v2957 = vpop.f32.mrf.mxu0
        %v2958 = vadd.f32 0.0, %v2957
        %v2959 = vpop.f32.mrf.mxu0
        %v2960 = vpop.f32.mrf.mxu0
        %v2961 = vadd.f32 0.0, %v2960
        %v2962 = vpop.f32.mrf.mxu0
        %2963 = vdwg.mxu0
        %v2964 = vmul.f32 %v2902, 0.088388346
        %v2965 = vmul.f32 %v2905, 0.088388346
        %v2966 = vmul.f32 %v2910, 0.088388346
        %v2967 = vmul.f32 %v2913, 0.088388346
        %v2968 = vmul.f32 %v2918, 0.088388346
        %v2969 = vmul.f32 %v2921, 0.088388346
        %v2970 = vmul.f32 %v2926, 0.088388346
        %v2971 = vmul.f32 %v2929, 0.088388346
        %v2972 = vmul.f32 %v2934, 0.088388346
        %v2973 = vmul.f32 %v2937, 0.088388346
        %v2974 = vmul.f32 %v2942, 0.088388346
        %v2975 = vmul.f32 %v2945, 0.088388346
        %v2976 = vmul.f32 %v2950, 0.088388346
        %v2977 = vmul.f32 %v2953, 0.088388346
        %v2978 = vmul.f32 %v2958, 0.088388346
        %v2979 = vmul.f32 %v2961, 0.088388346
        %v2980 = vadd.f32 %v2964, %v940
        %v2981 = vadd.f32 %v2965, %v941
        %v2982 = vadd.f32 %v2966, %v942
        %v2983 = vadd.f32 %v2967, %v943
        %v2984 = vadd.f32 %v2968, %v944
        %v2985 = vadd.f32 %v2969, %v945
        %v2986 = vadd.f32 %v2970, %v946
        %v2987 = vadd.f32 %v2971, %v947
        %v2988 = vadd.f32 %v2972, %v948
        %v2989 = vadd.f32 %v2973, %v949
        %v2990 = vadd.f32 %v2974, %v950
        %v2991 = vadd.f32 %v2975, %v951
        %v2992 = vadd.f32 %v2976, %v952
        %v2993 = vadd.f32 %v2977, %v953
        %v2994 = vadd.f32 %v2978, %v954
        %v2995 = vadd.f32 %v2979, %v955
        %2996 = vmax.xlane.f32.xlu0 %v2980
        %v2997 = vpop.xlane.xlu0 %2996
        %2998 = vmax.xlane.f32.xlu0 %v2981
        %v2999 = vpop.xlane.xlu0 %2998
        %3000 = vmax.xlane.f32.xlu0 %v2982
        %v3001 = vpop.xlane.xlu0 %3000
        %3002 = vmax.xlane.f32.xlu0 %v2983
        %v3003 = vpop.xlane.xlu0 %3002
        %3004 = vmax.xlane.f32.xlu0 %v2984
        %v3005 = vpop.xlane.xlu0 %3004
        %3006 = vmax.xlane.f32.xlu0 %v2985
        %v3007 = vpop.xlane.xlu0 %3006
        %3008 = vmax.xlane.f32.xlu0 %v2986
        %v3009 = vpop.xlane.xlu0 %3008
        %3010 = vmax.xlane.f32.xlu0 %v2987
        %v3011 = vpop.xlane.xlu0 %3010
        %3012 = vmax.xlane.f32.xlu0 %v2988
        %v3013 = vpop.xlane.xlu0 %3012
        %3014 = vmax.xlane.f32.xlu0 %v2989
        %v3015 = vpop.xlane.xlu0 %3014
        %3016 = vmax.xlane.f32.xlu0 %v2990
        %v3017 = vpop.xlane.xlu0 %3016
        %3018 = vmax.xlane.f32.xlu0 %v2991
        %v3019 = vpop.xlane.xlu0 %3018
        %3020 = vmax.xlane.f32.xlu0 %v2992
        %v3021 = vpop.xlane.xlu0 %3020
        %3022 = vmax.xlane.f32.xlu0 %v2993
        %v3023 = vpop.xlane.xlu0 %3022
        %3024 = vmax.xlane.f32.xlu0 %v2994
        %v3025 = vpop.xlane.xlu0 %3024
        %3026 = vmax.xlane.f32.xlu0 %v2995
        %v3027 = vpop.xlane.xlu0 %3026
        %v3028 = vsub.f32 %v2980, %v2997
        %v3029 = vsub.f32 %v2981, %v2999
        %v3030 = vsub.f32 %v2982, %v3001
        %v3031 = vsub.f32 %v2983, %v3003
        %v3032 = vsub.f32 %v2984, %v3005
        %v3033 = vsub.f32 %v2985, %v3007
        %v3034 = vsub.f32 %v2986, %v3009
        %v3035 = vsub.f32 %v2987, %v3011
        %v3036 = vsub.f32 %v2988, %v3013
        %v3037 = vsub.f32 %v2989, %v3015
        %v3038 = vsub.f32 %v2990, %v3017
        %v3039 = vsub.f32 %v2991, %v3019
        %v3040 = vsub.f32 %v2992, %v3021
        %v3041 = vsub.f32 %v2993, %v3023
        %v3042 = vsub.f32 %v2994, %v3025
        %v3043 = vsub.f32 %v2995, %v3027
        %v3044 = vmul.f32 %v3028, 1.442695
        %v3045 = vpow.pop %v3044
        %v3046 = vmul.f32 %v3029, 1.442695
        %v3047 = vpow.pop %v3046
        %v3048 = vmul.f32 %v3030, 1.442695
        %v3049 = vpow.pop %v3048
        %v3050 = vmul.f32 %v3031, 1.442695
        %v3051 = vpow.pop %v3050
        %v3052 = vmul.f32 %v3032, 1.442695
        %v3053 = vpow.pop %v3052
        %v3054 = vmul.f32 %v3033, 1.442695
        %v3055 = vpow.pop %v3054
        %v3056 = vmul.f32 %v3034, 1.442695
        %v3057 = vpow.pop %v3056
        %v3058 = vmul.f32 %v3035, 1.442695
        %v3059 = vpow.pop %v3058
        %v3060 = vmul.f32 %v3036, 1.442695
        %v3061 = vpow.pop %v3060
        %v3062 = vmul.f32 %v3037, 1.442695
        %v3063 = vpow.pop %v3062
        %v3064 = vmul.f32 %v3038, 1.442695
        %v3065 = vpow.pop %v3064
        %v3066 = vmul.f32 %v3039, 1.442695
        %v3067 = vpow.pop %v3066
        %v3068 = vmul.f32 %v3040, 1.442695
        %v3069 = vpow.pop %v3068
        %v3070 = vmul.f32 %v3041, 1.442695
        %v3071 = vpow.pop %v3070
        %v3072 = vmul.f32 %v3042, 1.442695
        %v3073 = vpow.pop %v3072
        %v3074 = vmul.f32 %v3043, 1.442695
        %v3075 = vpow.pop %v3074
        %3076 = vadd.xlane.f32.xlu0 %v3045
        %v3077 = vpop.xlane.xlu0 %3076
        %3078 = vadd.xlane.f32.xlu0 %v3047
        %v3079 = vpop.xlane.xlu0 %3078
        %3080 = vadd.xlane.f32.xlu0 %v3049
        %v3081 = vpop.xlane.xlu0 %3080
        %3082 = vadd.xlane.f32.xlu0 %v3051
        %v3083 = vpop.xlane.xlu0 %3082
        %3084 = vadd.xlane.f32.xlu0 %v3053
        %v3085 = vpop.xlane.xlu0 %3084
        %3086 = vadd.xlane.f32.xlu0 %v3055
        %v3087 = vpop.xlane.xlu0 %3086
        %3088 = vadd.xlane.f32.xlu0 %v3057
        %v3089 = vpop.xlane.xlu0 %3088
        %3090 = vadd.xlane.f32.xlu0 %v3059
        %v3091 = vpop.xlane.xlu0 %3090
        %3092 = vadd.xlane.f32.xlu0 %v3061
        %v3093 = vpop.xlane.xlu0 %3092
        %3094 = vadd.xlane.f32.xlu0 %v3063
        %v3095 = vpop.xlane.xlu0 %3094
        %3096 = vadd.xlane.f32.xlu0 %v3065
        %v3097 = vpop.xlane.xlu0 %3096
        %3098 = vadd.xlane.f32.xlu0 %v3067
        %v3099 = vpop.xlane.xlu0 %3098
        %3100 = vadd.xlane.f32.xlu0 %v3069
        %v3101 = vpop.xlane.xlu0 %3100
        %3102 = vadd.xlane.f32.xlu0 %v3071
        %v3103 = vpop.xlane.xlu0 %3102
        %3104 = vadd.xlane.f32.xlu0 %v3073
        %v3105 = vpop.xlane.xlu0 %3104
        %3106 = vadd.xlane.f32.xlu0 %v3075
        %v3107 = vpop.xlane.xlu0 %3106
        %v3108 = vrcp.pop %v3077
        %v3109 = vrcp.pop %v3079
        %v3110 = vrcp.pop %v3081
        %v3111 = vrcp.pop %v3083
        %v3112 = vrcp.pop %v3085
        %v3113 = vrcp.pop %v3087
        %v3114 = vrcp.pop %v3089
        %v3115 = vrcp.pop %v3091
        %v3116 = vrcp.pop %v3093
        %v3117 = vrcp.pop %v3095
        %v3118 = vrcp.pop %v3097
        %v3119 = vrcp.pop %v3099
        %v3120 = vrcp.pop %v3101
        %v3121 = vrcp.pop %v3103
        %v3122 = vrcp.pop %v3105
        %v3123 = vrcp.pop %v3107
        %v3124 = vmul.f32 %v3045, %v3108
        %v3125 = vmul.f32 %v3047, %v3109
        %v3126 = vmul.f32 %v3049, %v3110
        %v3127 = vmul.f32 %v3051, %v3111
        %v3128 = vmul.f32 %v3053, %v3112
        %v3129 = vmul.f32 %v3055, %v3113
        %v3130 = vmul.f32 %v3057, %v3114
        %v3131 = vmul.f32 %v3059, %v3115
        %v3132 = vmul.f32 %v3061, %v3116
        %v3133 = vmul.f32 %v3063, %v3117
        %v3134 = vmul.f32 %v3065, %v3118
        %v3135 = vmul.f32 %v3067, %v3119
        %v3136 = vmul.f32 %v3069, %v3120
        %v3137 = vmul.f32 %v3071, %v3121
        %v3138 = vmul.f32 %v3073, %v3122
        %v3139 = vmul.f32 %v3075, %v3123
        %v3140 = vpack.c.bf16 %v3125, %v3124
        %v3141 = vpack.c.bf16 %v3127, %v3126
        %v3142 = vpack.c.bf16 %v3129, %v3128
        %v3143 = vpack.c.bf16 %v3131, %v3130
        %v3144 = vpack.c.bf16 %v3133, %v3132
        %v3145 = vpack.c.bf16 %v3135, %v3134
        %v3146 = vpack.c.bf16 %v3137, %v3136
        %v3147 = vpack.c.bf16 %v3139, %v3138
        %3148 = vmatprep.subr.bf16.mxu0 0
        %3149 = vmatpush1.bf16.msra.mxu0 %v2866
        %3150 = vmatprep.subr.bf16.mxu0 0
        %3151 = vmatpush1.bf16.msra.mxu0 %v2865
        %3152 = vmatprep.subr.bf16.mxu0 0
        %3153 = vmatpush1.bf16.msra.mxu0 %v2864
        %3154 = vmatprep.subr.bf16.mxu0 0
        %3155 = vmatpush1.bf16.msra.mxu0 %v2863
        %3156 = vmatprep.subr.bf16.mxu0 0
        %3157 = vmatpush1.bf16.msra.mxu0 %v2862
        %3158 = vmatprep.subr.bf16.mxu0 0
        %3159 = vmatpush1.bf16.msra.mxu0 %v2861
        %3160 = vmatprep.subr.bf16.mxu0 0
        %3161 = vmatpush1.bf16.msra.mxu0 %v2860
        %3162 = vmatprep.subr.bf16.mxu0 0
        %3163 = vmatpush1.bf16.msra.mxu0 %v2859
        %3164 = vmatprep.subr.bf16.mxu0 0
        %3165 = vmatpush2.bf16.msra.mxu0 0
        %3166 = vmatprep.subr.bf16.mxu0 0
        %3167 = vmatpush2.bf16.msra.mxu0 0
        %3168 = vmatprep.subr.bf16.mxu0 0
        %3169 = vmatpush2.bf16.msra.mxu0 0
        %3170 = vmatprep.subr.bf16.mxu0 0
        %3171 = vmatpush2.bf16.msra.mxu0 0
        %3172 = vmatprep.subr.bf16.mxu0 0
        %3173 = vmatpush2.bf16.msra.mxu0 0
        %3174 = vmatprep.subr.bf16.mxu0 0
        %3175 = vmatpush2.bf16.msra.mxu0 0
        %3176 = vmatprep.subr.bf16.mxu0 0
        %3177 = vmatpush2.bf16.msra.mxu0 0
        %3178 = vmatprep.subr.bf16.mxu0 0
        %3179 = vmatpush2.bf16.msra.mxu0 0
        %3180 = vmatprep.mubr.bf16.mxu0 0
        %3181 = vmatmul.mubr.bf16.gmra.mxu0 %v3140
        %v3182 = vpop.f32.mrf.mxu0
        %v3183 = vadd.f32 0.0, %v3182
        %v3184 = vpop.f32.mrf.mxu0
        %v3185 = vpop.f32.mrf.mxu0
        %v3186 = vadd.f32 0.0, %v3185
        %v3187 = vpop.f32.mrf.mxu0
        %3188 = vmatprep.mubr.bf16.mxu0 0
        %3189 = vmatmul.mubr.bf16.gmra.mxu0 %v3141
        %v3190 = vpop.f32.mrf.mxu0
        %v3191 = vadd.f32 0.0, %v3190
        %v3192 = vpop.f32.mrf.mxu0
        %v3193 = vpop.f32.mrf.mxu0
        %v3194 = vadd.f32 0.0, %v3193
        %v3195 = vpop.f32.mrf.mxu0
        %3196 = vmatprep.mubr.bf16.mxu0 0
        %3197 = vmatmul.mubr.bf16.gmra.mxu0 %v3142
        %v3198 = vpop.f32.mrf.mxu0
        %v3199 = vadd.f32 0.0, %v3198
        %v3200 = vpop.f32.mrf.mxu0
        %v3201 = vpop.f32.mrf.mxu0
        %v3202 = vadd.f32 0.0, %v3201
        %v3203 = vpop.f32.mrf.mxu0
        %3204 = vmatprep.mubr.bf16.mxu0 0
        %3205 = vmatmul.mubr.bf16.gmra.mxu0 %v3143
        %v3206 = vpop.f32.mrf.mxu0
        %v3207 = vadd.f32 0.0, %v3206
        %v3208 = vpop.f32.mrf.mxu0
        %v3209 = vpop.f32.mrf.mxu0
        %v3210 = vadd.f32 0.0, %v3209
        %v3211 = vpop.f32.mrf.mxu0
        %3212 = vmatprep.mubr.bf16.mxu0 0
        %3213 = vmatmul.mubr.bf16.gmra.mxu0 %v3144
        %v3214 = vpop.f32.mrf.mxu0
        %v3215 = vadd.f32 0.0, %v3214
        %v3216 = vpop.f32.mrf.mxu0
        %v3217 = vpop.f32.mrf.mxu0
        %v3218 = vadd.f32 0.0, %v3217
        %v3219 = vpop.f32.mrf.mxu0
        %3220 = vmatprep.mubr.bf16.mxu0 0
        %3221 = vmatmul.mubr.bf16.gmra.mxu0 %v3145
        %v3222 = vpop.f32.mrf.mxu0
        %v3223 = vadd.f32 0.0, %v3222
        %v3224 = vpop.f32.mrf.mxu0
        %v3225 = vpop.f32.mrf.mxu0
        %v3226 = vadd.f32 0.0, %v3225
        %v3227 = vpop.f32.mrf.mxu0
        %3228 = vmatprep.mubr.bf16.mxu0 0
        %3229 = vmatmul.mubr.bf16.gmra.mxu0 %v3146
        %v3230 = vpop.f32.mrf.mxu0
        %v3231 = vadd.f32 0.0, %v3230
        %v3232 = vpop.f32.mrf.mxu0
        %v3233 = vpop.f32.mrf.mxu0
        %v3234 = vadd.f32 0.0, %v3233
        %v3235 = vpop.f32.mrf.mxu0
        %3236 = vmatprep.mubr.bf16.mxu0 0
        %3237 = vmatmul.mubr.bf16.gmra.mxu0 %v3147
        %v3238 = vpop.f32.mrf.mxu0
        %v3239 = vadd.f32 0.0, %v3238
        %v3240 = vpop.f32.mrf.mxu0
        %v3241 = vpop.f32.mrf.mxu0
        %v3242 = vadd.f32 0.0, %v3241
        %v3243 = vpop.f32.mrf.mxu0
        %3244 = vdwg.mxu0
        %v3245 = vpack.c.bf16 %v1915, %v1911
        %v3246 = vpack.c.bf16 %v1925, %v1921
        %v3247 = vpack.c.bf16 %v1935, %v1931
        %v3248 = vpack.c.bf16 %v1945, %v1941
        %v3249 = vpack.c.bf16 %v1955, %v1951
        %v3250 = vpack.c.bf16 %v1965, %v1961
        %v3251 = vpack.c.bf16 %v1975, %v1971
        %v3252 = vpack.c.bf16 %v1985, %v1981
        %v3253 = vpack.c.bf16 %v2141, %v2137
        %v3254 = vpack.c.bf16 %v2151, %v2147
        %v3255 = vpack.c.bf16 %v2161, %v2157
        %v3256 = vpack.c.bf16 %v2171, %v2167
        %v3257 = vpack.c.bf16 %v2181, %v2177
        %v3258 = vpack.c.bf16 %v2191, %v2187
        %v3259 = vpack.c.bf16 %v2201, %v2197
        %v3260 = vpack.c.bf16 %v2211, %v2207
        %v3261 = vpack.c.bf16 %v2367, %v2363
        %v3262 = vpack.c.bf16 %v2377, %v2373
        %v3263 = vpack.c.bf16 %v2387, %v2383
        %v3264 = vpack.c.bf16 %v2397, %v2393
        %v3265 = vpack.c.bf16 %v2407, %v2403
        %v3266 = vpack.c.bf16 %v2417, %v2413
        %v3267 = vpack.c.bf16 %v2427, %v2423
        %v3268 = vpack.c.bf16 %v2437, %v2433
        %3269 = vmatprep.subr.bf16.mxu0 0
        %3270 = vmatpush1.bf16.xpose.msra.mxu0 %v3260
        %3271 = vmatprep.subr.bf16.mxu0 0
        %3272 = vmatpush1.bf16.xpose.msra.mxu0 %v3259
        %3273 = vmatprep.subr.bf16.mxu0 0
        %3274 = vmatpush1.bf16.xpose.msra.mxu0 %v3258
        %3275 = vmatprep.subr.bf16.mxu0 0
        %3276 = vmatpush1.bf16.xpose.msra.mxu0 %v3257
        %3277 = vmatprep.subr.bf16.mxu0 0
        %3278 = vmatpush1.bf16.xpose.msra.mxu0 %v3256
        %3279 = vmatprep.subr.bf16.mxu0 0
        %3280 = vmatpush1.bf16.xpose.msra.mxu0 %v3255
        %3281 = vmatprep.subr.bf16.mxu0 0
        %3282 = vmatpush1.bf16.xpose.msra.mxu0 %v3254
        %3283 = vmatprep.subr.bf16.mxu0 0
        %3284 = vmatpush1.bf16.xpose.msra.mxu0 %v3253
        %3285 = vmatprep.subr.bf16.mxu0 0
        %3286 = vmatpush2.bf16.xpose.msra.mxu0 0
        %3287 = vmatprep.subr.bf16.mxu0 0
        %3288 = vmatpush2.bf16.xpose.msra.mxu0 0
        %3289 = vmatprep.subr.bf16.mxu0 0
        %3290 = vmatpush2.bf16.xpose.msra.mxu0 0
        %3291 = vmatprep.subr.bf16.mxu0 0
        %3292 = vmatpush2.bf16.xpose.msra.mxu0 0
        %3293 = vmatprep.subr.bf16.mxu0 0
        %3294 = vmatpush2.bf16.xpose.msra.mxu0 0
        %3295 = vmatprep.subr.bf16.mxu0 0
        %3296 = vmatpush2.bf16.xpose.msra.mxu0 0
        %3297 = vmatprep.subr.bf16.mxu0 0
        %3298 = vmatpush2.bf16.xpose.msra.mxu0 0
        %3299 = vmatprep.subr.bf16.mxu0 0
        %3300 = vmatpush2.bf16.xpose.msra.mxu0 0
        %3301 = vmatprep.mubr.bf16.mxu0 0
        %3302 = vmatmul.mubr.bf16.gmra.mxu0 %v3245
        %v3303 = vpop.f32.mrf.mxu0
        %v3304 = vadd.f32 0.0, %v3303
        %v3305 = vpop.f32.mrf.mxu0
        %v3306 = vpop.f32.mrf.mxu0
        %v3307 = vadd.f32 0.0, %v3306
        %v3308 = vpop.f32.mrf.mxu0
        %3309 = vmatprep.mubr.bf16.mxu0 0
        %3310 = vmatmul.mubr.bf16.gmra.mxu0 %v3246
        %v3311 = vpop.f32.mrf.mxu0
        %v3312 = vadd.f32 0.0, %v3311
        %v3313 = vpop.f32.mrf.mxu0
        %v3314 = vpop.f32.mrf.mxu0
        %v3315 = vadd.f32 0.0, %v3314
        %v3316 = vpop.f32.mrf.mxu0
        %3317 = vmatprep.mubr.bf16.mxu0 0
        %3318 = vmatmul.mubr.bf16.gmra.mxu0 %v3247
        %v3319 = vpop.f32.mrf.mxu0
        %v3320 = vadd.f32 0.0, %v3319
        %v3321 = vpop.f32.mrf.mxu0
        %v3322 = vpop.f32.mrf.mxu0
        %v3323 = vadd.f32 0.0, %v3322
        %v3324 = vpop.f32.mrf.mxu0
        %3325 = vmatprep.mubr.bf16.mxu0 0
        %3326 = vmatmul.mubr.bf16.gmra.mxu0 %v3248
        %v3327 = vpop.f32.mrf.mxu0
        %v3328 = vadd.f32 0.0, %v3327
        %v3329 = vpop.f32.mrf.mxu0
        %v3330 = vpop.f32.mrf.mxu0
        %v3331 = vadd.f32 0.0, %v3330
        %v3332 = vpop.f32.mrf.mxu0
        %3333 = vmatprep.mubr.bf16.mxu0 0
        %3334 = vmatmul.mubr.bf16.gmra.mxu0 %v3249
        %v3335 = vpop.f32.mrf.mxu0
        %v3336 = vadd.f32 0.0, %v3335
        %v3337 = vpop.f32.mrf.mxu0
        %v3338 = vpop.f32.mrf.mxu0
        %v3339 = vadd.f32 0.0, %v3338
        %v3340 = vpop.f32.mrf.mxu0
        %3341 = vmatprep.mubr.bf16.mxu0 0
        %3342 = vmatmul.mubr.bf16.gmra.mxu0 %v3250
        %v3343 = vpop.f32.mrf.mxu0
        %v3344 = vadd.f32 0.0, %v3343
        %v3345 = vpop.f32.mrf.mxu0
        %v3346 = vpop.f32.mrf.mxu0
        %v3347 = vadd.f32 0.0, %v3346
        %v3348 = vpop.f32.mrf.mxu0
        %3349 = vmatprep.mubr.bf16.mxu0 0
        %3350 = vmatmul.mubr.bf16.gmra.mxu0 %v3251
        %v3351 = vpop.f32.mrf.mxu0
        %v3352 = vadd.f32 0.0, %v3351
        %v3353 = vpop.f32.mrf.mxu0
        %v3354 = vpop.f32.mrf.mxu0
        %v3355 = vadd.f32 0.0, %v3354
        %v3356 = vpop.f32.mrf.mxu0
        %3357 = vmatprep.mubr.bf16.mxu0 0
        %3358 = vmatmul.mubr.bf16.gmra.mxu0 %v3252
        %v3359 = vpop.f32.mrf.mxu0
        %v3360 = vadd.f32 0.0, %v3359
        %v3361 = vpop.f32.mrf.mxu0
        %v3362 = vpop.f32.mrf.mxu0
        %v3363 = vadd.f32 0.0, %v3362
        %v3364 = vpop.f32.mrf.mxu0
        %3365 = vdwg.mxu0
        %v3366 = vmul.f32 %v3304, 0.088388346
        %v3367 = vmul.f32 %v3307, 0.088388346
        %v3368 = vmul.f32 %v3312, 0.088388346
        %v3369 = vmul.f32 %v3315, 0.088388346
        %v3370 = vmul.f32 %v3320, 0.088388346
        %v3371 = vmul.f32 %v3323, 0.088388346
        %v3372 = vmul.f32 %v3328, 0.088388346
        %v3373 = vmul.f32 %v3331, 0.088388346
        %v3374 = vmul.f32 %v3336, 0.088388346
        %v3375 = vmul.f32 %v3339, 0.088388346
        %v3376 = vmul.f32 %v3344, 0.088388346
        %v3377 = vmul.f32 %v3347, 0.088388346
        %v3378 = vmul.f32 %v3352, 0.088388346
        %v3379 = vmul.f32 %v3355, 0.088388346
        %v3380 = vmul.f32 %v3360, 0.088388346
        %v3381 = vmul.f32 %v3363, 0.088388346
        %v3382 = vadd.f32 %v3366, %v940
        %v3383 = vadd.f32 %v3367, %v941
        %v3384 = vadd.f32 %v3368, %v942
        %v3385 = vadd.f32 %v3369, %v943
        %v3386 = vadd.f32 %v3370, %v944
        %v3387 = vadd.f32 %v3371, %v945
        %v3388 = vadd.f32 %v3372, %v946
        %v3389 = vadd.f32 %v3373, %v947
        %v3390 = vadd.f32 %v3374, %v948
        %v3391 = vadd.f32 %v3375, %v949
        %v3392 = vadd.f32 %v3376, %v950
        %v3393 = vadd.f32 %v3377, %v951
        %v3394 = vadd.f32 %v3378, %v952
        %v3395 = vadd.f32 %v3379, %v953
        %v3396 = vadd.f32 %v3380, %v954
        %v3397 = vadd.f32 %v3381, %v955
        %3398 = vmax.xlane.f32.xlu0 %v3382
        %v3399 = vpop.xlane.xlu0 %3398
        %3400 = vmax.xlane.f32.xlu0 %v3383
        %v3401 = vpop.xlane.xlu0 %3400
        %3402 = vmax.xlane.f32.xlu0 %v3384
        %v3403 = vpop.xlane.xlu0 %3402
        %3404 = vmax.xlane.f32.xlu0 %v3385
        %v3405 = vpop.xlane.xlu0 %3404
        %3406 = vmax.xlane.f32.xlu0 %v3386
        %v3407 = vpop.xlane.xlu0 %3406
        %3408 = vmax.xlane.f32.xlu0 %v3387
        %v3409 = vpop.xlane.xlu0 %3408
        %3410 = vmax.xlane.f32.xlu0 %v3388
        %v3411 = vpop.xlane.xlu0 %3410
        %3412 = vmax.xlane.f32.xlu0 %v3389
        %v3413 = vpop.xlane.xlu0 %3412
        %3414 = vmax.xlane.f32.xlu0 %v3390
        %v3415 = vpop.xlane.xlu0 %3414
        %3416 = vmax.xlane.f32.xlu0 %v3391
        %v3417 = vpop.xlane.xlu0 %3416
        %3418 = vmax.xlane.f32.xlu0 %v3392
        %v3419 = vpop.xlane.xlu0 %3418
        %3420 = vmax.xlane.f32.xlu0 %v3393
        %v3421 = vpop.xlane.xlu0 %3420
        %3422 = vmax.xlane.f32.xlu0 %v3394
        %v3423 = vpop.xlane.xlu0 %3422
        %3424 = vmax.xlane.f32.xlu0 %v3395
        %v3425 = vpop.xlane.xlu0 %3424
        %3426 = vmax.xlane.f32.xlu0 %v3396
        %v3427 = vpop.xlane.xlu0 %3426
        %3428 = vmax.xlane.f32.xlu0 %v3397
        %v3429 = vpop.xlane.xlu0 %3428
        %v3430 = vsub.f32 %v3382, %v3399
        %v3431 = vsub.f32 %v3383, %v3401
        %v3432 = vsub.f32 %v3384, %v3403
        %v3433 = vsub.f32 %v3385, %v3405
        %v3434 = vsub.f32 %v3386, %v3407
        %v3435 = vsub.f32 %v3387, %v3409
        %v3436 = vsub.f32 %v3388, %v3411
        %v3437 = vsub.f32 %v3389, %v3413
        %v3438 = vsub.f32 %v3390, %v3415
        %v3439 = vsub.f32 %v3391, %v3417
        %v3440 = vsub.f32 %v3392, %v3419
        %v3441 = vsub.f32 %v3393, %v3421
        %v3442 = vsub.f32 %v3394, %v3423
        %v3443 = vsub.f32 %v3395, %v3425
        %v3444 = vsub.f32 %v3396, %v3427
        %v3445 = vsub.f32 %v3397, %v3429
        %v3446 = vmul.f32 %v3430, 1.442695
        %v3447 = vpow.pop %v3446
        %v3448 = vmul.f32 %v3431, 1.442695
        %v3449 = vpow.pop %v3448
        %v3450 = vmul.f32 %v3432, 1.442695
        %v3451 = vpow.pop %v3450
        %v3452 = vmul.f32 %v3433, 1.442695
        %v3453 = vpow.pop %v3452
        %v3454 = vmul.f32 %v3434, 1.442695
        %v3455 = vpow.pop %v3454
        %v3456 = vmul.f32 %v3435, 1.442695
        %v3457 = vpow.pop %v3456
        %v3458 = vmul.f32 %v3436, 1.442695
        %v3459 = vpow.pop %v3458
        %v3460 = vmul.f32 %v3437, 1.442695
        %v3461 = vpow.pop %v3460
        %v3462 = vmul.f32 %v3438, 1.442695
        %v3463 = vpow.pop %v3462
        %v3464 = vmul.f32 %v3439, 1.442695
        %v3465 = vpow.pop %v3464
        %v3466 = vmul.f32 %v3440, 1.442695
        %v3467 = vpow.pop %v3466
        %v3468 = vmul.f32 %v3441, 1.442695
        %v3469 = vpow.pop %v3468
        %v3470 = vmul.f32 %v3442, 1.442695
        %v3471 = vpow.pop %v3470
        %v3472 = vmul.f32 %v3443, 1.442695
        %v3473 = vpow.pop %v3472
        %v3474 = vmul.f32 %v3444, 1.442695
        %v3475 = vpow.pop %v3474
        %v3476 = vmul.f32 %v3445, 1.442695
        %v3477 = vpow.pop %v3476
        %3478 = vadd.xlane.f32.xlu0 %v3447
        %v3479 = vpop.xlane.xlu0 %3478
        %3480 = vadd.xlane.f32.xlu0 %v3449
        %v3481 = vpop.xlane.xlu0 %3480
        %3482 = vadd.xlane.f32.xlu0 %v3451
        %v3483 = vpop.xlane.xlu0 %3482
        %3484 = vadd.xlane.f32.xlu0 %v3453
        %v3485 = vpop.xlane.xlu0 %3484
        %3486 = vadd.xlane.f32.xlu0 %v3455
        %v3487 = vpop.xlane.xlu0 %3486
        %3488 = vadd.xlane.f32.xlu0 %v3457
        %v3489 = vpop.xlane.xlu0 %3488
        %3490 = vadd.xlane.f32.xlu0 %v3459
        %v3491 = vpop.xlane.xlu0 %3490
        %3492 = vadd.xlane.f32.xlu0 %v3461
        %v3493 = vpop.xlane.xlu0 %3492
        %3494 = vadd.xlane.f32.xlu0 %v3463
        %v3495 = vpop.xlane.xlu0 %3494
        %3496 = vadd.xlane.f32.xlu0 %v3465
        %v3497 = vpop.xlane.xlu0 %3496
        %3498 = vadd.xlane.f32.xlu0 %v3467
        %v3499 = vpop.xlane.xlu0 %3498
        %3500 = vadd.xlane.f32.xlu0 %v3469
        %v3501 = vpop.xlane.xlu0 %3500
        %3502 = vadd.xlane.f32.xlu0 %v3471
        %v3503 = vpop.xlane.xlu0 %3502
        %3504 = vadd.xlane.f32.xlu0 %v3473
        %v3505 = vpop.xlane.xlu0 %3504
        %3506 = vadd.xlane.f32.xlu0 %v3475
        %v3507 = vpop.xlane.xlu0 %3506
        %3508 = vadd.xlane.f32.xlu0 %v3477
        %v3509 = vpop.xlane.xlu0 %3508
        %v3510 = vrcp.pop %v3479
        %v3511 = vrcp.pop %v3481
        %v3512 = vrcp.pop %v3483
        %v3513 = vrcp.pop %v3485
        %v3514 = vrcp.pop %v3487
        %v3515 = vrcp.pop %v3489
        %v3516 = vrcp.pop %v3491
        %v3517 = vrcp.pop %v3493
        %v3518 = vrcp.pop %v3495
        %v3519 = vrcp.pop %v3497
        %v3520 = vrcp.pop %v3499
        %v3521 = vrcp.pop %v3501
        %v3522 = vrcp.pop %v3503
        %v3523 = vrcp.pop %v3505
        %v3524 = vrcp.pop %v3507
        %v3525 = vrcp.pop %v3509
        %v3526 = vmul.f32 %v3447, %v3510
        %v3527 = vmul.f32 %v3449, %v3511
        %v3528 = vmul.f32 %v3451, %v3512
        %v3529 = vmul.f32 %v3453, %v3513
        %v3530 = vmul.f32 %v3455, %v3514
        %v3531 = vmul.f32 %v3457, %v3515
        %v3532 = vmul.f32 %v3459, %v3516
        %v3533 = vmul.f32 %v3461, %v3517
        %v3534 = vmul.f32 %v3463, %v3518
        %v3535 = vmul.f32 %v3465, %v3519
        %v3536 = vmul.f32 %v3467, %v3520
        %v3537 = vmul.f32 %v3469, %v3521
        %v3538 = vmul.f32 %v3471, %v3522
        %v3539 = vmul.f32 %v3473, %v3523
        %v3540 = vmul.f32 %v3475, %v3524
        %v3541 = vmul.f32 %v3477, %v3525
        %v3542 = vpack.c.bf16 %v3527, %v3526
        %v3543 = vpack.c.bf16 %v3529, %v3528
        %v3544 = vpack.c.bf16 %v3531, %v3530
        %v3545 = vpack.c.bf16 %v3533, %v3532
        %v3546 = vpack.c.bf16 %v3535, %v3534
        %v3547 = vpack.c.bf16 %v3537, %v3536
        %v3548 = vpack.c.bf16 %v3539, %v3538
        %v3549 = vpack.c.bf16 %v3541, %v3540
        %3550 = vmatprep.subr.bf16.mxu0 0
        %3551 = vmatpush1.bf16.msra.mxu0 %v3268
        %3552 = vmatprep.subr.bf16.mxu0 0
        %3553 = vmatpush1.bf16.msra.mxu0 %v3267
        %3554 = vmatprep.subr.bf16.mxu0 0
        %3555 = vmatpush1.bf16.msra.mxu0 %v3266
        %3556 = vmatprep.subr.bf16.mxu0 0
        %3557 = vmatpush1.bf16.msra.mxu0 %v3265
        %3558 = vmatprep.subr.bf16.mxu0 0
        %3559 = vmatpush1.bf16.msra.mxu0 %v3264
        %3560 = vmatprep.subr.bf16.mxu0 0
        %3561 = vmatpush1.bf16.msra.mxu0 %v3263
        %3562 = vmatprep.subr.bf16.mxu0 0
        %3563 = vmatpush1.bf16.msra.mxu0 %v3262
        %3564 = vmatprep.subr.bf16.mxu0 0
        %3565 = vmatpush1.bf16.msra.mxu0 %v3261
        %3566 = vmatprep.subr.bf16.mxu0 0
        %3567 = vmatpush2.bf16.msra.mxu0 0
        %3568 = vmatprep.subr.bf16.mxu0 0
        %3569 = vmatpush2.bf16.msra.mxu0 0
        %3570 = vmatprep.subr.bf16.mxu0 0
        %3571 = vmatpush2.bf16.msra.mxu0 0
        %3572 = vmatprep.subr.bf16.mxu0 0
        %3573 = vmatpush2.bf16.msra.mxu0 0
        %3574 = vmatprep.subr.bf16.mxu0 0
        %3575 = vmatpush2.bf16.msra.mxu0 0
        %3576 = vmatprep.subr.bf16.mxu0 0
        %3577 = vmatpush2.bf16.msra.mxu0 0
        %3578 = vmatprep.subr.bf16.mxu0 0
        %3579 = vmatpush2.bf16.msra.mxu0 0
        %3580 = vmatprep.subr.bf16.mxu0 0
        %3581 = vmatpush2.bf16.msra.mxu0 0
        %3582 = vmatprep.mubr.bf16.mxu0 0
        %3583 = vmatmul.mubr.bf16.gmra.mxu0 %v3542
        %v3584 = vpop.f32.mrf.mxu0
        %v3585 = vadd.f32 0.0, %v3584
        %v3586 = vpop.f32.mrf.mxu0
        %v3587 = vpop.f32.mrf.mxu0
        %v3588 = vadd.f32 0.0, %v3587
        %v3589 = vpop.f32.mrf.mxu0
        %3590 = vmatprep.mubr.bf16.mxu0 0
        %3591 = vmatmul.mubr.bf16.gmra.mxu0 %v3543
        %v3592 = vpop.f32.mrf.mxu0
        %v3593 = vadd.f32 0.0, %v3592
        %v3594 = vpop.f32.mrf.mxu0
        %v3595 = vpop.f32.mrf.mxu0
        %v3596 = vadd.f32 0.0, %v3595
        %v3597 = vpop.f32.mrf.mxu0
        %3598 = vmatprep.mubr.bf16.mxu0 0
        %3599 = vmatmul.mubr.bf16.gmra.mxu0 %v3544
        %v3600 = vpop.f32.mrf.mxu0
        %v3601 = vadd.f32 0.0, %v3600
        %v3602 = vpop.f32.mrf.mxu0
        %v3603 = vpop.f32.mrf.mxu0
        %v3604 = vadd.f32 0.0, %v3603
        %v3605 = vpop.f32.mrf.mxu0
        %3606 = vmatprep.mubr.bf16.mxu0 0
        %3607 = vmatmul.mubr.bf16.gmra.mxu0 %v3545
        %v3608 = vpop.f32.mrf.mxu0
        %v3609 = vadd.f32 0.0, %v3608
        %v3610 = vpop.f32.mrf.mxu0
        %v3611 = vpop.f32.mrf.mxu0
        %v3612 = vadd.f32 0.0, %v3611
        %v3613 = vpop.f32.mrf.mxu0
        %3614 = vmatprep.mubr.bf16.mxu0 0
        %3615 = vmatmul.mubr.bf16.gmra.mxu0 %v3546
        %v3616 = vpop.f32.mrf.mxu0
        %v3617 = vadd.f32 0.0, %v3616
        %v3618 = vpop.f32.mrf.mxu0
        %v3619 = vpop.f32.mrf.mxu0
        %v3620 = vadd.f32 0.0, %v3619
        %v3621 = vpop.f32.mrf.mxu0
        %3622 = vmatprep.mubr.bf16.mxu0 0
        %3623 = vmatmul.mubr.bf16.gmra.mxu0 %v3547
        %v3624 = vpop.f32.mrf.mxu0
        %v3625 = vadd.f32 0.0, %v3624
        %v3626 = vpop.f32.mrf.mxu0
        %v3627 = vpop.f32.mrf.mxu0
        %v3628 = vadd.f32 0.0, %v3627
        %v3629 = vpop.f32.mrf.mxu0
        %3630 = vmatprep.mubr.bf16.mxu0 0
        %3631 = vmatmul.mubr.bf16.gmra.mxu0 %v3548
        %v3632 = vpop.f32.mrf.mxu0
        %v3633 = vadd.f32 0.0, %v3632
        %v3634 = vpop.f32.mrf.mxu0
        %v3635 = vpop.f32.mrf.mxu0
        %v3636 = vadd.f32 0.0, %v3635
        %v3637 = vpop.f32.mrf.mxu0
        %3638 = vmatprep.mubr.bf16.mxu0 0
        %3639 = vmatmul.mubr.bf16.gmra.mxu0 %v3549
        %v3640 = vpop.f32.mrf.mxu0
        %v3641 = vadd.f32 0.0, %v3640
        %v3642 = vpop.f32.mrf.mxu0
        %v3643 = vpop.f32.mrf.mxu0
        %v3644 = vadd.f32 0.0, %v3643
        %v3645 = vpop.f32.mrf.mxu0
        %3646 = vdwg.mxu0
        %v3647 = vpack.c.bf16 %v1917, %v1913
        %v3648 = vpack.c.bf16 %v1927, %v1923
        %v3649 = vpack.c.bf16 %v1937, %v1933
        %v3650 = vpack.c.bf16 %v1947, %v1943
        %v3651 = vpack.c.bf16 %v1957, %v1953
        %v3652 = vpack.c.bf16 %v1967, %v1963
        %v3653 = vpack.c.bf16 %v1977, %v1973
        %v3654 = vpack.c.bf16 %v1987, %v1983
        %v3655 = vpack.c.bf16 %v2143, %v2139
        %v3656 = vpack.c.bf16 %v2153, %v2149
        %v3657 = vpack.c.bf16 %v2163, %v2159
        %v3658 = vpack.c.bf16 %v2173, %v2169
        %v3659 = vpack.c.bf16 %v2183, %v2179
        %v3660 = vpack.c.bf16 %v2193, %v2189
        %v3661 = vpack.c.bf16 %v2203, %v2199
        %v3662 = vpack.c.bf16 %v2213, %v2209
        %v3663 = vpack.c.bf16 %v2369, %v2365
        %v3664 = vpack.c.bf16 %v2379, %v2375
        %v3665 = vpack.c.bf16 %v2389, %v2385
        %v3666 = vpack.c.bf16 %v2399, %v2395
        %v3667 = vpack.c.bf16 %v2409, %v2405
        %v3668 = vpack.c.bf16 %v2419, %v2415
        %v3669 = vpack.c.bf16 %v2429, %v2425
        %v3670 = vpack.c.bf16 %v2439, %v2435
        %3671 = vmatprep.subr.bf16.mxu0 0
        %3672 = vmatpush1.bf16.xpose.msra.mxu0 %v3662
        %3673 = vmatprep.subr.bf16.mxu0 0
        %3674 = vmatpush1.bf16.xpose.msra.mxu0 %v3661
        %3675 = vmatprep.subr.bf16.mxu0 0
        %3676 = vmatpush1.bf16.xpose.msra.mxu0 %v3660
        %3677 = vmatprep.subr.bf16.mxu0 0
        %3678 = vmatpush1.bf16.xpose.msra.mxu0 %v3659
        %3679 = vmatprep.subr.bf16.mxu0 0
        %3680 = vmatpush1.bf16.xpose.msra.mxu0 %v3658
        %3681 = vmatprep.subr.bf16.mxu0 0
        %3682 = vmatpush1.bf16.xpose.msra.mxu0 %v3657
        %3683 = vmatprep.subr.bf16.mxu0 0
        %3684 = vmatpush1.bf16.xpose.msra.mxu0 %v3656
        %3685 = vmatprep.subr.bf16.mxu0 0
        %3686 = vmatpush1.bf16.xpose.msra.mxu0 %v3655
        %3687 = vmatprep.subr.bf16.mxu0 0
        %3688 = vmatpush2.bf16.xpose.msra.mxu0 0
        %3689 = vmatprep.subr.bf16.mxu0 0
        %3690 = vmatpush2.bf16.xpose.msra.mxu0 0
        %3691 = vmatprep.subr.bf16.mxu0 0
        %3692 = vmatpush2.bf16.xpose.msra.mxu0 0
        %3693 = vmatprep.subr.bf16.mxu0 0
        %3694 = vmatpush2.bf16.xpose.msra.mxu0 0
        %3695 = vmatprep.subr.bf16.mxu0 0
        %3696 = vmatpush2.bf16.xpose.msra.mxu0 0
        %3697 = vmatprep.subr.bf16.mxu0 0
        %3698 = vmatpush2.bf16.xpose.msra.mxu0 0
        %3699 = vmatprep.subr.bf16.mxu0 0
        %3700 = vmatpush2.bf16.xpose.msra.mxu0 0
        %3701 = vmatprep.subr.bf16.mxu0 0
        %3702 = vmatpush2.bf16.xpose.msra.mxu0 0
        %3703 = vmatprep.mubr.bf16.mxu0 0
        %3704 = vmatmul.mubr.bf16.gmra.mxu0 %v3647
        %v3705 = vpop.f32.mrf.mxu0
        %v3706 = vadd.f32 0.0, %v3705
        %v3707 = vpop.f32.mrf.mxu0
        %v3708 = vpop.f32.mrf.mxu0
        %v3709 = vadd.f32 0.0, %v3708
        %v3710 = vpop.f32.mrf.mxu0
        %3711 = vmatprep.mubr.bf16.mxu0 0
        %3712 = vmatmul.mubr.bf16.gmra.mxu0 %v3648
        %v3713 = vpop.f32.mrf.mxu0
        %v3714 = vadd.f32 0.0, %v3713
        %v3715 = vpop.f32.mrf.mxu0
        %v3716 = vpop.f32.mrf.mxu0
        %v3717 = vadd.f32 0.0, %v3716
        %v3718 = vpop.f32.mrf.mxu0
        %3719 = vmatprep.mubr.bf16.mxu0 0
        %3720 = vmatmul.mubr.bf16.gmra.mxu0 %v3649
        %v3721 = vpop.f32.mrf.mxu0
        %v3722 = vadd.f32 0.0, %v3721
        %v3723 = vpop.f32.mrf.mxu0
        %v3724 = vpop.f32.mrf.mxu0
        %v3725 = vadd.f32 0.0, %v3724
        %v3726 = vpop.f32.mrf.mxu0
        %3727 = vmatprep.mubr.bf16.mxu0 0
        %3728 = vmatmul.mubr.bf16.gmra.mxu0 %v3650
        %v3729 = vpop.f32.mrf.mxu0
        %v3730 = vadd.f32 0.0, %v3729
        %v3731 = vpop.f32.mrf.mxu0
        %v3732 = vpop.f32.mrf.mxu0
        %v3733 = vadd.f32 0.0, %v3732
        %v3734 = vpop.f32.mrf.mxu0
        %3735 = vmatprep.mubr.bf16.mxu0 0
        %3736 = vmatmul.mubr.bf16.gmra.mxu0 %v3651
        %v3737 = vpop.f32.mrf.mxu0
        %v3738 = vadd.f32 0.0, %v3737
        %v3739 = vpop.f32.mrf.mxu0
        %v3740 = vpop.f32.mrf.mxu0
        %v3741 = vadd.f32 0.0, %v3740
        %v3742 = vpop.f32.mrf.mxu0
        %3743 = vmatprep.mubr.bf16.mxu0 0
        %3744 = vmatmul.mubr.bf16.gmra.mxu0 %v3652
        %v3745 = vpop.f32.mrf.mxu0
        %v3746 = vadd.f32 0.0, %v3745
        %v3747 = vpop.f32.mrf.mxu0
        %v3748 = vpop.f32.mrf.mxu0
        %v3749 = vadd.f32 0.0, %v3748
        %v3750 = vpop.f32.mrf.mxu0
        %3751 = vmatprep.mubr.bf16.mxu0 0
        %3752 = vmatmul.mubr.bf16.gmra.mxu0 %v3653
        %v3753 = vpop.f32.mrf.mxu0
        %v3754 = vadd.f32 0.0, %v3753
        %v3755 = vpop.f32.mrf.mxu0
        %v3756 = vpop.f32.mrf.mxu0
        %v3757 = vadd.f32 0.0, %v3756
        %v3758 = vpop.f32.mrf.mxu0
        %3759 = vmatprep.mubr.bf16.mxu0 0
        %3760 = vmatmul.mubr.bf16.gmra.mxu0 %v3654
        %v3761 = vpop.f32.mrf.mxu0
        %v3762 = vadd.f32 0.0, %v3761
        %v3763 = vpop.f32.mrf.mxu0
        %v3764 = vpop.f32.mrf.mxu0
        %v3765 = vadd.f32 0.0, %v3764
        %v3766 = vpop.f32.mrf.mxu0
        %3767 = vdwg.mxu0
        %v3768 = vmul.f32 %v3706, 0.088388346
        %v3769 = vmul.f32 %v3709, 0.088388346
        %v3770 = vmul.f32 %v3714, 0.088388346
        %v3771 = vmul.f32 %v3717, 0.088388346
        %v3772 = vmul.f32 %v3722, 0.088388346
        %v3773 = vmul.f32 %v3725, 0.088388346
        %v3774 = vmul.f32 %v3730, 0.088388346
        %v3775 = vmul.f32 %v3733, 0.088388346
        %v3776 = vmul.f32 %v3738, 0.088388346
        %v3777 = vmul.f32 %v3741, 0.088388346
        %v3778 = vmul.f32 %v3746, 0.088388346
        %v3779 = vmul.f32 %v3749, 0.088388346
        %v3780 = vmul.f32 %v3754, 0.088388346
        %v3781 = vmul.f32 %v3757, 0.088388346
        %v3782 = vmul.f32 %v3762, 0.088388346
        %v3783 = vmul.f32 %v3765, 0.088388346
        %v3784 = vadd.f32 %v3768, %v940
        %v3785 = vadd.f32 %v3769, %v941
        %v3786 = vadd.f32 %v3770, %v942
        %v3787 = vadd.f32 %v3771, %v943
        %v3788 = vadd.f32 %v3772, %v944
        %v3789 = vadd.f32 %v3773, %v945
        %v3790 = vadd.f32 %v3774, %v946
        %v3791 = vadd.f32 %v3775, %v947
        %v3792 = vadd.f32 %v3776, %v948
        %v3793 = vadd.f32 %v3777, %v949
        %v3794 = vadd.f32 %v3778, %v950
        %v3795 = vadd.f32 %v3779, %v951
        %v3796 = vadd.f32 %v3780, %v952
        %v3797 = vadd.f32 %v3781, %v953
        %v3798 = vadd.f32 %v3782, %v954
        %v3799 = vadd.f32 %v3783, %v955
        %3800 = vmax.xlane.f32.xlu0 %v3784
        %v3801 = vpop.xlane.xlu0 %3800
        %3802 = vmax.xlane.f32.xlu0 %v3785
        %v3803 = vpop.xlane.xlu0 %3802
        %3804 = vmax.xlane.f32.xlu0 %v3786
        %v3805 = vpop.xlane.xlu0 %3804
        %3806 = vmax.xlane.f32.xlu0 %v3787
        %v3807 = vpop.xlane.xlu0 %3806
        %3808 = vmax.xlane.f32.xlu0 %v3788
        %v3809 = vpop.xlane.xlu0 %3808
        %3810 = vmax.xlane.f32.xlu0 %v3789
        %v3811 = vpop.xlane.xlu0 %3810
        %3812 = vmax.xlane.f32.xlu0 %v3790
        %v3813 = vpop.xlane.xlu0 %3812
        %3814 = vmax.xlane.f32.xlu0 %v3791
        %v3815 = vpop.xlane.xlu0 %3814
        %3816 = vmax.xlane.f32.xlu0 %v3792
        %v3817 = vpop.xlane.xlu0 %3816
        %3818 = vmax.xlane.f32.xlu0 %v3793
        %v3819 = vpop.xlane.xlu0 %3818
        %3820 = vmax.xlane.f32.xlu0 %v3794
        %v3821 = vpop.xlane.xlu0 %3820
        %3822 = vmax.xlane.f32.xlu0 %v3795
        %v3823 = vpop.xlane.xlu0 %3822
        %3824 = vmax.xlane.f32.xlu0 %v3796
        %v3825 = vpop.xlane.xlu0 %3824
        %3826 = vmax.xlane.f32.xlu0 %v3797
        %v3827 = vpop.xlane.xlu0 %3826
        %3828 = vmax.xlane.f32.xlu0 %v3798
        %v3829 = vpop.xlane.xlu0 %3828
        %3830 = vmax.xlane.f32.xlu0 %v3799
        %v3831 = vpop.xlane.xlu0 %3830
        %v3832 = vsub.f32 %v3784, %v3801
        %v3833 = vsub.f32 %v3785, %v3803
        %v3834 = vsub.f32 %v3786, %v3805
        %v3835 = vsub.f32 %v3787, %v3807
        %v3836 = vsub.f32 %v3788, %v3809
        %v3837 = vsub.f32 %v3789, %v3811
        %v3838 = vsub.f32 %v3790, %v3813
        %v3839 = vsub.f32 %v3791, %v3815
        %v3840 = vsub.f32 %v3792, %v3817
        %v3841 = vsub.f32 %v3793, %v3819
        %v3842 = vsub.f32 %v3794, %v3821
        %v3843 = vsub.f32 %v3795, %v3823
        %v3844 = vsub.f32 %v3796, %v3825
        %v3845 = vsub.f32 %v3797, %v3827
        %v3846 = vsub.f32 %v3798, %v3829
        %v3847 = vsub.f32 %v3799, %v3831
        %v3848 = vmul.f32 %v3832, 1.442695
        %v3849 = vpow.pop %v3848
        %v3850 = vmul.f32 %v3833, 1.442695
        %v3851 = vpow.pop %v3850
        %v3852 = vmul.f32 %v3834, 1.442695
        %v3853 = vpow.pop %v3852
        %v3854 = vmul.f32 %v3835, 1.442695
        %v3855 = vpow.pop %v3854
        %v3856 = vmul.f32 %v3836, 1.442695
        %v3857 = vpow.pop %v3856
        %v3858 = vmul.f32 %v3837, 1.442695
        %v3859 = vpow.pop %v3858
        %v3860 = vmul.f32 %v3838, 1.442695
        %v3861 = vpow.pop %v3860
        %v3862 = vmul.f32 %v3839, 1.442695
        %v3863 = vpow.pop %v3862
        %v3864 = vmul.f32 %v3840, 1.442695
        %v3865 = vpow.pop %v3864
        %v3866 = vmul.f32 %v3841, 1.442695
        %v3867 = vpow.pop %v3866
        %v3868 = vmul.f32 %v3842, 1.442695
        %v3869 = vpow.pop %v3868
        %v3870 = vmul.f32 %v3843, 1.442695
        %v3871 = vpow.pop %v3870
        %v3872 = vmul.f32 %v3844, 1.442695
        %v3873 = vpow.pop %v3872
        %v3874 = vmul.f32 %v3845, 1.442695
        %v3875 = vpow.pop %v3874
        %v3876 = vmul.f32 %v3846, 1.442695
        %v3877 = vpow.pop %v3876
        %v3878 = vmul.f32 %v3847, 1.442695
        %v3879 = vpow.pop %v3878
        %3880 = vadd.xlane.f32.xlu0 %v3849
        %v3881 = vpop.xlane.xlu0 %3880
        %3882 = vadd.xlane.f32.xlu0 %v3851
        %v3883 = vpop.xlane.xlu0 %3882
        %3884 = vadd.xlane.f32.xlu0 %v3853
        %v3885 = vpop.xlane.xlu0 %3884
        %3886 = vadd.xlane.f32.xlu0 %v3855
        %v3887 = vpop.xlane.xlu0 %3886
        %3888 = vadd.xlane.f32.xlu0 %v3857
        %v3889 = vpop.xlane.xlu0 %3888
        %3890 = vadd.xlane.f32.xlu0 %v3859
        %v3891 = vpop.xlane.xlu0 %3890
        %3892 = vadd.xlane.f32.xlu0 %v3861
        %v3893 = vpop.xlane.xlu0 %3892
        %3894 = vadd.xlane.f32.xlu0 %v3863
        %v3895 = vpop.xlane.xlu0 %3894
        %3896 = vadd.xlane.f32.xlu0 %v3865
        %v3897 = vpop.xlane.xlu0 %3896
        %3898 = vadd.xlane.f32.xlu0 %v3867
        %v3899 = vpop.xlane.xlu0 %3898
        %3900 = vadd.xlane.f32.xlu0 %v3869
        %v3901 = vpop.xlane.xlu0 %3900
        %3902 = vadd.xlane.f32.xlu0 %v3871
        %v3903 = vpop.xlane.xlu0 %3902
        %3904 = vadd.xlane.f32.xlu0 %v3873
        %v3905 = vpop.xlane.xlu0 %3904
        %3906 = vadd.xlane.f32.xlu0 %v3875
        %v3907 = vpop.xlane.xlu0 %3906
        %3908 = vadd.xlane.f32.xlu0 %v3877
        %v3909 = vpop.xlane.xlu0 %3908
        %3910 = vadd.xlane.f32.xlu0 %v3879
        %v3911 = vpop.xlane.xlu0 %3910
        %v3912 = vrcp.pop %v3881
        %v3913 = vrcp.pop %v3883
        %v3914 = vrcp.pop %v3885
        %v3915 = vrcp.pop %v3887
        %v3916 = vrcp.pop %v3889
        %v3917 = vrcp.pop %v3891
        %v3918 = vrcp.pop %v3893
        %v3919 = vrcp.pop %v3895
        %v3920 = vrcp.pop %v3897
        %v3921 = vrcp.pop %v3899
        %v3922 = vrcp.pop %v3901
        %v3923 = vrcp.pop %v3903
        %v3924 = vrcp.pop %v3905
        %v3925 = vrcp.pop %v3907
        %v3926 = vrcp.pop %v3909
        %v3927 = vrcp.pop %v3911
        %v3928 = vmul.f32 %v3849, %v3912
        %v3929 = vmul.f32 %v3851, %v3913
        %v3930 = vmul.f32 %v3853, %v3914
        %v3931 = vmul.f32 %v3855, %v3915
        %v3932 = vmul.f32 %v3857, %v3916
        %v3933 = vmul.f32 %v3859, %v3917
        %v3934 = vmul.f32 %v3861, %v3918
        %v3935 = vmul.f32 %v3863, %v3919
        %v3936 = vmul.f32 %v3865, %v3920
        %v3937 = vmul.f32 %v3867, %v3921
        %v3938 = vmul.f32 %v3869, %v3922
        %v3939 = vmul.f32 %v3871, %v3923
        %v3940 = vmul.f32 %v3873, %v3924
        %v3941 = vmul.f32 %v3875, %v3925
        %v3942 = vmul.f32 %v3877, %v3926
        %v3943 = vmul.f32 %v3879, %v3927
        %v3944 = vpack.c.bf16 %v3929, %v3928
        %v3945 = vpack.c.bf16 %v3931, %v3930
        %v3946 = vpack.c.bf16 %v3933, %v3932
        %v3947 = vpack.c.bf16 %v3935, %v3934
        %v3948 = vpack.c.bf16 %v3937, %v3936
        %v3949 = vpack.c.bf16 %v3939, %v3938
        %v3950 = vpack.c.bf16 %v3941, %v3940
        %v3951 = vpack.c.bf16 %v3943, %v3942
        %3952 = vmatprep.subr.bf16.mxu0 0
        %3953 = vmatpush1.bf16.msra.mxu0 %v3670
        %3954 = vmatprep.subr.bf16.mxu0 0
        %3955 = vmatpush1.bf16.msra.mxu0 %v3669
        %3956 = vmatprep.subr.bf16.mxu0 0
        %3957 = vmatpush1.bf16.msra.mxu0 %v3668
        %3958 = vmatprep.subr.bf16.mxu0 0
        %3959 = vmatpush1.bf16.msra.mxu0 %v3667
        %3960 = vmatprep.subr.bf16.mxu0 0
        %3961 = vmatpush1.bf16.msra.mxu0 %v3666
        %3962 = vmatprep.subr.bf16.mxu0 0
        %3963 = vmatpush1.bf16.msra.mxu0 %v3665
        %3964 = vmatprep.subr.bf16.mxu0 0
        %3965 = vmatpush1.bf16.msra.mxu0 %v3664
        %3966 = vmatprep.subr.bf16.mxu0 0
        %3967 = vmatpush1.bf16.msra.mxu0 %v3663
        %3968 = vmatprep.subr.bf16.mxu0 0
        %3969 = vmatpush2.bf16.msra.mxu0 0
        %3970 = vmatprep.subr.bf16.mxu0 0
        %3971 = vmatpush2.bf16.msra.mxu0 0
        %3972 = vmatprep.subr.bf16.mxu0 0
        %3973 = vmatpush2.bf16.msra.mxu0 0
        %3974 = vmatprep.subr.bf16.mxu0 0
        %3975 = vmatpush2.bf16.msra.mxu0 0
        %3976 = vmatprep.subr.bf16.mxu0 0
        %3977 = vmatpush2.bf16.msra.mxu0 0
        %3978 = vmatprep.subr.bf16.mxu0 0
        %3979 = vmatpush2.bf16.msra.mxu0 0
        %3980 = vmatprep.subr.bf16.mxu0 0
        %3981 = vmatpush2.bf16.msra.mxu0 0
        %3982 = vmatprep.subr.bf16.mxu0 0
        %3983 = vmatpush2.bf16.msra.mxu0 0
        %3984 = vmatprep.mubr.bf16.mxu0 0
        %3985 = vmatmul.mubr.bf16.gmra.mxu0 %v3944
        %v3986 = vpop.f32.mrf.mxu0
        %v3987 = vadd.f32 0.0, %v3986
        %v3988 = vpop.f32.mrf.mxu0
        %v3989 = vpop.f32.mrf.mxu0
        %v3990 = vadd.f32 0.0, %v3989
        %v3991 = vpop.f32.mrf.mxu0
        %3992 = vmatprep.mubr.bf16.mxu0 0
        %3993 = vmatmul.mubr.bf16.gmra.mxu0 %v3945
        %v3994 = vpop.f32.mrf.mxu0
        %v3995 = vadd.f32 0.0, %v3994
        %v3996 = vpop.f32.mrf.mxu0
        %v3997 = vpop.f32.mrf.mxu0
        %v3998 = vadd.f32 0.0, %v3997
        %v3999 = vpop.f32.mrf.mxu0
        %4000 = vmatprep.mubr.bf16.mxu0 0
        %4001 = vmatmul.mubr.bf16.gmra.mxu0 %v3946
        %v4002 = vpop.f32.mrf.mxu0
        %v4003 = vadd.f32 0.0, %v4002
        %v4004 = vpop.f32.mrf.mxu0
        %v4005 = vpop.f32.mrf.mxu0
        %v4006 = vadd.f32 0.0, %v4005
        %v4007 = vpop.f32.mrf.mxu0
        %4008 = vmatprep.mubr.bf16.mxu0 0
        %4009 = vmatmul.mubr.bf16.gmra.mxu0 %v3947
        %v4010 = vpop.f32.mrf.mxu0
        %v4011 = vadd.f32 0.0, %v4010
        %v4012 = vpop.f32.mrf.mxu0
        %v4013 = vpop.f32.mrf.mxu0
        %v4014 = vadd.f32 0.0, %v4013
        %v4015 = vpop.f32.mrf.mxu0
        %4016 = vmatprep.mubr.bf16.mxu0 0
        %4017 = vmatmul.mubr.bf16.gmra.mxu0 %v3948
        %v4018 = vpop.f32.mrf.mxu0
        %v4019 = vadd.f32 0.0, %v4018
        %v4020 = vpop.f32.mrf.mxu0
        %v4021 = vpop.f32.mrf.mxu0
        %v4022 = vadd.f32 0.0, %v4021
        %v4023 = vpop.f32.mrf.mxu0
        %4024 = vmatprep.mubr.bf16.mxu0 0
        %4025 = vmatmul.mubr.bf16.gmra.mxu0 %v3949
        %v4026 = vpop.f32.mrf.mxu0
        %v4027 = vadd.f32 0.0, %v4026
        %v4028 = vpop.f32.mrf.mxu0
        %v4029 = vpop.f32.mrf.mxu0
        %v4030 = vadd.f32 0.0, %v4029
        %v4031 = vpop.f32.mrf.mxu0
        %4032 = vmatprep.mubr.bf16.mxu0 0
        %4033 = vmatmul.mubr.bf16.gmra.mxu0 %v3950
        %v4034 = vpop.f32.mrf.mxu0
        %v4035 = vadd.f32 0.0, %v4034
        %v4036 = vpop.f32.mrf.mxu0
        %v4037 = vpop.f32.mrf.mxu0
        %v4038 = vadd.f32 0.0, %v4037
        %v4039 = vpop.f32.mrf.mxu0
        %4040 = vmatprep.mubr.bf16.mxu0 0
        %4041 = vmatmul.mubr.bf16.gmra.mxu0 %v3951
        %v4042 = vpop.f32.mrf.mxu0
        %v4043 = vadd.f32 0.0, %v4042
        %v4044 = vpop.f32.mrf.mxu0
        %v4045 = vpop.f32.mrf.mxu0
        %v4046 = vadd.f32 0.0, %v4045
        %v4047 = vpop.f32.mrf.mxu0
        %4048 = vdwg.mxu0
        %v4049 = vpack.c.bf16 %v2784, %v2781
        %v4050 = vpack.c.bf16 %v3186, %v3183
        %v4051 = vpack.c.bf16 %v3588, %v3585
        %v4052 = vpack.c.bf16 %v3990, %v3987
        %v4053 = vpack.c.bf16 %v2792, %v2789
        %v4054 = vpack.c.bf16 %v3194, %v3191
        %v4055 = vpack.c.bf16 %v3596, %v3593
        %v4056 = vpack.c.bf16 %v3998, %v3995
        %v4057 = vpack.c.bf16 %v2800, %v2797
        %v4058 = vpack.c.bf16 %v3202, %v3199
        %v4059 = vpack.c.bf16 %v3604, %v3601
        %v4060 = vpack.c.bf16 %v4006, %v4003
        %v4061 = vpack.c.bf16 %v2808, %v2805
        %v4062 = vpack.c.bf16 %v3210, %v3207
        %v4063 = vpack.c.bf16 %v3612, %v3609
        %v4064 = vpack.c.bf16 %v4014, %v4011
        %v4065 = vpack.c.bf16 %v2816, %v2813
        %v4066 = vpack.c.bf16 %v3218, %v3215
        %v4067 = vpack.c.bf16 %v3620, %v3617
        %v4068 = vpack.c.bf16 %v4022, %v4019
        %v4069 = vpack.c.bf16 %v2824, %v2821
        %v4070 = vpack.c.bf16 %v3226, %v3223
        %v4071 = vpack.c.bf16 %v3628, %v3625
        %v4072 = vpack.c.bf16 %v4030, %v4027
        %v4073 = vpack.c.bf16 %v2832, %v2829
        %v4074 = vpack.c.bf16 %v3234, %v3231
        %v4075 = vpack.c.bf16 %v3636, %v3633
        %v4076 = vpack.c.bf16 %v4038, %v4035
        %v4077 = vpack.c.bf16 %v2840, %v2837
        %v4078 = vpack.c.bf16 %v3242, %v3239
        %v4079 = vpack.c.bf16 %v3644, %v3641
        %v4080 = vpack.c.bf16 %v4046, %v4043
        %v4081 = vld [vmem:[%s734] sm:$0xf]
        %v4082 = vld [vmem:[%s734 + $0x4] sm:$0xf]
        %v4083 = vld [vmem:[%s734 + $0x8] sm:$0xf]
        %v4084 = vld [vmem:[%s734 + $0xc] sm:$0xf]
        %v4085 = vld [vmem:[%s734 + $0x10] sm:$0xf]
        %v4086 = vld [vmem:[%s734 + $0x14] sm:$0xf]
        %v4087 = vld [vmem:[%s734 + $0x18] sm:$0xf]
        %v4088 = vld [vmem:[%s734 + $0x1c] sm:$0xf]
        %v4089 = vld [vmem:[%s734 + $0x20] sm:$0xf]
        %v4090 = vld [vmem:[%s734 + $0x24] sm:$0xf]
        %v4091 = vld [vmem:[%s734 + $0x28] sm:$0xf]
        %v4092 = vld [vmem:[%s734 + $0x2c] sm:$0xf]
        %v4093 = vld [vmem:[%s734 + $0x30] sm:$0xf]
        %v4094 = vld [vmem:[%s734 + $0x34] sm:$0xf]
        %v4095 = vld [vmem:[%s734 + $0x38] sm:$0xf]
        %v4096 = vld [vmem:[%s734 + $0x3c] sm:$0xf]
        %v4097 = vld [vmem:[%s734 + $0x40] sm:$0xf]
        %v4098 = vld [vmem:[%s734 + $0x44] sm:$0xf]
        %v4099 = vld [vmem:[%s734 + $0x48] sm:$0xf]
        %v4100 = vld [vmem:[%s734 + $0x4c] sm:$0xf]
        %v4101 = vld [vmem:[%s734 + $0x50] sm:$0xf]
        %v4102 = vld [vmem:[%s734 + $0x54] sm:$0xf]
        %v4103 = vld [vmem:[%s734 + $0x58] sm:$0xf]
        %v4104 = vld [vmem:[%s734 + $0x5c] sm:$0xf]
        %v4105 = vld [vmem:[%s734 + $0x60] sm:$0xf]
        %v4106 = vld [vmem:[%s734 + $0x64] sm:$0xf]
        %v4107 = vld [vmem:[%s734 + $0x68] sm:$0xf]
        %v4108 = vld [vmem:[%s734 + $0x6c] sm:$0xf]
        %v4109 = vld [vmem:[%s734 + $0x70] sm:$0xf]
        %v4110 = vld [vmem:[%s734 + $0x74] sm:$0xf]
        %v4111 = vld [vmem:[%s734 + $0x78] sm:$0xf]
        %v4112 = vld [vmem:[%s734 + $0x7c] sm:$0xf]
        %v4113 = vld [vmem:[%s734 + $0x80] sm:$0xf]
        %v4114 = vld [vmem:[%s734 + $0x84] sm:$0xf]
        %v4115 = vld [vmem:[%s734 + $0x88] sm:$0xf]
        %v4116 = vld [vmem:[%s734 + $0x8c] sm:$0xf]
        %v4117 = vld [vmem:[%s734 + $0x90] sm:$0xf]
        %v4118 = vld [vmem:[%s734 + $0x94] sm:$0xf]
        %v4119 = vld [vmem:[%s734 + $0x98] sm:$0xf]
        %v4120 = vld [vmem:[%s734 + $0x9c] sm:$0xf]
        %v4121 = vld [vmem:[%s734 + $0xa0] sm:$0xf]
        %v4122 = vld [vmem:[%s734 + $0xa4] sm:$0xf]
        %v4123 = vld [vmem:[%s734 + $0xa8] sm:$0xf]
        %v4124 = vld [vmem:[%s734 + $0xac] sm:$0xf]
        %v4125 = vld [vmem:[%s734 + $0xb0] sm:$0xf]
        %v4126 = vld [vmem:[%s734 + $0xb4] sm:$0xf]
        %v4127 = vld [vmem:[%s734 + $0xb8] sm:$0xf]
        %v4128 = vld [vmem:[%s734 + $0xbc] sm:$0xf]
        %v4129 = vld [vmem:[%s734 + $0xc0] sm:$0xf]
        %v4130 = vld [vmem:[%s734 + $0xc4] sm:$0xf]
        %v4131 = vld [vmem:[%s734 + $0xc8] sm:$0xf]
        %v4132 = vld [vmem:[%s734 + $0xcc] sm:$0xf]
        %v4133 = vld [vmem:[%s734 + $0xd0] sm:$0xf]
        %v4134 = vld [vmem:[%s734 + $0xd4] sm:$0xf]
        %v4135 = vld [vmem:[%s734 + $0xd8] sm:$0xf]
        %v4136 = vld [vmem:[%s734 + $0xdc] sm:$0xf]
        %v4137 = vld [vmem:[%s734 + $0xe0] sm:$0xf]
        %v4138 = vld [vmem:[%s734 + $0xe4] sm:$0xf]
        %v4139 = vld [vmem:[%s734 + $0xe8] sm:$0xf]
        %v4140 = vld [vmem:[%s734 + $0xec] sm:$0xf]
        %v4141 = vld [vmem:[%s734 + $0xf0] sm:$0xf]
        %v4142 = vld [vmem:[%s734 + $0xf4] sm:$0xf]
        %v4143 = vld [vmem:[%s734 + $0xf8] sm:$0xf]
        %v4144 = vld [vmem:[%s734 + $0xfc] sm:$0xf]
        %v4209 = vunpack.c.l.b16 %v4081
        %v4210 = vunpack.c.l.b16 %v4082
        %v4211 = vunpack.c.l.b16 %v4083
        %v4212 = vunpack.c.l.b16 %v4084
        %v4213 = vunpack.c.l.b16 %v4085
        %v4214 = vunpack.c.l.b16 %v4086
        %v4215 = vunpack.c.l.b16 %v4087
        %v4216 = vunpack.c.l.b16 %v4088
        %v4217 = vunpack.c.l.b16 %v4089
        %v4218 = vunpack.c.l.b16 %v4090
        %v4219 = vunpack.c.l.b16 %v4091
        %v4220 = vunpack.c.l.b16 %v4092
        %v4221 = vunpack.c.l.b16 %v4093
        %v4222 = vunpack.c.l.b16 %v4094
        %v4223 = vunpack.c.l.b16 %v4095
        %v4224 = vunpack.c.l.b16 %v4096
        %v4225 = vunpack.c.l.b16 %v4097
        %v4226 = vunpack.c.l.b16 %v4098
        %v4227 = vunpack.c.l.b16 %v4099
        %v4228 = vunpack.c.l.b16 %v4100
        %v4229 = vunpack.c.l.b16 %v4101
        %v4230 = vunpack.c.l.b16 %v4102
        %v4231 = vunpack.c.l.b16 %v4103
        %v4232 = vunpack.c.l.b16 %v4104
        %v4233 = vunpack.c.l.b16 %v4105
        %v4234 = vunpack.c.l.b16 %v4106
        %v4235 = vunpack.c.l.b16 %v4107
        %v4236 = vunpack.c.l.b16 %v4108
        %v4237 = vunpack.c.l.b16 %v4109
        %v4238 = vunpack.c.l.b16 %v4110
        %v4239 = vunpack.c.l.b16 %v4111
        %v4240 = vunpack.c.l.b16 %v4112
        %v4241 = vunpack.c.l.b16 %v4113
        %v4242 = vunpack.c.l.b16 %v4114
        %v4243 = vunpack.c.l.b16 %v4115
        %v4244 = vunpack.c.l.b16 %v4116
        %v4245 = vunpack.c.l.b16 %v4117
        %v4246 = vunpack.c.l.b16 %v4118
        %v4247 = vunpack.c.l.b16 %v4119
        %v4248 = vunpack.c.l.b16 %v4120
        %v4249 = vunpack.c.l.b16 %v4121
        %v4250 = vunpack.c.l.b16 %v4122
        %v4251 = vunpack.c.l.b16 %v4123
        %v4252 = vunpack.c.l.b16 %v4124
        %v4253 = vunpack.c.l.b16 %v4125
        %v4254 = vunpack.c.l.b16 %v4126
        %v4255 = vunpack.c.l.b16 %v4127
        %v4256 = vunpack.c.l.b16 %v4128
        %v4257 = vunpack.c.l.b16 %v4129
        %v4258 = vunpack.c.l.b16 %v4130
        %v4259 = vunpack.c.l.b16 %v4131
        %v4260 = vunpack.c.l.b16 %v4132
        %v4261 = vunpack.c.l.b16 %v4133
        %v4262 = vunpack.c.l.b16 %v4134
        %v4263 = vunpack.c.l.b16 %v4135
        %v4264 = vunpack.c.l.b16 %v4136
        %v4265 = vunpack.c.l.b16 %v4137
        %v4266 = vunpack.c.l.b16 %v4138
        %v4267 = vunpack.c.l.b16 %v4139
        %v4268 = vunpack.c.l.b16 %v4140
        %v4269 = vunpack.c.l.b16 %v4141
        %v4270 = vunpack.c.l.b16 %v4142
        %v4271 = vunpack.c.l.b16 %v4143
        %v4272 = vunpack.c.l.b16 %v4144
        %v4273 = vpack.c.b16 %v4210, %v4209
        %v4274 = vpack.c.b16 %v4212, %v4211
        %v4275 = vpack.c.b16 %v4214, %v4213
        %v4276 = vpack.c.b16 %v4216, %v4215
        %v4277 = vpack.c.b16 %v4218, %v4217
        %v4278 = vpack.c.b16 %v4220, %v4219
        %v4279 = vpack.c.b16 %v4222, %v4221
        %v4280 = vpack.c.b16 %v4224, %v4223
        %v4281 = vpack.c.b16 %v4226, %v4225
        %v4282 = vpack.c.b16 %v4228, %v4227
        %v4283 = vpack.c.b16 %v4230, %v4229
        %v4284 = vpack.c.b16 %v4232, %v4231
        %v4285 = vpack.c.b16 %v4234, %v4233
        %v4286 = vpack.c.b16 %v4236, %v4235
        %v4287 = vpack.c.b16 %v4238, %v4237
        %v4288 = vpack.c.b16 %v4240, %v4239
        %v4289 = vpack.c.b16 %v4242, %v4241
        %v4290 = vpack.c.b16 %v4244, %v4243
        %v4291 = vpack.c.b16 %v4246, %v4245
        %v4292 = vpack.c.b16 %v4248, %v4247
        %v4293 = vpack.c.b16 %v4250, %v4249
        %v4294 = vpack.c.b16 %v4252, %v4251
        %v4295 = vpack.c.b16 %v4254, %v4253
        %v4296 = vpack.c.b16 %v4256, %v4255
        %v4297 = vpack.c.b16 %v4258, %v4257
        %v4298 = vpack.c.b16 %v4260, %v4259
        %v4299 = vpack.c.b16 %v4262, %v4261
        %v4300 = vpack.c.b16 %v4264, %v4263
        %v4301 = vpack.c.b16 %v4266, %v4265
        %v4302 = vpack.c.b16 %v4268, %v4267
        %v4303 = vpack.c.b16 %v4270, %v4269
        %v4304 = vpack.c.b16 %v4272, %v4271
        %4337 = vmatprep.subr.bf16.mxu0 0
        %4338 = vmatpush1.bf16.msra.mxu0 %v4280
        %4339 = vmatprep.subr.bf16.mxu0 0
        %4340 = vmatpush1.bf16.msra.mxu0 %v4279
        %4341 = vmatprep.subr.bf16.mxu0 0
        %4342 = vmatpush1.bf16.msra.mxu0 %v4278
        %4343 = vmatprep.subr.bf16.mxu0 0
        %4344 = vmatpush1.bf16.msra.mxu0 %v4277
        %4345 = vmatprep.subr.bf16.mxu0 0
        %4346 = vmatpush1.bf16.msra.mxu0 %v4276
        %4347 = vmatprep.subr.bf16.mxu0 0
        %4348 = vmatpush1.bf16.msra.mxu0 %v4275
        %4349 = vmatprep.subr.bf16.mxu0 0
        %4350 = vmatpush1.bf16.msra.mxu0 %v4274
        %4351 = vmatprep.subr.bf16.mxu0 0
        %4352 = vmatpush1.bf16.msra.mxu0 %v4273
        %4353 = vmatprep.subr.bf16.mxu0 0
        %4354 = vmatpush2.bf16.msra.mxu0 %v4288
        %4355 = vmatprep.subr.bf16.mxu0 0
        %4356 = vmatpush2.bf16.msra.mxu0 %v4287
        %4357 = vmatprep.subr.bf16.mxu0 0
        %4358 = vmatpush2.bf16.msra.mxu0 %v4286
        %4359 = vmatprep.subr.bf16.mxu0 0
        %4360 = vmatpush2.bf16.msra.mxu0 %v4285
        %4361 = vmatprep.subr.bf16.mxu0 0
        %4362 = vmatpush2.bf16.msra.mxu0 %v4284
        %4363 = vmatprep.subr.bf16.mxu0 0
        %4364 = vmatpush2.bf16.msra.mxu0 %v4283
        %4365 = vmatprep.subr.bf16.mxu0 0
        %4366 = vmatpush2.bf16.msra.mxu0 %v4282
        %4367 = vmatprep.subr.bf16.mxu0 0
        %4368 = vmatpush2.bf16.msra.mxu0 %v4281
        %4369 = vmatprep.mubr.bf16.mxu0 %v4050
        %4370 = vmatmul.mubr.bf16.gmra.mxu0 %v4049
        %v4371 = vpop.f32.mrf.mxu0
        %v4372 = vadd.f32 0.0, %v4371
        %v4373 = vpop.f32.mrf.mxu0
        %v4374 = vpop.f32.mrf.mxu0
        %v4375 = vadd.f32 0.0, %v4374
        %v4376 = vpop.f32.mrf.mxu0
        %4377 = vmatprep.mubr.bf16.mxu0 %v4054
        %4378 = vmatmul.mubr.bf16.gmra.mxu0 %v4053
        %v4379 = vpop.f32.mrf.mxu0
        %v4380 = vadd.f32 0.0, %v4379
        %v4381 = vpop.f32.mrf.mxu0
        %v4382 = vpop.f32.mrf.mxu0
        %v4383 = vadd.f32 0.0, %v4382
        %v4384 = vpop.f32.mrf.mxu0
        %4385 = vmatprep.mubr.bf16.mxu0 %v4058
        %4386 = vmatmul.mubr.bf16.gmra.mxu0 %v4057
        %v4387 = vpop.f32.mrf.mxu0
        %v4388 = vadd.f32 0.0, %v4387
        %v4389 = vpop.f32.mrf.mxu0
        %v4390 = vpop.f32.mrf.mxu0
        %v4391 = vadd.f32 0.0, %v4390
        %v4392 = vpop.f32.mrf.mxu0
        %4393 = vmatprep.mubr.bf16.mxu0 %v4062
        %4394 = vmatmul.mubr.bf16.gmra.mxu0 %v4061
        %v4395 = vpop.f32.mrf.mxu0
        %v4396 = vadd.f32 0.0, %v4395
        %v4397 = vpop.f32.mrf.mxu0
        %v4398 = vpop.f32.mrf.mxu0
        %v4399 = vadd.f32 0.0, %v4398
        %v4400 = vpop.f32.mrf.mxu0
        %4401 = vmatprep.mubr.bf16.mxu0 %v4066
        %4402 = vmatmul.mubr.bf16.gmra.mxu0 %v4065
        %v4403 = vpop.f32.mrf.mxu0
        %v4404 = vadd.f32 0.0, %v4403
        %v4405 = vpop.f32.mrf.mxu0
        %v4406 = vpop.f32.mrf.mxu0
        %v4407 = vadd.f32 0.0, %v4406
        %v4408 = vpop.f32.mrf.mxu0
        %4409 = vmatprep.mubr.bf16.mxu0 %v4070
        %4410 = vmatmul.mubr.bf16.gmra.mxu0 %v4069
        %v4411 = vpop.f32.mrf.mxu0
        %v4412 = vadd.f32 0.0, %v4411
        %v4413 = vpop.f32.mrf.mxu0
        %v4414 = vpop.f32.mrf.mxu0
        %v4415 = vadd.f32 0.0, %v4414
        %v4416 = vpop.f32.mrf.mxu0
        %4417 = vmatprep.mubr.bf16.mxu0 %v4074
        %4418 = vmatmul.mubr.bf16.gmra.mxu0 %v4073
        %v4419 = vpop.f32.mrf.mxu0
        %v4420 = vadd.f32 0.0, %v4419
        %v4421 = vpop.f32.mrf.mxu0
        %v4422 = vpop.f32.mrf.mxu0
        %v4423 = vadd.f32 0.0, %v4422
        %v4424 = vpop.f32.mrf.mxu0
        %4425 = vmatprep.mubr.bf16.mxu0 %v4078
        %4426 = vmatmul.mubr.bf16.gmra.mxu0 %v4077
        %v4427 = vpop.f32.mrf.mxu0
        %v4428 = vadd.f32 0.0, %v4427
        %v4429 = vpop.f32.mrf.mxu0
        %v4430 = vpop.f32.mrf.mxu0
        %v4431 = vadd.f32 0.0, %v4430
        %v4432 = vpop.f32.mrf.mxu0
        %4433 = vdwg.mxu0
        %4434 = vmatprep.subr.bf16.mxu0 0
        %4435 = vmatpush1.bf16.msra.mxu0 %v4296
        %4436 = vmatprep.subr.bf16.mxu0 0
        %4437 = vmatpush1.bf16.msra.mxu0 %v4295
        %4438 = vmatprep.subr.bf16.mxu0 0
        %4439 = vmatpush1.bf16.msra.mxu0 %v4294
        %4440 = vmatprep.subr.bf16.mxu0 0
        %4441 = vmatpush1.bf16.msra.mxu0 %v4293
        %4442 = vmatprep.subr.bf16.mxu0 0
        %4443 = vmatpush1.bf16.msra.mxu0 %v4292
        %4444 = vmatprep.subr.bf16.mxu0 0
        %4445 = vmatpush1.bf16.msra.mxu0 %v4291
        %4446 = vmatprep.subr.bf16.mxu0 0
        %4447 = vmatpush1.bf16.msra.mxu0 %v4290
        %4448 = vmatprep.subr.bf16.mxu0 0
        %4449 = vmatpush1.bf16.msra.mxu0 %v4289
        %4450 = vmatprep.subr.bf16.mxu0 0
        %4451 = vmatpush2.bf16.msra.mxu0 %v4304
        %4452 = vmatprep.subr.bf16.mxu0 0
        %4453 = vmatpush2.bf16.msra.mxu0 %v4303
        %4454 = vmatprep.subr.bf16.mxu0 0
        %4455 = vmatpush2.bf16.msra.mxu0 %v4302
        %4456 = vmatprep.subr.bf16.mxu0 0
        %4457 = vmatpush2.bf16.msra.mxu0 %v4301
        %4458 = vmatprep.subr.bf16.mxu0 0
        %4459 = vmatpush2.bf16.msra.mxu0 %v4300
        %4460 = vmatprep.subr.bf16.mxu0 0
        %4461 = vmatpush2.bf16.msra.mxu0 %v4299
        %4462 = vmatprep.subr.bf16.mxu0 0
        %4463 = vmatpush2.bf16.msra.mxu0 %v4298
        %4464 = vmatprep.subr.bf16.mxu0 0
        %4465 = vmatpush2.bf16.msra.mxu0 %v4297
        %4466 = vmatprep.mubr.bf16.mxu0 %v4052
        %4467 = vmatmul.mubr.bf16.gmra.mxu0 %v4051
        %v4468 = vpop.f32.mrf.mxu0
        %v4469 = vadd.f32 %v4372, %v4468
        %v4470 = vpop.f32.mrf.mxu0
        %v4471 = vpop.f32.mrf.mxu0
        %v4472 = vadd.f32 %v4375, %v4471
        %v4473 = vpop.f32.mrf.mxu0
        %4474 = vmatprep.mubr.bf16.mxu0 %v4056
        %4475 = vmatmul.mubr.bf16.gmra.mxu0 %v4055
        %v4476 = vpop.f32.mrf.mxu0
        %v4477 = vadd.f32 %v4380, %v4476
        %v4478 = vpop.f32.mrf.mxu0
        %v4479 = vpop.f32.mrf.mxu0
        %v4480 = vadd.f32 %v4383, %v4479
        %v4481 = vpop.f32.mrf.mxu0
        %4482 = vmatprep.mubr.bf16.mxu0 %v4060
        %4483 = vmatmul.mubr.bf16.gmra.mxu0 %v4059
        %v4484 = vpop.f32.mrf.mxu0
        %v4485 = vadd.f32 %v4388, %v4484
        %v4486 = vpop.f32.mrf.mxu0
        %v4487 = vpop.f32.mrf.mxu0
        %v4488 = vadd.f32 %v4391, %v4487
        %v4489 = vpop.f32.mrf.mxu0
        %4490 = vmatprep.mubr.bf16.mxu0 %v4064
        %4491 = vmatmul.mubr.bf16.gmra.mxu0 %v4063
        %v4492 = vpop.f32.mrf.mxu0
        %v4493 = vadd.f32 %v4396, %v4492
        %v4494 = vpop.f32.mrf.mxu0
        %v4495 = vpop.f32.mrf.mxu0
        %v4496 = vadd.f32 %v4399, %v4495
        %v4497 = vpop.f32.mrf.mxu0
        %4498 = vmatprep.mubr.bf16.mxu0 %v4068
        %4499 = vmatmul.mubr.bf16.gmra.mxu0 %v4067
        %v4500 = vpop.f32.mrf.mxu0
        %v4501 = vadd.f32 %v4404, %v4500
        %v4502 = vpop.f32.mrf.mxu0
        %v4503 = vpop.f32.mrf.mxu0
        %v4504 = vadd.f32 %v4407, %v4503
        %v4505 = vpop.f32.mrf.mxu0
        %4506 = vmatprep.mubr.bf16.mxu0 %v4072
        %4507 = vmatmul.mubr.bf16.gmra.mxu0 %v4071
        %v4508 = vpop.f32.mrf.mxu0
        %v4509 = vadd.f32 %v4412, %v4508
        %v4510 = vpop.f32.mrf.mxu0
        %v4511 = vpop.f32.mrf.mxu0
        %v4512 = vadd.f32 %v4415, %v4511
        %v4513 = vpop.f32.mrf.mxu0
        %4514 = vmatprep.mubr.bf16.mxu0 %v4076
        %4515 = vmatmul.mubr.bf16.gmra.mxu0 %v4075
        %v4516 = vpop.f32.mrf.mxu0
        %v4517 = vadd.f32 %v4420, %v4516
        %v4518 = vpop.f32.mrf.mxu0
        %v4519 = vpop.f32.mrf.mxu0
        %v4520 = vadd.f32 %v4423, %v4519
        %v4521 = vpop.f32.mrf.mxu0
        %4522 = vmatprep.mubr.bf16.mxu0 %v4080
        %4523 = vmatmul.mubr.bf16.gmra.mxu0 %v4079
        %v4524 = vpop.f32.mrf.mxu0
        %v4525 = vadd.f32 %v4428, %v4524
        %v4526 = vpop.f32.mrf.mxu0
        %v4527 = vpop.f32.mrf.mxu0
        %v4528 = vadd.f32 %v4431, %v4527
        %v4529 = vpop.f32.mrf.mxu0
        %4530 = vdwg.mxu0
        %v4531 = vadd.f32 %v924, %v4469
        %v4532 = vadd.f32 %v925, %v4472
        %v4533 = vadd.f32 %v926, %v4477
        %v4534 = vadd.f32 %v927, %v4480
        %v4535 = vadd.f32 %v928, %v4485
        %v4536 = vadd.f32 %v929, %v4488
        %v4537 = vadd.f32 %v930, %v4493
        %v4538 = vadd.f32 %v931, %v4496
        %v4539 = vadd.f32 %v932, %v4501
        %v4540 = vadd.f32 %v933, %v4504
        %v4541 = vadd.f32 %v934, %v4509
        %v4542 = vadd.f32 %v935, %v4512
        %v4543 = vadd.f32 %v936, %v4517
        %v4544 = vadd.f32 %v937, %v4520
        %v4545 = vadd.f32 %v938, %v4525
        %v4546 = vadd.f32 %v939, %v4528
        %v4547 = vld [vmem:[%s742] sm:$0x1]
        %v4549 = vlaneseq
        %v4550 = vshrl.u32 %v4549, 7
        %v4551 = vsub.s32 0, %v4550
        %v4552 = vrot.slane %v4547, %v4551
        %v4554 = vadd.f32 %v4531, %v4552
        %v4555 = vadd.f32 %v4532, %v4552
        %v4556 = vadd.f32 %v4533, %v4552
        %v4557 = vadd.f32 %v4534, %v4552
        %v4558 = vadd.f32 %v4535, %v4552
        %v4559 = vadd.f32 %v4536, %v4552
        %v4560 = vadd.f32 %v4537, %v4552
        %v4561 = vadd.f32 %v4538, %v4552
        %v4562 = vadd.f32 %v4539, %v4552
        %v4563 = vadd.f32 %v4540, %v4552
        %v4564 = vadd.f32 %v4541, %v4552
        %v4565 = vadd.f32 %v4542, %v4552
        %v4566 = vadd.f32 %v4543, %v4552
        %v4567 = vadd.f32 %v4544, %v4552
        %v4568 = vadd.f32 %v4545, %v4552
        %v4569 = vadd.f32 %v4546, %v4552
        %v4570 = vld [vmem:[%s750] sm:$0x1]
        %v4571 = vld [vmem:[%s758] sm:$0x1]
        %4572 = vadd.xlane.f32.xlu0 %v4554
        %v4573 = vpop.xlane.xlu0 %4572
        %4574 = vadd.xlane.f32.xlu0 %v4555
        %v4575 = vpop.xlane.xlu0 %4574
        %4576 = vadd.xlane.f32.xlu0 %v4556
        %v4577 = vpop.xlane.xlu0 %4576
        %4578 = vadd.xlane.f32.xlu0 %v4557
        %v4579 = vpop.xlane.xlu0 %4578
        %4580 = vadd.xlane.f32.xlu0 %v4558
        %v4581 = vpop.xlane.xlu0 %4580
        %4582 = vadd.xlane.f32.xlu0 %v4559
        %v4583 = vpop.xlane.xlu0 %4582
        %4584 = vadd.xlane.f32.xlu0 %v4560
        %v4585 = vpop.xlane.xlu0 %4584
        %4586 = vadd.xlane.f32.xlu0 %v4561
        %v4587 = vpop.xlane.xlu0 %4586
        %4588 = vadd.xlane.f32.xlu0 %v4562
        %v4589 = vpop.xlane.xlu0 %4588
        %4590 = vadd.xlane.f32.xlu0 %v4563
        %v4591 = vpop.xlane.xlu0 %4590
        %4592 = vadd.xlane.f32.xlu0 %v4564
        %v4593 = vpop.xlane.xlu0 %4592
        %4594 = vadd.xlane.f32.xlu0 %v4565
        %v4595 = vpop.xlane.xlu0 %4594
        %4596 = vadd.xlane.f32.xlu0 %v4566
        %v4597 = vpop.xlane.xlu0 %4596
        %4598 = vadd.xlane.f32.xlu0 %v4567
        %v4599 = vpop.xlane.xlu0 %4598
        %4600 = vadd.xlane.f32.xlu0 %v4568
        %v4601 = vpop.xlane.xlu0 %4600
        %4602 = vadd.xlane.f32.xlu0 %v4569
        %v4603 = vpop.xlane.xlu0 %4602
        %v4604 = vmul.f32 %v4573, %v990
        %v4605 = vmul.f32 %v4575, %v990
        %v4606 = vmul.f32 %v4577, %v990
        %v4607 = vmul.f32 %v4579, %v990
        %v4608 = vmul.f32 %v4581, %v990
        %v4609 = vmul.f32 %v4583, %v990
        %v4610 = vmul.f32 %v4585, %v990
        %v4611 = vmul.f32 %v4587, %v990
        %v4612 = vmul.f32 %v4589, %v990
        %v4613 = vmul.f32 %v4591, %v990
        %v4614 = vmul.f32 %v4593, %v990
        %v4615 = vmul.f32 %v4595, %v990
        %v4616 = vmul.f32 %v4597, %v990
        %v4617 = vmul.f32 %v4599, %v990
        %v4618 = vmul.f32 %v4601, %v990
        %v4619 = vmul.f32 %v4603, %v990
        %v4620 = vsub.f32 %v4554, %v4604
        %v4621 = vsub.f32 %v4555, %v4605
        %v4622 = vsub.f32 %v4556, %v4606
        %v4623 = vsub.f32 %v4557, %v4607
        %v4624 = vsub.f32 %v4558, %v4608
        %v4625 = vsub.f32 %v4559, %v4609
        %v4626 = vsub.f32 %v4560, %v4610
        %v4627 = vsub.f32 %v4561, %v4611
        %v4628 = vsub.f32 %v4562, %v4612
        %v4629 = vsub.f32 %v4563, %v4613
        %v4630 = vsub.f32 %v4564, %v4614
        %v4631 = vsub.f32 %v4565, %v4615
        %v4632 = vsub.f32 %v4566, %v4616
        %v4633 = vsub.f32 %v4567, %v4617
        %v4634 = vsub.f32 %v4568, %v4618
        %v4635 = vsub.f32 %v4569, %v4619
        %v4636 = vmul.f32 %v4620, %v4620
        %v4637 = vmul.f32 %v4621, %v4621
        %v4638 = vmul.f32 %v4622, %v4622
        %v4639 = vmul.f32 %v4623, %v4623
        %v4640 = vmul.f32 %v4624, %v4624
        %v4641 = vmul.f32 %v4625, %v4625
        %v4642 = vmul.f32 %v4626, %v4626
        %v4643 = vmul.f32 %v4627, %v4627
        %v4644 = vmul.f32 %v4628, %v4628
        %v4645 = vmul.f32 %v4629, %v4629
        %v4646 = vmul.f32 %v4630, %v4630
        %v4647 = vmul.f32 %v4631, %v4631
        %v4648 = vmul.f32 %v4632, %v4632
        %v4649 = vmul.f32 %v4633, %v4633
        %v4650 = vmul.f32 %v4634, %v4634
        %v4651 = vmul.f32 %v4635, %v4635
        %4652 = vadd.xlane.f32.xlu0 %v4636
        %v4653 = vpop.xlane.xlu0 %4652
        %4654 = vadd.xlane.f32.xlu0 %v4637
        %v4655 = vpop.xlane.xlu0 %4654
        %4656 = vadd.xlane.f32.xlu0 %v4638
        %v4657 = vpop.xlane.xlu0 %4656
        %4658 = vadd.xlane.f32.xlu0 %v4639
        %v4659 = vpop.xlane.xlu0 %4658
        %4660 = vadd.xlane.f32.xlu0 %v4640
        %v4661 = vpop.xlane.xlu0 %4660
        %4662 = vadd.xlane.f32.xlu0 %v4641
        %v4663 = vpop.xlane.xlu0 %4662
        %4664 = vadd.xlane.f32.xlu0 %v4642
        %v4665 = vpop.xlane.xlu0 %4664
        %4666 = vadd.xlane.f32.xlu0 %v4643
        %v4667 = vpop.xlane.xlu0 %4666
        %4668 = vadd.xlane.f32.xlu0 %v4644
        %v4669 = vpop.xlane.xlu0 %4668
        %4670 = vadd.xlane.f32.xlu0 %v4645
        %v4671 = vpop.xlane.xlu0 %4670
        %4672 = vadd.xlane.f32.xlu0 %v4646
        %v4673 = vpop.xlane.xlu0 %4672
        %4674 = vadd.xlane.f32.xlu0 %v4647
        %v4675 = vpop.xlane.xlu0 %4674
        %4676 = vadd.xlane.f32.xlu0 %v4648
        %v4677 = vpop.xlane.xlu0 %4676
        %4678 = vadd.xlane.f32.xlu0 %v4649
        %v4679 = vpop.xlane.xlu0 %4678
        %4680 = vadd.xlane.f32.xlu0 %v4650
        %v4681 = vpop.xlane.xlu0 %4680
        %4682 = vadd.xlane.f32.xlu0 %v4651
        %v4683 = vpop.xlane.xlu0 %4682
        %v4684 = vmul.f32 %v4653, %v990
        %v4685 = vmul.f32 %v4655, %v990
        %v4686 = vmul.f32 %v4657, %v990
        %v4687 = vmul.f32 %v4659, %v990
        %v4688 = vmul.f32 %v4661, %v990
        %v4689 = vmul.f32 %v4663, %v990
        %v4690 = vmul.f32 %v4665, %v990
        %v4691 = vmul.f32 %v4667, %v990
        %v4692 = vmul.f32 %v4669, %v990
        %v4693 = vmul.f32 %v4671, %v990
        %v4694 = vmul.f32 %v4673, %v990
        %v4695 = vmul.f32 %v4675, %v990
        %v4696 = vmul.f32 %v4677, %v990
        %v4697 = vmul.f32 %v4679, %v990
        %v4698 = vmul.f32 %v4681, %v990
        %v4699 = vmul.f32 %v4683, %v990
        %v4700 = vadd.f32 %v4684, 1e-05
        %v4701 = vadd.f32 %v4685, 1e-05
        %v4702 = vadd.f32 %v4686, 1e-05
        %v4703 = vadd.f32 %v4687, 1e-05
        %v4704 = vadd.f32 %v4688, 1e-05
        %v4705 = vadd.f32 %v4689, 1e-05
        %v4706 = vadd.f32 %v4690, 1e-05
        %v4707 = vadd.f32 %v4691, 1e-05
        %v4708 = vadd.f32 %v4692, 1e-05
        %v4709 = vadd.f32 %v4693, 1e-05
        %v4710 = vadd.f32 %v4694, 1e-05
        %v4711 = vadd.f32 %v4695, 1e-05
        %v4712 = vadd.f32 %v4696, 1e-05
        %v4713 = vadd.f32 %v4697, 1e-05
        %v4714 = vadd.f32 %v4698, 1e-05
        %v4715 = vadd.f32 %v4699, 1e-05
        %v4716 = vrsqrt.pop %v4700
        %v4717 = vrsqrt.pop %v4701
        %v4718 = vrsqrt.pop %v4702
        %v4719 = vrsqrt.pop %v4703
        %v4720 = vrsqrt.pop %v4704
        %v4721 = vrsqrt.pop %v4705
        %v4722 = vrsqrt.pop %v4706
        %v4723 = vrsqrt.pop %v4707
        %v4724 = vrsqrt.pop %v4708
        %v4725 = vrsqrt.pop %v4709
        %v4726 = vrsqrt.pop %v4710
        %v4727 = vrsqrt.pop %v4711
        %v4728 = vrsqrt.pop %v4712
        %v4729 = vrsqrt.pop %v4713
        %v4730 = vrsqrt.pop %v4714
        %v4731 = vrsqrt.pop %v4715
        %v4732 = vmul.f32 %v4620, %v4716
        %v4733 = vmul.f32 %v4621, %v4717
        %v4734 = vmul.f32 %v4622, %v4718
        %v4735 = vmul.f32 %v4623, %v4719
        %v4736 = vmul.f32 %v4624, %v4720
        %v4737 = vmul.f32 %v4625, %v4721
        %v4738 = vmul.f32 %v4626, %v4722
        %v4739 = vmul.f32 %v4627, %v4723
        %v4740 = vmul.f32 %v4628, %v4724
        %v4741 = vmul.f32 %v4629, %v4725
        %v4742 = vmul.f32 %v4630, %v4726
        %v4743 = vmul.f32 %v4631, %v4727
        %v4744 = vmul.f32 %v4632, %v4728
        %v4745 = vmul.f32 %v4633, %v4729
        %v4746 = vmul.f32 %v4634, %v4730
        %v4747 = vmul.f32 %v4635, %v4731
        %v4749 = vlaneseq
        %v4750 = vshrl.u32 %v4749, 7
        %v4751 = vsub.s32 0, %v4750
        %v4752 = vrot.slane %v4570, %v4751
        %v4754 = vmul.f32 %v4732, %v4752
        %v4755 = vmul.f32 %v4733, %v4752
        %v4756 = vmul.f32 %v4734, %v4752
        %v4757 = vmul.f32 %v4735, %v4752
        %v4758 = vmul.f32 %v4736, %v4752
        %v4759 = vmul.f32 %v4737, %v4752
        %v4760 = vmul.f32 %v4738, %v4752
        %v4761 = vmul.f32 %v4739, %v4752
        %v4762 = vmul.f32 %v4740, %v4752
        %v4763 = vmul.f32 %v4741, %v4752
        %v4764 = vmul.f32 %v4742, %v4752
        %v4765 = vmul.f32 %v4743, %v4752
        %v4766 = vmul.f32 %v4744, %v4752
        %v4767 = vmul.f32 %v4745, %v4752
        %v4768 = vmul.f32 %v4746, %v4752
        %v4769 = vmul.f32 %v4747, %v4752
        %v4771 = vlaneseq
        %v4772 = vshrl.u32 %v4771, 7
        %v4773 = vsub.s32 0, %v4772
        %v4774 = vrot.slane %v4571, %v4773
        %v4776 = vadd.f32 %v4754, %v4774
        %v4777 = vadd.f32 %v4755, %v4774
        %v4778 = vadd.f32 %v4756, %v4774
        %v4779 = vadd.f32 %v4757, %v4774
        %v4780 = vadd.f32 %v4758, %v4774
        %v4781 = vadd.f32 %v4759, %v4774
        %v4782 = vadd.f32 %v4760, %v4774
        %v4783 = vadd.f32 %v4761, %v4774
        %v4784 = vadd.f32 %v4762, %v4774
        %v4785 = vadd.f32 %v4763, %v4774
        %v4786 = vadd.f32 %v4764, %v4774
        %v4787 = vadd.f32 %v4765, %v4774
        %v4788 = vadd.f32 %v4766, %v4774
        %v4789 = vadd.f32 %v4767, %v4774
        %v4790 = vadd.f32 %v4768, %v4774
        %v4791 = vadd.f32 %v4769, %v4774
        %v4792 = vpack.c.bf16 %v4777, %v4776
        %v4793 = vpack.c.bf16 %v4779, %v4778
        %v4794 = vpack.c.bf16 %v4781, %v4780
        %v4795 = vpack.c.bf16 %v4783, %v4782
        %v4796 = vpack.c.bf16 %v4785, %v4784
        %v4797 = vpack.c.bf16 %v4787, %v4786
        %v4798 = vpack.c.bf16 %v4789, %v4788
        %v4799 = vpack.c.bf16 %v4791, %v4790
        %v4800 = vld [vmem:[%s767] sm:$0xff]
        %v4801 = vld [vmem:[%s767 + $0x8] sm:$0xff]
        %v4802 = vld [vmem:[%s767 + $0x10] sm:$0xff]
        %v4803 = vld [vmem:[%s767 + $0x18] sm:$0xff]
        %v4804 = vld [vmem:[%s767 + $0x20] sm:$0xff]
        %v4805 = vld [vmem:[%s767 + $0x28] sm:$0xff]
        %v4806 = vld [vmem:[%s767 + $0x30] sm:$0xff]
        %v4807 = vld [vmem:[%s767 + $0x38] sm:$0xff]
        %v4808 = vld [vmem:[%s767 + $0x40] sm:$0xff]
        %v4809 = vld [vmem:[%s767 + $0x48] sm:$0xff]
        %v4810 = vld [vmem:[%s767 + $0x50] sm:$0xff]
        %v4811 = vld [vmem:[%s767 + $0x58] sm:$0xff]
        %v4812 = vld [vmem:[%s767 + $0x60] sm:$0xff]
        %v4813 = vld [vmem:[%s767 + $0x68] sm:$0xff]
        %v4814 = vld [vmem:[%s767 + $0x70] sm:$0xff]
        %v4815 = vld [vmem:[%s767 + $0x78] sm:$0xff]
        %v4816 = vld [vmem:[%s767 + $0x80] sm:$0xff]
        %v4817 = vld [vmem:[%s767 + $0x88] sm:$0xff]
        %v4818 = vld [vmem:[%s767 + $0x90] sm:$0xff]
        %v4819 = vld [vmem:[%s767 + $0x98] sm:$0xff]
        %v4820 = vld [vmem:[%s767 + $0xa0] sm:$0xff]
        %v4821 = vld [vmem:[%s767 + $0xa8] sm:$0xff]
        %v4822 = vld [vmem:[%s767 + $0xb0] sm:$0xff]
        %v4823 = vld [vmem:[%s767 + $0xb8] sm:$0xff]
        %v4824 = vld [vmem:[%s767 + $0xc0] sm:$0xff]
        %v4825 = vld [vmem:[%s767 + $0xc8] sm:$0xff]
        %v4826 = vld [vmem:[%s767 + $0xd0] sm:$0xff]
        %v4827 = vld [vmem:[%s767 + $0xd8] sm:$0xff]
        %v4828 = vld [vmem:[%s767 + $0xe0] sm:$0xff]
        %v4829 = vld [vmem:[%s767 + $0xe8] sm:$0xff]
        %v4830 = vld [vmem:[%s767 + $0xf0] sm:$0xff]
        %v4831 = vld [vmem:[%s767 + $0xf8] sm:$0xff]
        %v4832 = vld [vmem:[%s776] sm:$0xf]
        %v4834 = vlaneseq
        %v4835 = vshrl.u32 %v4834, 7
        %v4836 = vsub.s32 0, %v4835
        %v4837 = vrot.slane %v4832, %v4836
        %v4838 = vlaneseq
        %v4839 = vshrl.u32 %v4838, 7
        %v4840 = vsub.s32 1, %v4839
        %v4841 = vrot.slane %v4832, %v4840
        %v4842 = vlaneseq
        %v4843 = vshrl.u32 %v4842, 7
        %v4844 = vsub.s32 2, %v4843
        %v4845 = vrot.slane %v4832, %v4844
        %v4846 = vlaneseq
        %v4847 = vshrl.u32 %v4846, 7
        %v4848 = vsub.s32 3, %v4847
        %v4849 = vrot.slane %v4832, %v4848
        %v4886 = vunpack.c.l.b16 %v4800
        %v4887 = vunpack.c.h.b16 %v4800
        %v4888 = vunpack.c.l.b16 %v4801
        %v4889 = vunpack.c.h.b16 %v4801
        %v4890 = vunpack.c.l.b16 %v4802
        %v4891 = vunpack.c.h.b16 %v4802
        %v4892 = vunpack.c.l.b16 %v4803
        %v4893 = vunpack.c.h.b16 %v4803
        %v4894 = vunpack.c.l.b16 %v4804
        %v4895 = vunpack.c.h.b16 %v4804
        %v4896 = vunpack.c.l.b16 %v4805
        %v4897 = vunpack.c.h.b16 %v4805
        %v4898 = vunpack.c.l.b16 %v4806
        %v4899 = vunpack.c.h.b16 %v4806
        %v4900 = vunpack.c.l.b16 %v4807
        %v4901 = vunpack.c.h.b16 %v4807
        %v4902 = vunpack.c.l.b16 %v4808
        %v4903 = vunpack.c.h.b16 %v4808
        %v4904 = vunpack.c.l.b16 %v4809
        %v4905 = vunpack.c.h.b16 %v4809
        %v4906 = vunpack.c.l.b16 %v4810
        %v4907 = vunpack.c.h.b16 %v4810
        %v4908 = vunpack.c.l.b16 %v4811
        %v4909 = vunpack.c.h.b16 %v4811
        %v4910 = vunpack.c.l.b16 %v4812
        %v4911 = vunpack.c.h.b16 %v4812
        %v4912 = vunpack.c.l.b16 %v4813
        %v4913 = vunpack.c.h.b16 %v4813
        %v4914 = vunpack.c.l.b16 %v4814
        %v4915 = vunpack.c.h.b16 %v4814
        %v4916 = vunpack.c.l.b16 %v4815
        %v4917 = vunpack.c.h.b16 %v4815
        %v4918 = vunpack.c.l.b16 %v4816
        %v4919 = vunpack.c.h.b16 %v4816
        %v4920 = vunpack.c.l.b16 %v4817
        %v4921 = vunpack.c.h.b16 %v4817
        %v4922 = vunpack.c.l.b16 %v4818
        %v4923 = vunpack.c.h.b16 %v4818
        %v4924 = vunpack.c.l.b16 %v4819
        %v4925 = vunpack.c.h.b16 %v4819
        %v4926 = vunpack.c.l.b16 %v4820
        %v4927 = vunpack.c.h.b16 %v4820
        %v4928 = vunpack.c.l.b16 %v4821
        %v4929 = vunpack.c.h.b16 %v4821
        %v4930 = vunpack.c.l.b16 %v4822
        %v4931 = vunpack.c.h.b16 %v4822
        %v4932 = vunpack.c.l.b16 %v4823
        %v4933 = vunpack.c.h.b16 %v4823
        %v4934 = vunpack.c.l.b16 %v4824
        %v4935 = vunpack.c.h.b16 %v4824
        %v4936 = vunpack.c.l.b16 %v4825
        %v4937 = vunpack.c.h.b16 %v4825
        %v4938 = vunpack.c.l.b16 %v4826
        %v4939 = vunpack.c.h.b16 %v4826
        %v4940 = vunpack.c.l.b16 %v4827
        %v4941 = vunpack.c.h.b16 %v4827
        %v4942 = vunpack.c.l.b16 %v4828
        %v4943 = vunpack.c.h.b16 %v4828
        %v4944 = vunpack.c.l.b16 %v4829
        %v4945 = vunpack.c.h.b16 %v4829
        %v4946 = vunpack.c.l.b16 %v4830
        %v4947 = vunpack.c.h.b16 %v4830
        %v4948 = vunpack.c.l.b16 %v4831
        %v4949 = vunpack.c.h.b16 %v4831
        %v4950 = vpack.c.b16 %v4890, %v4886
        %v4951 = vpack.c.b16 %v4891, %v4887
        %v4952 = vpack.c.b16 %v4892, %v4888
        %v4953 = vpack.c.b16 %v4893, %v4889
        %v4954 = vpack.c.b16 %v4898, %v4894
        %v4955 = vpack.c.b16 %v4899, %v4895
        %v4956 = vpack.c.b16 %v4900, %v4896
        %v4957 = vpack.c.b16 %v4901, %v4897
        %v4958 = vpack.c.b16 %v4906, %v4902
        %v4959 = vpack.c.b16 %v4907, %v4903
        %v4960 = vpack.c.b16 %v4908, %v4904
        %v4961 = vpack.c.b16 %v4909, %v4905
        %v4962 = vpack.c.b16 %v4914, %v4910
        %v4963 = vpack.c.b16 %v4915, %v4911
        %v4964 = vpack.c.b16 %v4916, %v4912
        %v4965 = vpack.c.b16 %v4917, %v4913
        %v4966 = vpack.c.b16 %v4922, %v4918
        %v4967 = vpack.c.b16 %v4923, %v4919
        %v4968 = vpack.c.b16 %v4924, %v4920
        %v4969 = vpack.c.b16 %v4925, %v4921
        %v4970 = vpack.c.b16 %v4930, %v4926
        %v4971 = vpack.c.b16 %v4931, %v4927
        %v4972 = vpack.c.b16 %v4932, %v4928
        %v4973 = vpack.c.b16 %v4933, %v4929
        %v4974 = vpack.c.b16 %v4938, %v4934
        %v4975 = vpack.c.b16 %v4939, %v4935
        %v4976 = vpack.c.b16 %v4940, %v4936
        %v4977 = vpack.c.b16 %v4941, %v4937
        %v4978 = vpack.c.b16 %v4946, %v4942
        %v4979 = vpack.c.b16 %v4947, %v4943
        %v4980 = vpack.c.b16 %v4948, %v4944
        %v4981 = vpack.c.b16 %v4949, %v4945
        %5014 = vmatprep.subr.bf16.mxu0 %v4979
        %5015 = vmatpush1.bf16.msra.mxu0 %v4978
        %5016 = vmatprep.subr.bf16.mxu0 %v4975
        %5017 = vmatpush1.bf16.msra.mxu0 %v4974
        %5018 = vmatprep.subr.bf16.mxu0 %v4971
        %5019 = vmatpush1.bf16.msra.mxu0 %v4970
        %5020 = vmatprep.subr.bf16.mxu0 %v4967
        %5021 = vmatpush1.bf16.msra.mxu0 %v4966
        %5022 = vmatprep.subr.bf16.mxu0 %v4963
        %5023 = vmatpush1.bf16.msra.mxu0 %v4962
        %5024 = vmatprep.subr.bf16.mxu0 %v4959
        %5025 = vmatpush1.bf16.msra.mxu0 %v4958
        %5026 = vmatprep.subr.bf16.mxu0 %v4955
        %5027 = vmatpush1.bf16.msra.mxu0 %v4954
        %5028 = vmatprep.subr.bf16.mxu0 %v4951
        %5029 = vmatpush1.bf16.msra.mxu0 %v4950
        %5030 = vmatprep.subr.bf16.mxu0 0
        %5031 = vmatpush2.bf16.msra.mxu0 0
        %5032 = vmatprep.subr.bf16.mxu0 0
        %5033 = vmatpush2.bf16.msra.mxu0 0
        %5034 = vmatprep.subr.bf16.mxu0 0
        %5035 = vmatpush2.bf16.msra.mxu0 0
        %5036 = vmatprep.subr.bf16.mxu0 0
        %5037 = vmatpush2.bf16.msra.mxu0 0
        %5038 = vmatprep.subr.bf16.mxu0 0
        %5039 = vmatpush2.bf16.msra.mxu0 0
        %5040 = vmatprep.subr.bf16.mxu0 0
        %5041 = vmatpush2.bf16.msra.mxu0 0
        %5042 = vmatprep.subr.bf16.mxu0 0
        %5043 = vmatpush2.bf16.msra.mxu0 0
        %5044 = vmatprep.subr.bf16.mxu0 0
        %5045 = vmatpush2.bf16.msra.mxu0 0
        %5046 = vmatprep.mubr.bf16.mxu0 0
        %5047 = vmatmul.mubr.bf16.gmra.mxu0 %v4792
        %v5048 = vpop.f32.mrf.mxu0
        %v5049 = vadd.f32 %v4837, %v5048
        %v5050 = vpop.f32.mrf.mxu0
        %v5051 = vadd.f32 %v4841, %v5050
        %v5052 = vpop.f32.mrf.mxu0
        %v5053 = vadd.f32 %v4837, %v5052
        %v5054 = vpop.f32.mrf.mxu0
        %v5055 = vadd.f32 %v4841, %v5054
        %5056 = vmatprep.mubr.bf16.mxu0 0
        %5057 = vmatmul.mubr.bf16.gmra.mxu0 %v4793
        %v5058 = vpop.f32.mrf.mxu0
        %v5059 = vadd.f32 %v4837, %v5058
        %v5060 = vpop.f32.mrf.mxu0
        %v5061 = vadd.f32 %v4841, %v5060
        %v5062 = vpop.f32.mrf.mxu0
        %v5063 = vadd.f32 %v4837, %v5062
        %v5064 = vpop.f32.mrf.mxu0
        %v5065 = vadd.f32 %v4841, %v5064
        %5066 = vmatprep.mubr.bf16.mxu0 0
        %5067 = vmatmul.mubr.bf16.gmra.mxu0 %v4794
        %v5068 = vpop.f32.mrf.mxu0
        %v5069 = vadd.f32 %v4837, %v5068
        %v5070 = vpop.f32.mrf.mxu0
        %v5071 = vadd.f32 %v4841, %v5070
        %v5072 = vpop.f32.mrf.mxu0
        %v5073 = vadd.f32 %v4837, %v5072
        %v5074 = vpop.f32.mrf.mxu0
        %v5075 = vadd.f32 %v4841, %v5074
        %5076 = vmatprep.mubr.bf16.mxu0 0
        %5077 = vmatmul.mubr.bf16.gmra.mxu0 %v4795
        %v5078 = vpop.f32.mrf.mxu0
        %v5079 = vadd.f32 %v4837, %v5078
        %v5080 = vpop.f32.mrf.mxu0
        %v5081 = vadd.f32 %v4841, %v5080
        %v5082 = vpop.f32.mrf.mxu0
        %v5083 = vadd.f32 %v4837, %v5082
        %v5084 = vpop.f32.mrf.mxu0
        %v5085 = vadd.f32 %v4841, %v5084
        %5086 = vmatprep.mubr.bf16.mxu0 0
        %5087 = vmatmul.mubr.bf16.gmra.mxu0 %v4796
        %v5088 = vpop.f32.mrf.mxu0
        %v5089 = vadd.f32 %v4837, %v5088
        %v5090 = vpop.f32.mrf.mxu0
        %v5091 = vadd.f32 %v4841, %v5090
        %v5092 = vpop.f32.mrf.mxu0
        %v5093 = vadd.f32 %v4837, %v5092
        %v5094 = vpop.f32.mrf.mxu0
        %v5095 = vadd.f32 %v4841, %v5094
        %5096 = vmatprep.mubr.bf16.mxu0 0
        %5097 = vmatmul.mubr.bf16.gmra.mxu0 %v4797
        %v5098 = vpop.f32.mrf.mxu0
        %v5099 = vadd.f32 %v4837, %v5098
        %v5100 = vpop.f32.mrf.mxu0
        %v5101 = vadd.f32 %v4841, %v5100
        %v5102 = vpop.f32.mrf.mxu0
        %v5103 = vadd.f32 %v4837, %v5102
        %v5104 = vpop.f32.mrf.mxu0
        %v5105 = vadd.f32 %v4841, %v5104
        %5106 = vmatprep.mubr.bf16.mxu0 0
        %5107 = vmatmul.mubr.bf16.gmra.mxu0 %v4798
        %v5108 = vpop.f32.mrf.mxu0
        %v5109 = vadd.f32 %v4837, %v5108
        %v5110 = vpop.f32.mrf.mxu0
        %v5111 = vadd.f32 %v4841, %v5110
        %v5112 = vpop.f32.mrf.mxu0
        %v5113 = vadd.f32 %v4837, %v5112
        %v5114 = vpop.f32.mrf.mxu0
        %v5115 = vadd.f32 %v4841, %v5114
        %5116 = vmatprep.mubr.bf16.mxu0 0
        %5117 = vmatmul.mubr.bf16.gmra.mxu0 %v4799
        %v5118 = vpop.f32.mrf.mxu0
        %v5119 = vadd.f32 %v4837, %v5118
        %v5120 = vpop.f32.mrf.mxu0
        %v5121 = vadd.f32 %v4841, %v5120
        %v5122 = vpop.f32.mrf.mxu0
        %v5123 = vadd.f32 %v4837, %v5122
        %v5124 = vpop.f32.mrf.mxu0
        %v5125 = vadd.f32 %v4841, %v5124
        %5126 = vdwg.mxu0
        %5127 = vmatprep.subr.bf16.mxu0 %v4981
        %5128 = vmatpush1.bf16.msra.mxu0 %v4980
        %5129 = vmatprep.subr.bf16.mxu0 %v4977
        %5130 = vmatpush1.bf16.msra.mxu0 %v4976
        %5131 = vmatprep.subr.bf16.mxu0 %v4973
        %5132 = vmatpush1.bf16.msra.mxu0 %v4972
        %5133 = vmatprep.subr.bf16.mxu0 %v4969
        %5134 = vmatpush1.bf16.msra.mxu0 %v4968
        %5135 = vmatprep.subr.bf16.mxu0 %v4965
        %5136 = vmatpush1.bf16.msra.mxu0 %v4964
        %5137 = vmatprep.subr.bf16.mxu0 %v4961
        %5138 = vmatpush1.bf16.msra.mxu0 %v4960
        %5139 = vmatprep.subr.bf16.mxu0 %v4957
        %5140 = vmatpush1.bf16.msra.mxu0 %v4956
        %5141 = vmatprep.subr.bf16.mxu0 %v4953
        %5142 = vmatpush1.bf16.msra.mxu0 %v4952
        %5143 = vmatprep.subr.bf16.mxu0 0
        %5144 = vmatpush2.bf16.msra.mxu0 0
        %5145 = vmatprep.subr.bf16.mxu0 0
        %5146 = vmatpush2.bf16.msra.mxu0 0
        %5147 = vmatprep.subr.bf16.mxu0 0
        %5148 = vmatpush2.bf16.msra.mxu0 0
        %5149 = vmatprep.subr.bf16.mxu0 0
        %5150 = vmatpush2.bf16.msra.mxu0 0
        %5151 = vmatprep.subr.bf16.mxu0 0
        %5152 = vmatpush2.bf16.msra.mxu0 0
        %5153 = vmatprep.subr.bf16.mxu0 0
        %5154 = vmatpush2.bf16.msra.mxu0 0
        %5155 = vmatprep.subr.bf16.mxu0 0
        %5156 = vmatpush2.bf16.msra.mxu0 0
        %5157 = vmatprep.subr.bf16.mxu0 0
        %5158 = vmatpush2.bf16.msra.mxu0 0
        %5159 = vmatprep.mubr.bf16.mxu0 0
        %5160 = vmatmul.mubr.bf16.gmra.mxu0 %v4792
        %v5161 = vpop.f32.mrf.mxu0
        %v5162 = vadd.f32 %v4845, %v5161
        %v5163 = vpop.f32.mrf.mxu0
        %v5164 = vadd.f32 %v4849, %v5163
        %v5165 = vpop.f32.mrf.mxu0
        %v5166 = vadd.f32 %v4845, %v5165
        %v5167 = vpop.f32.mrf.mxu0
        %v5168 = vadd.f32 %v4849, %v5167
        %5169 = vmatprep.mubr.bf16.mxu0 0
        %5170 = vmatmul.mubr.bf16.gmra.mxu0 %v4793
        %v5171 = vpop.f32.mrf.mxu0
        %v5172 = vadd.f32 %v4845, %v5171
        %v5173 = vpop.f32.mrf.mxu0
        %v5174 = vadd.f32 %v4849, %v5173
        %v5175 = vpop.f32.mrf.mxu0
        %v5176 = vadd.f32 %v4845, %v5175
        %v5177 = vpop.f32.mrf.mxu0
        %v5178 = vadd.f32 %v4849, %v5177
        %5179 = vmatprep.mubr.bf16.mxu0 0
        %5180 = vmatmul.mubr.bf16.gmra.mxu0 %v4794
        %v5181 = vpop.f32.mrf.mxu0
        %v5182 = vadd.f32 %v4845, %v5181
        %v5183 = vpop.f32.mrf.mxu0
        %v5184 = vadd.f32 %v4849, %v5183
        %v5185 = vpop.f32.mrf.mxu0
        %v5186 = vadd.f32 %v4845, %v5185
        %v5187 = vpop.f32.mrf.mxu0
        %v5188 = vadd.f32 %v4849, %v5187
        %5189 = vmatprep.mubr.bf16.mxu0 0
        %5190 = vmatmul.mubr.bf16.gmra.mxu0 %v4795
        %v5191 = vpop.f32.mrf.mxu0
        %v5192 = vadd.f32 %v4845, %v5191
        %v5193 = vpop.f32.mrf.mxu0
        %v5194 = vadd.f32 %v4849, %v5193
        %v5195 = vpop.f32.mrf.mxu0
        %v5196 = vadd.f32 %v4845, %v5195
        %v5197 = vpop.f32.mrf.mxu0
        %v5198 = vadd.f32 %v4849, %v5197
        %5199 = vmatprep.mubr.bf16.mxu0 0
        %5200 = vmatmul.mubr.bf16.gmra.mxu0 %v4796
        %v5201 = vpop.f32.mrf.mxu0
        %v5202 = vadd.f32 %v4845, %v5201
        %v5203 = vpop.f32.mrf.mxu0
        %v5204 = vadd.f32 %v4849, %v5203
        %v5205 = vpop.f32.mrf.mxu0
        %v5206 = vadd.f32 %v4845, %v5205
        %v5207 = vpop.f32.mrf.mxu0
        %v5208 = vadd.f32 %v4849, %v5207
        %5209 = vmatprep.mubr.bf16.mxu0 0
        %5210 = vmatmul.mubr.bf16.gmra.mxu0 %v4797
        %v5211 = vpop.f32.mrf.mxu0
        %v5212 = vadd.f32 %v4845, %v5211
        %v5213 = vpop.f32.mrf.mxu0
        %v5214 = vadd.f32 %v4849, %v5213
        %v5215 = vpop.f32.mrf.mxu0
        %v5216 = vadd.f32 %v4845, %v5215
        %v5217 = vpop.f32.mrf.mxu0
        %v5218 = vadd.f32 %v4849, %v5217
        %5219 = vmatprep.mubr.bf16.mxu0 0
        %5220 = vmatmul.mubr.bf16.gmra.mxu0 %v4798
        %v5221 = vpop.f32.mrf.mxu0
        %v5222 = vadd.f32 %v4845, %v5221
        %v5223 = vpop.f32.mrf.mxu0
        %v5224 = vadd.f32 %v4849, %v5223
        %v5225 = vpop.f32.mrf.mxu0
        %v5226 = vadd.f32 %v4845, %v5225
        %v5227 = vpop.f32.mrf.mxu0
        %v5228 = vadd.f32 %v4849, %v5227
        %5229 = vmatprep.mubr.bf16.mxu0 0
        %5230 = vmatmul.mubr.bf16.gmra.mxu0 %v4799
        %v5231 = vpop.f32.mrf.mxu0
        %v5232 = vadd.f32 %v4845, %v5231
        %v5233 = vpop.f32.mrf.mxu0
        %v5234 = vadd.f32 %v4849, %v5233
        %v5235 = vpop.f32.mrf.mxu0
        %v5236 = vadd.f32 %v4845, %v5235
        %v5237 = vpop.f32.mrf.mxu0
        %v5238 = vadd.f32 %v4849, %v5237
        %5239 = vdwg.mxu0
        %v5240 = vmax.f32 %v5049, 0.0
        %v5241 = vmax.f32 %v5051, 0.0
        %v5242 = vmax.f32 %v5162, 0.0
        %v5243 = vmax.f32 %v5164, 0.0
        %v5244 = vmax.f32 %v5053, 0.0
        %v5245 = vmax.f32 %v5055, 0.0
        %v5246 = vmax.f32 %v5166, 0.0
        %v5247 = vmax.f32 %v5168, 0.0
        %v5248 = vmax.f32 %v5059, 0.0
        %v5249 = vmax.f32 %v5061, 0.0
        %v5250 = vmax.f32 %v5172, 0.0
        %v5251 = vmax.f32 %v5174, 0.0
        %v5252 = vmax.f32 %v5063, 0.0
        %v5253 = vmax.f32 %v5065, 0.0
        %v5254 = vmax.f32 %v5176, 0.0
        %v5255 = vmax.f32 %v5178, 0.0
        %v5256 = vmax.f32 %v5069, 0.0
        %v5257 = vmax.f32 %v5071, 0.0
        %v5258 = vmax.f32 %v5182, 0.0
        %v5259 = vmax.f32 %v5184, 0.0
        %v5260 = vmax.f32 %v5073, 0.0
        %v5261 = vmax.f32 %v5075, 0.0
        %v5262 = vmax.f32 %v5186, 0.0
        %v5263 = vmax.f32 %v5188, 0.0
        %v5264 = vmax.f32 %v5079, 0.0
        %v5265 = vmax.f32 %v5081, 0.0
        %v5266 = vmax.f32 %v5192, 0.0
        %v5267 = vmax.f32 %v5194, 0.0
        %v5268 = vmax.f32 %v5083, 0.0
        %v5269 = vmax.f32 %v5085, 0.0
        %v5270 = vmax.f32 %v5196, 0.0
        %v5271 = vmax.f32 %v5198, 0.0
        %v5272 = vmax.f32 %v5089, 0.0
        %v5273 = vmax.f32 %v5091, 0.0
        %v5274 = vmax.f32 %v5202, 0.0
        %v5275 = vmax.f32 %v5204, 0.0
        %v5276 = vmax.f32 %v5093, 0.0
        %v5277 = vmax.f32 %v5095, 0.0
        %v5278 = vmax.f32 %v5206, 0.0
        %v5279 = vmax.f32 %v5208, 0.0
        %v5280 = vmax.f32 %v5099, 0.0
        %v5281 = vmax.f32 %v5101, 0.0
        %v5282 = vmax.f32 %v5212, 0.0
        %v5283 = vmax.f32 %v5214, 0.0
        %v5284 = vmax.f32 %v5103, 0.0
        %v5285 = vmax.f32 %v5105, 0.0
        %v5286 = vmax.f32 %v5216, 0.0
        %v5287 = vmax.f32 %v5218, 0.0
        %v5288 = vmax.f32 %v5109, 0.0
        %v5289 = vmax.f32 %v5111, 0.0
        %v5290 = vmax.f32 %v5222, 0.0
        %v5291 = vmax.f32 %v5224, 0.0
        %v5292 = vmax.f32 %v5113, 0.0
        %v5293 = vmax.f32 %v5115, 0.0
        %v5294 = vmax.f32 %v5226, 0.0
        %v5295 = vmax.f32 %v5228, 0.0
        %v5296 = vmax.f32 %v5119, 0.0
        %v5297 = vmax.f32 %v5121, 0.0
        %v5298 = vmax.f32 %v5232, 0.0
        %v5299 = vmax.f32 %v5234, 0.0
        %v5300 = vmax.f32 %v5123, 0.0
        %v5301 = vmax.f32 %v5125, 0.0
        %v5302 = vmax.f32 %v5236, 0.0
        %v5303 = vmax.f32 %v5238, 0.0
        %v5304 = vpack.c.bf16 %v5244, %v5240
        %v5305 = vpack.c.bf16 %v5245, %v5241
        %v5306 = vpack.c.bf16 %v5246, %v5242
        %v5307 = vpack.c.bf16 %v5247, %v5243
        %v5308 = vpack.c.bf16 %v5252, %v5248
        %v5309 = vpack.c.bf16 %v5253, %v5249
        %v5310 = vpack.c.bf16 %v5254, %v5250
        %v5311 = vpack.c.bf16 %v5255, %v5251
        %v5312 = vpack.c.bf16 %v5260, %v5256
        %v5313 = vpack.c.bf16 %v5261, %v5257
        %v5314 = vpack.c.bf16 %v5262, %v5258
        %v5315 = vpack.c.bf16 %v5263, %v5259
        %v5316 = vpack.c.bf16 %v5268, %v5264
        %v5317 = vpack.c.bf16 %v5269, %v5265
        %v5318 = vpack.c.bf16 %v5270, %v5266
        %v5319 = vpack.c.bf16 %v5271, %v5267
        %v5320 = vpack.c.bf16 %v5276, %v5272
        %v5321 = vpack.c.bf16 %v5277, %v5273
        %v5322 = vpack.c.bf16 %v5278, %v5274
        %v5323 = vpack.c.bf16 %v5279, %v5275
        %v5324 = vpack.c.bf16 %v5284, %v5280
        %v5325 = vpack.c.bf16 %v5285, %v5281
        %v5326 = vpack.c.bf16 %v5286, %v5282
        %v5327 = vpack.c.bf16 %v5287, %v5283
        %v5328 = vpack.c.bf16 %v5292, %v5288
        %v5329 = vpack.c.bf16 %v5293, %v5289
        %v5330 = vpack.c.bf16 %v5294, %v5290
        %v5331 = vpack.c.bf16 %v5295, %v5291
        %v5332 = vpack.c.bf16 %v5300, %v5296
        %v5333 = vpack.c.bf16 %v5301, %v5297
        %v5334 = vpack.c.bf16 %v5302, %v5298
        %v5335 = vpack.c.bf16 %v5303, %v5299
        %v5336 = vld [vmem:[%s785] sm:$0xf]
        %v5337 = vld [vmem:[%s785 + $0x4] sm:$0xf]
        %v5338 = vld [vmem:[%s785 + $0x8] sm:$0xf]
        %v5339 = vld [vmem:[%s785 + $0xc] sm:$0xf]
        %v5340 = vld [vmem:[%s785 + $0x10] sm:$0xf]
        %v5341 = vld [vmem:[%s785 + $0x14] sm:$0xf]
        %v5342 = vld [vmem:[%s785 + $0x18] sm:$0xf]
        %v5343 = vld [vmem:[%s785 + $0x1c] sm:$0xf]
        %v5344 = vld [vmem:[%s785 + $0x20] sm:$0xf]
        %v5345 = vld [vmem:[%s785 + $0x24] sm:$0xf]
        %v5346 = vld [vmem:[%s785 + $0x28] sm:$0xf]
        %v5347 = vld [vmem:[%s785 + $0x2c] sm:$0xf]
        %v5348 = vld [vmem:[%s785 + $0x30] sm:$0xf]
        %v5349 = vld [vmem:[%s785 + $0x34] sm:$0xf]
        %v5350 = vld [vmem:[%s785 + $0x38] sm:$0xf]
        %v5351 = vld [vmem:[%s785 + $0x3c] sm:$0xf]
        %v5352 = vld [vmem:[%s785 + $0x40] sm:$0xf]
        %v5353 = vld [vmem:[%s785 + $0x44] sm:$0xf]
        %v5354 = vld [vmem:[%s785 + $0x48] sm:$0xf]
        %v5355 = vld [vmem:[%s785 + $0x4c] sm:$0xf]
        %v5356 = vld [vmem:[%s785 + $0x50] sm:$0xf]
        %v5357 = vld [vmem:[%s785 + $0x54] sm:$0xf]
        %v5358 = vld [vmem:[%s785 + $0x58] sm:$0xf]
        %v5359 = vld [vmem:[%s785 + $0x5c] sm:$0xf]
        %v5360 = vld [vmem:[%s785 + $0x60] sm:$0xf]
        %v5361 = vld [vmem:[%s785 + $0x64] sm:$0xf]
        %v5362 = vld [vmem:[%s785 + $0x68] sm:$0xf]
        %v5363 = vld [vmem:[%s785 + $0x6c] sm:$0xf]
        %v5364 = vld [vmem:[%s785 + $0x70] sm:$0xf]
        %v5365 = vld [vmem:[%s785 + $0x74] sm:$0xf]
        %v5366 = vld [vmem:[%s785 + $0x78] sm:$0xf]
        %v5367 = vld [vmem:[%s785 + $0x7c] sm:$0xf]
        %v5368 = vld [vmem:[%s785 + $0x80] sm:$0xf]
        %v5369 = vld [vmem:[%s785 + $0x84] sm:$0xf]
        %v5370 = vld [vmem:[%s785 + $0x88] sm:$0xf]
        %v5371 = vld [vmem:[%s785 + $0x8c] sm:$0xf]
        %v5372 = vld [vmem:[%s785 + $0x90] sm:$0xf]
        %v5373 = vld [vmem:[%s785 + $0x94] sm:$0xf]
        %v5374 = vld [vmem:[%s785 + $0x98] sm:$0xf]
        %v5375 = vld [vmem:[%s785 + $0x9c] sm:$0xf]
        %v5376 = vld [vmem:[%s785 + $0xa0] sm:$0xf]
        %v5377 = vld [vmem:[%s785 + $0xa4] sm:$0xf]
        %v5378 = vld [vmem:[%s785 + $0xa8] sm:$0xf]
        %v5379 = vld [vmem:[%s785 + $0xac] sm:$0xf]
        %v5380 = vld [vmem:[%s785 + $0xb0] sm:$0xf]
        %v5381 = vld [vmem:[%s785 + $0xb4] sm:$0xf]
        %v5382 = vld [vmem:[%s785 + $0xb8] sm:$0xf]
        %v5383 = vld [vmem:[%s785 + $0xbc] sm:$0xf]
        %v5384 = vld [vmem:[%s785 + $0xc0] sm:$0xf]
        %v5385 = vld [vmem:[%s785 + $0xc4] sm:$0xf]
        %v5386 = vld [vmem:[%s785 + $0xc8] sm:$0xf]
        %v5387 = vld [vmem:[%s785 + $0xcc] sm:$0xf]
        %v5388 = vld [vmem:[%s785 + $0xd0] sm:$0xf]
        %v5389 = vld [vmem:[%s785 + $0xd4] sm:$0xf]
        %v5390 = vld [vmem:[%s785 + $0xd8] sm:$0xf]
        %v5391 = vld [vmem:[%s785 + $0xdc] sm:$0xf]
        %v5392 = vld [vmem:[%s785 + $0xe0] sm:$0xf]
        %v5393 = vld [vmem:[%s785 + $0xe4] sm:$0xf]
        %v5394 = vld [vmem:[%s785 + $0xe8] sm:$0xf]
        %v5395 = vld [vmem:[%s785 + $0xec] sm:$0xf]
        %v5396 = vld [vmem:[%s785 + $0xf0] sm:$0xf]
        %v5397 = vld [vmem:[%s785 + $0xf4] sm:$0xf]
        %v5398 = vld [vmem:[%s785 + $0xf8] sm:$0xf]
        %v5399 = vld [vmem:[%s785 + $0xfc] sm:$0xf]
        %v5400 = vld [vmem:[%s793] sm:$0x1]
        %v5402 = vlaneseq
        %v5403 = vshrl.u32 %v5402, 7
        %v5404 = vsub.s32 0, %v5403
        %v5405 = vrot.slane %v5400, %v5404
        %v5471 = vunpack.c.l.b16 %v5336
        %v5472 = vunpack.c.l.b16 %v5337
        %v5473 = vunpack.c.l.b16 %v5338
        %v5474 = vunpack.c.l.b16 %v5339
        %v5475 = vunpack.c.l.b16 %v5340
        %v5476 = vunpack.c.l.b16 %v5341
        %v5477 = vunpack.c.l.b16 %v5342
        %v5478 = vunpack.c.l.b16 %v5343
        %v5479 = vunpack.c.l.b16 %v5344
        %v5480 = vunpack.c.l.b16 %v5345
        %v5481 = vunpack.c.l.b16 %v5346
        %v5482 = vunpack.c.l.b16 %v5347
        %v5483 = vunpack.c.l.b16 %v5348
        %v5484 = vunpack.c.l.b16 %v5349
        %v5485 = vunpack.c.l.b16 %v5350
        %v5486 = vunpack.c.l.b16 %v5351
        %v5487 = vunpack.c.l.b16 %v5352
        %v5488 = vunpack.c.l.b16 %v5353
        %v5489 = vunpack.c.l.b16 %v5354
        %v5490 = vunpack.c.l.b16 %v5355
        %v5491 = vunpack.c.l.b16 %v5356
        %v5492 = vunpack.c.l.b16 %v5357
        %v5493 = vunpack.c.l.b16 %v5358
        %v5494 = vunpack.c.l.b16 %v5359
        %v5495 = vunpack.c.l.b16 %v5360
        %v5496 = vunpack.c.l.b16 %v5361
        %v5497 = vunpack.c.l.b16 %v5362
        %v5498 = vunpack.c.l.b16 %v5363
        %v5499 = vunpack.c.l.b16 %v5364
        %v5500 = vunpack.c.l.b16 %v5365
        %v5501 = vunpack.c.l.b16 %v5366
        %v5502 = vunpack.c.l.b16 %v5367
        %v5503 = vunpack.c.l.b16 %v5368
        %v5504 = vunpack.c.l.b16 %v5369
        %v5505 = vunpack.c.l.b16 %v5370
        %v5506 = vunpack.c.l.b16 %v5371
        %v5507 = vunpack.c.l.b16 %v5372
        %v5508 = vunpack.c.l.b16 %v5373
        %v5509 = vunpack.c.l.b16 %v5374
        %v5510 = vunpack.c.l.b16 %v5375
        %v5511 = vunpack.c.l.b16 %v5376
        %v5512 = vunpack.c.l.b16 %v5377
        %v5513 = vunpack.c.l.b16 %v5378
        %v5514 = vunpack.c.l.b16 %v5379
        %v5515 = vunpack.c.l.b16 %v5380
        %v5516 = vunpack.c.l.b16 %v5381
        %v5517 = vunpack.c.l.b16 %v5382
        %v5518 = vunpack.c.l.b16 %v5383
        %v5519 = vunpack.c.l.b16 %v5384
        %v5520 = vunpack.c.l.b16 %v5385
        %v5521 = vunpack.c.l.b16 %v5386
        %v5522 = vunpack.c.l.b16 %v5387
        %v5523 = vunpack.c.l.b16 %v5388
        %v5524 = vunpack.c.l.b16 %v5389
        %v5525 = vunpack.c.l.b16 %v5390
        %v5526 = vunpack.c.l.b16 %v5391
        %v5527 = vunpack.c.l.b16 %v5392
        %v5528 = vunpack.c.l.b16 %v5393
        %v5529 = vunpack.c.l.b16 %v5394
        %v5530 = vunpack.c.l.b16 %v5395
        %v5531 = vunpack.c.l.b16 %v5396
        %v5532 = vunpack.c.l.b16 %v5397
        %v5533 = vunpack.c.l.b16 %v5398
        %v5534 = vunpack.c.l.b16 %v5399
        %v5535 = vpack.c.b16 %v5472, %v5471
        %v5536 = vpack.c.b16 %v5474, %v5473
        %v5537 = vpack.c.b16 %v5476, %v5475
        %v5538 = vpack.c.b16 %v5478, %v5477
        %v5539 = vpack.c.b16 %v5480, %v5479
        %v5540 = vpack.c.b16 %v5482, %v5481
        %v5541 = vpack.c.b16 %v5484, %v5483
        %v5542 = vpack.c.b16 %v5486, %v5485
        %v5543 = vpack.c.b16 %v5488, %v5487
        %v5544 = vpack.c.b16 %v5490, %v5489
        %v5545 = vpack.c.b16 %v5492, %v5491
        %v5546 = vpack.c.b16 %v5494, %v5493
        %v5547 = vpack.c.b16 %v5496, %v5495
        %v5548 = vpack.c.b16 %v5498, %v5497
        %v5549 = vpack.c.b16 %v5500, %v5499
        %v5550 = vpack.c.b16 %v5502, %v5501
        %v5551 = vpack.c.b16 %v5504, %v5503
        %v5552 = vpack.c.b16 %v5506, %v5505
        %v5553 = vpack.c.b16 %v5508, %v5507
        %v5554 = vpack.c.b16 %v5510, %v5509
        %v5555 = vpack.c.b16 %v5512, %v5511
        %v5556 = vpack.c.b16 %v5514, %v5513
        %v5557 = vpack.c.b16 %v5516, %v5515
        %v5558 = vpack.c.b16 %v5518, %v5517
        %v5559 = vpack.c.b16 %v5520, %v5519
        %v5560 = vpack.c.b16 %v5522, %v5521
        %v5561 = vpack.c.b16 %v5524, %v5523
        %v5562 = vpack.c.b16 %v5526, %v5525
        %v5563 = vpack.c.b16 %v5528, %v5527
        %v5564 = vpack.c.b16 %v5530, %v5529
        %v5565 = vpack.c.b16 %v5532, %v5531
        %v5566 = vpack.c.b16 %v5534, %v5533
        %5599 = vmatprep.subr.bf16.mxu0 0
        %5600 = vmatpush1.bf16.msra.mxu0 %v5542
        %5601 = vmatprep.subr.bf16.mxu0 0
        %5602 = vmatpush1.bf16.msra.mxu0 %v5541
        %5603 = vmatprep.subr.bf16.mxu0 0
        %5604 = vmatpush1.bf16.msra.mxu0 %v5540
        %5605 = vmatprep.subr.bf16.mxu0 0
        %5606 = vmatpush1.bf16.msra.mxu0 %v5539
        %5607 = vmatprep.subr.bf16.mxu0 0
        %5608 = vmatpush1.bf16.msra.mxu0 %v5538
        %5609 = vmatprep.subr.bf16.mxu0 0
        %5610 = vmatpush1.bf16.msra.mxu0 %v5537
        %5611 = vmatprep.subr.bf16.mxu0 0
        %5612 = vmatpush1.bf16.msra.mxu0 %v5536
        %5613 = vmatprep.subr.bf16.mxu0 0
        %5614 = vmatpush1.bf16.msra.mxu0 %v5535
        %5615 = vmatprep.subr.bf16.mxu0 0
        %5616 = vmatpush2.bf16.msra.mxu0 %v5550
        %5617 = vmatprep.subr.bf16.mxu0 0
        %5618 = vmatpush2.bf16.msra.mxu0 %v5549
        %5619 = vmatprep.subr.bf16.mxu0 0
        %5620 = vmatpush2.bf16.msra.mxu0 %v5548
        %5621 = vmatprep.subr.bf16.mxu0 0
        %5622 = vmatpush2.bf16.msra.mxu0 %v5547
        %5623 = vmatprep.subr.bf16.mxu0 0
        %5624 = vmatpush2.bf16.msra.mxu0 %v5546
        %5625 = vmatprep.subr.bf16.mxu0 0
        %5626 = vmatpush2.bf16.msra.mxu0 %v5545
        %5627 = vmatprep.subr.bf16.mxu0 0
        %5628 = vmatpush2.bf16.msra.mxu0 %v5544
        %5629 = vmatprep.subr.bf16.mxu0 0
        %5630 = vmatpush2.bf16.msra.mxu0 %v5543
        %5631 = vmatprep.mubr.bf16.mxu0 %v5305
        %5632 = vmatmul.mubr.bf16.gmra.mxu0 %v5304
        %v5633 = vpop.f32.mrf.mxu0
        %v5634 = vadd.f32 %v5405, %v5633
        %v5635 = vpop.f32.mrf.mxu0
        %v5636 = vpop.f32.mrf.mxu0
        %v5637 = vadd.f32 %v5405, %v5636
        %v5638 = vpop.f32.mrf.mxu0
        %5639 = vmatprep.mubr.bf16.mxu0 %v5309
        %5640 = vmatmul.mubr.bf16.gmra.mxu0 %v5308
        %v5641 = vpop.f32.mrf.mxu0
        %v5642 = vadd.f32 %v5405, %v5641
        %v5643 = vpop.f32.mrf.mxu0
        %v5644 = vpop.f32.mrf.mxu0
        %v5645 = vadd.f32 %v5405, %v5644
        %v5646 = vpop.f32.mrf.mxu0
        %5647 = vmatprep.mubr.bf16.mxu0 %v5313
        %5648 = vmatmul.mubr.bf16.gmra.mxu0 %v5312
        %v5649 = vpop.f32.mrf.mxu0
        %v5650 = vadd.f32 %v5405, %v5649
        %v5651 = vpop.f32.mrf.mxu0
        %v5652 = vpop.f32.mrf.mxu0
        %v5653 = vadd.f32 %v5405, %v5652
        %v5654 = vpop.f32.mrf.mxu0
        %5655 = vmatprep.mubr.bf16.mxu0 %v5317
        %5656 = vmatmul.mubr.bf16.gmra.mxu0 %v5316
        %v5657 = vpop.f32.mrf.mxu0
        %v5658 = vadd.f32 %v5405, %v5657
        %v5659 = vpop.f32.mrf.mxu0
        %v5660 = vpop.f32.mrf.mxu0
        %v5661 = vadd.f32 %v5405, %v5660
        %v5662 = vpop.f32.mrf.mxu0
        %5663 = vmatprep.mubr.bf16.mxu0 %v5321
        %5664 = vmatmul.mubr.bf16.gmra.mxu0 %v5320
        %v5665 = vpop.f32.mrf.mxu0
        %v5666 = vadd.f32 %v5405, %v5665
        %v5667 = vpop.f32.mrf.mxu0
        %v5668 = vpop.f32.mrf.mxu0
        %v5669 = vadd.f32 %v5405, %v5668
        %v5670 = vpop.f32.mrf.mxu0
        %5671 = vmatprep.mubr.bf16.mxu0 %v5325
        %5672 = vmatmul.mubr.bf16.gmra.mxu0 %v5324
        %v5673 = vpop.f32.mrf.mxu0
        %v5674 = vadd.f32 %v5405, %v5673
        %v5675 = vpop.f32.mrf.mxu0
        %v5676 = vpop.f32.mrf.mxu0
        %v5677 = vadd.f32 %v5405, %v5676
        %v5678 = vpop.f32.mrf.mxu0
        %5679 = vmatprep.mubr.bf16.mxu0 %v5329
        %5680 = vmatmul.mubr.bf16.gmra.mxu0 %v5328
        %v5681 = vpop.f32.mrf.mxu0
        %v5682 = vadd.f32 %v5405, %v5681
        %v5683 = vpop.f32.mrf.mxu0
        %v5684 = vpop.f32.mrf.mxu0
        %v5685 = vadd.f32 %v5405, %v5684
        %v5686 = vpop.f32.mrf.mxu0
        %5687 = vmatprep.mubr.bf16.mxu0 %v5333
        %5688 = vmatmul.mubr.bf16.gmra.mxu0 %v5332
        %v5689 = vpop.f32.mrf.mxu0
        %v5690 = vadd.f32 %v5405, %v5689
        %v5691 = vpop.f32.mrf.mxu0
        %v5692 = vpop.f32.mrf.mxu0
        %v5693 = vadd.f32 %v5405, %v5692
        %v5694 = vpop.f32.mrf.mxu0
        %5695 = vdwg.mxu0
        %5696 = vmatprep.subr.bf16.mxu0 0
        %5697 = vmatpush1.bf16.msra.mxu0 %v5558
        %5698 = vmatprep.subr.bf16.mxu0 0
        %5699 = vmatpush1.bf16.msra.mxu0 %v5557
        %5700 = vmatprep.subr.bf16.mxu0 0
        %5701 = vmatpush1.bf16.msra.mxu0 %v5556
        %5702 = vmatprep.subr.bf16.mxu0 0
        %5703 = vmatpush1.bf16.msra.mxu0 %v5555
        %5704 = vmatprep.subr.bf16.mxu0 0
        %5705 = vmatpush1.bf16.msra.mxu0 %v5554
        %5706 = vmatprep.subr.bf16.mxu0 0
        %5707 = vmatpush1.bf16.msra.mxu0 %v5553
        %5708 = vmatprep.subr.bf16.mxu0 0
        %5709 = vmatpush1.bf16.msra.mxu0 %v5552
        %5710 = vmatprep.subr.bf16.mxu0 0
        %5711 = vmatpush1.bf16.msra.mxu0 %v5551
        %5712 = vmatprep.subr.bf16.mxu0 0
        %5713 = vmatpush2.bf16.msra.mxu0 %v5566
        %5714 = vmatprep.subr.bf16.mxu0 0
        %5715 = vmatpush2.bf16.msra.mxu0 %v5565
        %5716 = vmatprep.subr.bf16.mxu0 0
        %5717 = vmatpush2.bf16.msra.mxu0 %v5564
        %5718 = vmatprep.subr.bf16.mxu0 0
        %5719 = vmatpush2.bf16.msra.mxu0 %v5563
        %5720 = vmatprep.subr.bf16.mxu0 0
        %5721 = vmatpush2.bf16.msra.mxu0 %v5562
        %5722 = vmatprep.subr.bf16.mxu0 0
        %5723 = vmatpush2.bf16.msra.mxu0 %v5561
        %5724 = vmatprep.subr.bf16.mxu0 0
        %5725 = vmatpush2.bf16.msra.mxu0 %v5560
        %5726 = vmatprep.subr.bf16.mxu0 0
        %5727 = vmatpush2.bf16.msra.mxu0 %v5559
        %5728 = vmatprep.mubr.bf16.mxu0 %v5307
        %5729 = vmatmul.mubr.bf16.gmra.mxu0 %v5306
        %v5730 = vpop.f32.mrf.mxu0
        %v5731 = vadd.f32 %v5634, %v5730
        %v5732 = vpop.f32.mrf.mxu0
        %v5733 = vpop.f32.mrf.mxu0
        %v5734 = vadd.f32 %v5637, %v5733
        %v5735 = vpop.f32.mrf.mxu0
        %5736 = vmatprep.mubr.bf16.mxu0 %v5311
        %5737 = vmatmul.mubr.bf16.gmra.mxu0 %v5310
        %v5738 = vpop.f32.mrf.mxu0
        %v5739 = vadd.f32 %v5642, %v5738
        %v5740 = vpop.f32.mrf.mxu0
        %v5741 = vpop.f32.mrf.mxu0
        %v5742 = vadd.f32 %v5645, %v5741
        %v5743 = vpop.f32.mrf.mxu0
        %5744 = vmatprep.mubr.bf16.mxu0 %v5315
        %5745 = vmatmul.mubr.bf16.gmra.mxu0 %v5314
        %v5746 = vpop.f32.mrf.mxu0
        %v5747 = vadd.f32 %v5650, %v5746
        %v5748 = vpop.f32.mrf.mxu0
        %v5749 = vpop.f32.mrf.mxu0
        %v5750 = vadd.f32 %v5653, %v5749
        %v5751 = vpop.f32.mrf.mxu0
        %5752 = vmatprep.mubr.bf16.mxu0 %v5319
        %5753 = vmatmul.mubr.bf16.gmra.mxu0 %v5318
        %v5754 = vpop.f32.mrf.mxu0
        %v5755 = vadd.f32 %v5658, %v5754
        %v5756 = vpop.f32.mrf.mxu0
        %v5757 = vpop.f32.mrf.mxu0
        %v5758 = vadd.f32 %v5661, %v5757
        %v5759 = vpop.f32.mrf.mxu0
        %5760 = vmatprep.mubr.bf16.mxu0 %v5323
        %5761 = vmatmul.mubr.bf16.gmra.mxu0 %v5322
        %v5762 = vpop.f32.mrf.mxu0
        %v5763 = vadd.f32 %v5666, %v5762
        %v5764 = vpop.f32.mrf.mxu0
        %v5765 = vpop.f32.mrf.mxu0
        %v5766 = vadd.f32 %v5669, %v5765
        %v5767 = vpop.f32.mrf.mxu0
        %5768 = vmatprep.mubr.bf16.mxu0 %v5327
        %5769 = vmatmul.mubr.bf16.gmra.mxu0 %v5326
        %v5770 = vpop.f32.mrf.mxu0
        %v5771 = vadd.f32 %v5674, %v5770
        %v5772 = vpop.f32.mrf.mxu0
        %v5773 = vpop.f32.mrf.mxu0
        %v5774 = vadd.f32 %v5677, %v5773
        %v5775 = vpop.f32.mrf.mxu0
        %5776 = vmatprep.mubr.bf16.mxu0 %v5331
        %5777 = vmatmul.mubr.bf16.gmra.mxu0 %v5330
        %v5778 = vpop.f32.mrf.mxu0
        %v5779 = vadd.f32 %v5682, %v5778
        %v5780 = vpop.f32.mrf.mxu0
        %v5781 = vpop.f32.mrf.mxu0
        %v5782 = vadd.f32 %v5685, %v5781
        %v5783 = vpop.f32.mrf.mxu0
        %5784 = vmatprep.mubr.bf16.mxu0 %v5335
        %5785 = vmatmul.mubr.bf16.gmra.mxu0 %v5334
        %v5786 = vpop.f32.mrf.mxu0
        %v5787 = vadd.f32 %v5690, %v5786
        %v5788 = vpop.f32.mrf.mxu0
        %v5789 = vpop.f32.mrf.mxu0
        %v5790 = vadd.f32 %v5693, %v5789
        %v5791 = vpop.f32.mrf.mxu0
        %5792 = vdwg.mxu0
        %v5793 = vadd.f32 %v4554, %v5731
        %v5794 = vadd.f32 %v4555, %v5734
        %v5795 = vadd.f32 %v4556, %v5739
        %v5796 = vadd.f32 %v4557, %v5742
        %v5797 = vadd.f32 %v4558, %v5747
        %v5798 = vadd.f32 %v4559, %v5750
        %v5799 = vadd.f32 %v4560, %v5755
        %v5800 = vadd.f32 %v4561, %v5758
        %v5801 = vadd.f32 %v4562, %v5763
        %v5802 = vadd.f32 %v4563, %v5766
        %v5803 = vadd.f32 %v4564, %v5771
        %v5804 = vadd.f32 %v4565, %v5774
        %v5805 = vadd.f32 %v4566, %v5779
        %v5806 = vadd.f32 %v4567, %v5782
        %v5807 = vadd.f32 %v4568, %v5787
        %v5808 = vadd.f32 %v4569, %v5790
        %5809 = vst [vmem:[#allocation2] sm:$0xff] %v5793
        %5810 = vst [vmem:[#allocation2 + $0x8] sm:$0xff] %v5794
        %5811 = vst [vmem:[#allocation2 + $0x10] sm:$0xff] %v5795
        %5812 = vst [vmem:[#allocation2 + $0x18] sm:$0xff] %v5796
        %5813 = vst [vmem:[#allocation2 + $0x20] sm:$0xff] %v5797
        %5814 = vst [vmem:[#allocation2 + $0x28] sm:$0xff] %v5798
        %5815 = vst [vmem:[#allocation2 + $0x30] sm:$0xff] %v5799
        %5816 = vst [vmem:[#allocation2 + $0x38] sm:$0xff] %v5800
        %5817 = vst [vmem:[#allocation2 + $0x40] sm:$0xff] %v5801
        %5818 = vst [vmem:[#allocation2 + $0x48] sm:$0xff] %v5802
        %5819 = vst [vmem:[#allocation2 + $0x50] sm:$0xff] %v5803
        %5820 = vst [vmem:[#allocation2 + $0x58] sm:$0xff] %v5804
        %5821 = vst [vmem:[#allocation2 + $0x60] sm:$0xff] %v5805
        %5822 = vst [vmem:[#allocation2 + $0x68] sm:$0xff] %v5806
        %5823 = vst [vmem:[#allocation2 + $0x70] sm:$0xff] %v5807
        %5824 = vst [vmem:[#allocation2 + $0x78] sm:$0xff] %v5808
        %p5825 = scmp.eq.s32.totalorder %s30, 3
        // Predicated region
        $region145: #{tpu_custom_call.1} parent=79 // pred_check
          %p5826 = pneg %p5825
        $region146: #{tpu_custom_call.1} parent=79 // pred_check_branch
          %5828 = sbr.rel (%p5826) target = $region148
        $region147: #{tpu_custom_call.1} parent=79 // pred_region
          %v5829 = vpack.c.bf16 %v5794, %v5793
          %v5830 = vpack.c.bf16 %v5796, %v5795
          %v5831 = vpack.c.bf16 %v5798, %v5797
          %v5832 = vpack.c.bf16 %v5800, %v5799
          %v5833 = vpack.c.bf16 %v5802, %v5801
          %v5834 = vpack.c.bf16 %v5804, %v5803
          %v5835 = vpack.c.bf16 %v5806, %v5805
          %v5836 = vpack.c.bf16 %v5808, %v5807
          %v5837 = vld [vmem:[#allocation19] sm:$0xf]
          %v5838 = vld [vmem:[#allocation19 + $0x4] sm:$0xf]
          %v5839 = vld [vmem:[#allocation19 + $0x8] sm:$0xf]
          %v5840 = vld [vmem:[#allocation19 + $0xc] sm:$0xf]
          %v5841 = vld [vmem:[#allocation19 + $0x10] sm:$0xf]
          %v5842 = vld [vmem:[#allocation19 + $0x14] sm:$0xf]
          %v5843 = vld [vmem:[#allocation19 + $0x18] sm:$0xf]
          %v5844 = vld [vmem:[#allocation19 + $0x1c] sm:$0xf]
          %v5845 = vld [vmem:[#allocation19 + $0x20] sm:$0xf]
          %v5846 = vld [vmem:[#allocation19 + $0x24] sm:$0xf]
          %v5847 = vld [vmem:[#allocation19 + $0x28] sm:$0xf]
          %v5848 = vld [vmem:[#allocation19 + $0x2c] sm:$0xf]
          %v5849 = vld [vmem:[#allocation19 + $0x30] sm:$0xf]
          %v5850 = vld [vmem:[#allocation19 + $0x34] sm:$0xf]
          %v5851 = vld [vmem:[#allocation19 + $0x38] sm:$0xf]
          %v5852 = vld [vmem:[#allocation19 + $0x3c] sm:$0xf]
          %v5853 = vld [vmem:[#allocation20] sm:$0x1]
          %v5855 = vlaneseq
          %v5856 = vshrl.u32 %v5855, 7
          %v5857 = vsub.s32 0, %v5856
          %v5858 = vrot.slane %v5853, %v5857
          %v5876 = vunpack.c.l.b16 %v5837
          %v5877 = vunpack.c.l.b16 %v5838
          %v5878 = vunpack.c.l.b16 %v5839
          %v5879 = vunpack.c.l.b16 %v5840
          %v5880 = vunpack.c.l.b16 %v5841
          %v5881 = vunpack.c.l.b16 %v5842
          %v5882 = vunpack.c.l.b16 %v5843
          %v5883 = vunpack.c.l.b16 %v5844
          %v5884 = vunpack.c.l.b16 %v5845
          %v5885 = vunpack.c.l.b16 %v5846
          %v5886 = vunpack.c.l.b16 %v5847
          %v5887 = vunpack.c.l.b16 %v5848
          %v5888 = vunpack.c.l.b16 %v5849
          %v5889 = vunpack.c.l.b16 %v5850
          %v5890 = vunpack.c.l.b16 %v5851
          %v5891 = vunpack.c.l.b16 %v5852
          %v5892 = vpack.c.b16 %v5877, %v5876
          %v5893 = vpack.c.b16 %v5879, %v5878
          %v5894 = vpack.c.b16 %v5881, %v5880
          %v5895 = vpack.c.b16 %v5883, %v5882
          %v5896 = vpack.c.b16 %v5885, %v5884
          %v5897 = vpack.c.b16 %v5887, %v5886
          %v5898 = vpack.c.b16 %v5889, %v5888
          %v5899 = vpack.c.b16 %v5891, %v5890
          %5908 = vmatprep.subr.bf16.mxu0 0
          %5909 = vmatpush1.bf16.msra.mxu0 %v5899
          %5910 = vmatprep.subr.bf16.mxu0 0
          %5911 = vmatpush1.bf16.msra.mxu0 %v5898
          %5912 = vmatprep.subr.bf16.mxu0 0
          %5913 = vmatpush1.bf16.msra.mxu0 %v5897
          %5914 = vmatprep.subr.bf16.mxu0 0
          %5915 = vmatpush1.bf16.msra.mxu0 %v5896
          %5916 = vmatprep.subr.bf16.mxu0 0
          %5917 = vmatpush1.bf16.msra.mxu0 %v5895
          %5918 = vmatprep.subr.bf16.mxu0 0
          %5919 = vmatpush1.bf16.msra.mxu0 %v5894
          %5920 = vmatprep.subr.bf16.mxu0 0
          %5921 = vmatpush1.bf16.msra.mxu0 %v5893
          %5922 = vmatprep.subr.bf16.mxu0 0
          %5923 = vmatpush1.bf16.msra.mxu0 %v5892
          %5924 = vmatprep.subr.bf16.mxu0 0
          %5925 = vmatpush2.bf16.msra.mxu0 0
          %5926 = vmatprep.subr.bf16.mxu0 0
          %5927 = vmatpush2.bf16.msra.mxu0 0
          %5928 = vmatprep.subr.bf16.mxu0 0
          %5929 = vmatpush2.bf16.msra.mxu0 0
          %5930 = vmatprep.subr.bf16.mxu0 0
          %5931 = vmatpush2.bf16.msra.mxu0 0
          %5932 = vmatprep.subr.bf16.mxu0 0
          %5933 = vmatpush2.bf16.msra.mxu0 0
          %5934 = vmatprep.subr.bf16.mxu0 0
          %5935 = vmatpush2.bf16.msra.mxu0 0
          %5936 = vmatprep.subr.bf16.mxu0 0
          %5937 = vmatpush2.bf16.msra.mxu0 0
          %5938 = vmatprep.subr.bf16.mxu0 0
          %5939 = vmatpush2.bf16.msra.mxu0 0
          %5940 = vmatprep.mubr.bf16.mxu0 0
          %5941 = vmatmul.mubr.bf16.gmra.mxu0 %v5829
          %v5942 = vpop.f32.mrf.mxu0
          %v5943 = vadd.f32 %v5858, %v5942
          %v5944 = vpop.f32.mrf.mxu0
          %v5945 = vpop.f32.mrf.mxu0
          %v5946 = vadd.f32 %v5858, %v5945
          %v5947 = vpop.f32.mrf.mxu0
          %5948 = vmatprep.mubr.bf16.mxu0 0
          %5949 = vmatmul.mubr.bf16.gmra.mxu0 %v5830
          %v5950 = vpop.f32.mrf.mxu0
          %v5951 = vadd.f32 %v5858, %v5950
          %v5952 = vpop.f32.mrf.mxu0
          %v5953 = vpop.f32.mrf.mxu0
          %v5954 = vadd.f32 %v5858, %v5953
          %v5955 = vpop.f32.mrf.mxu0
          %5956 = vmatprep.mubr.bf16.mxu0 0
          %5957 = vmatmul.mubr.bf16.gmra.mxu0 %v5831
          %v5958 = vpop.f32.mrf.mxu0
          %v5959 = vadd.f32 %v5858, %v5958
          %v5960 = vpop.f32.mrf.mxu0
          %v5961 = vpop.f32.mrf.mxu0
          %v5962 = vadd.f32 %v5858, %v5961
          %v5963 = vpop.f32.mrf.mxu0
          %5964 = vmatprep.mubr.bf16.mxu0 0
          %5965 = vmatmul.mubr.bf16.gmra.mxu0 %v5832
          %v5966 = vpop.f32.mrf.mxu0
          %v5967 = vadd.f32 %v5858, %v5966
          %v5968 = vpop.f32.mrf.mxu0
          %v5969 = vpop.f32.mrf.mxu0
          %v5970 = vadd.f32 %v5858, %v5969
          %v5971 = vpop.f32.mrf.mxu0
          %5972 = vmatprep.mubr.bf16.mxu0 0
          %5973 = vmatmul.mubr.bf16.gmra.mxu0 %v5833
          %v5974 = vpop.f32.mrf.mxu0
          %v5975 = vadd.f32 %v5858, %v5974
          %v5976 = vpop.f32.mrf.mxu0
          %v5977 = vpop.f32.mrf.mxu0
          %v5978 = vadd.f32 %v5858, %v5977
          %v5979 = vpop.f32.mrf.mxu0
          %5980 = vmatprep.mubr.bf16.mxu0 0
          %5981 = vmatmul.mubr.bf16.gmra.mxu0 %v5834
          %v5982 = vpop.f32.mrf.mxu0
          %v5983 = vadd.f32 %v5858, %v5982
          %v5984 = vpop.f32.mrf.mxu0
          %v5985 = vpop.f32.mrf.mxu0
          %v5986 = vadd.f32 %v5858, %v5985
          %v5987 = vpop.f32.mrf.mxu0
          %5988 = vmatprep.mubr.bf16.mxu0 0
          %5989 = vmatmul.mubr.bf16.gmra.mxu0 %v5835
          %v5990 = vpop.f32.mrf.mxu0
          %v5991 = vadd.f32 %v5858, %v5990
          %v5992 = vpop.f32.mrf.mxu0
          %v5993 = vpop.f32.mrf.mxu0
          %v5994 = vadd.f32 %v5858, %v5993
          %v5995 = vpop.f32.mrf.mxu0
          %5996 = vmatprep.mubr.bf16.mxu0 0
          %5997 = vmatmul.mubr.bf16.gmra.mxu0 %v5836
          %v5998 = vpop.f32.mrf.mxu0
          %v5999 = vadd.f32 %v5858, %v5998
          %v6000 = vpop.f32.mrf.mxu0
          %v6001 = vpop.f32.mrf.mxu0
          %v6002 = vadd.f32 %v5858, %v6001
          %v6003 = vpop.f32.mrf.mxu0
          %6004 = vdwg.mxu0
          %6005 = vst [vmem:[#allocation22] sm:$0xff] %v5943
          %6006 = vst [vmem:[#allocation22 + $0x8] sm:$0xff] %v5946
          %6007 = vst [vmem:[#allocation22 + $0x10] sm:$0xff] %v5951
          %6008 = vst [vmem:[#allocation22 + $0x18] sm:$0xff] %v5954
          %6009 = vst [vmem:[#allocation22 + $0x20] sm:$0xff] %v5959
          %6010 = vst [vmem:[#allocation22 + $0x28] sm:$0xff] %v5962
          %6011 = vst [vmem:[#allocation22 + $0x30] sm:$0xff] %v5967
          %6012 = vst [vmem:[#allocation22 + $0x38] sm:$0xff] %v5970
          %6013 = vst [vmem:[#allocation22 + $0x40] sm:$0xff] %v5975
          %6014 = vst [vmem:[#allocation22 + $0x48] sm:$0xff] %v5978
          %6015 = vst [vmem:[#allocation22 + $0x50] sm:$0xff] %v5983
          %6016 = vst [vmem:[#allocation22 + $0x58] sm:$0xff] %v5986
          %6017 = vst [vmem:[#allocation22 + $0x60] sm:$0xff] %v5991
          %6018 = vst [vmem:[#allocation22 + $0x68] sm:$0xff] %v5994
          %6019 = vst [vmem:[#allocation22 + $0x70] sm:$0xff] %v5999
          %6020 = vst [vmem:[#allocation22 + $0x78] sm:$0xff] %v6002
        $region148: #{tpu_custom_call.1} parent=79 // pred_fallthru
          _
        // Predicated region
        $region149: #{tpu_custom_call.1} parent=79 // pred_check
          %p6021 = pneg %p413
        $region150: #{tpu_custom_call.1} parent=79 // pred_check_branch
          %6023 = sbr.rel (%p6021) target = $region152
        $region151: #{tpu_custom_call.1} parent=79 // pred_region
          %s6025 = ssub.s32 2048, 2048
          %6026 = vsyncadd [#allocation5], %s6025
          %s6027 = sshll.u32 [#allocation22], 4
          %s6028 = int_to_ptr.vmem [resolvable:$true] %s6027
          %6033 = dma.vmem_to_hbm [thread:$0]  %s6028, 2048, %s15, [#allocation5], 128, 128, 8
        $region152: #{tpu_custom_call.1} parent=79 // pred_fallthru
          _
        // Predicated region
        $region153: #{tpu_custom_call.1} parent=79 // pred_check
          %p6034 = pneg %p413
        $region154: #{tpu_custom_call.1} parent=79 // pred_check_branch
          %6036 = sbr.rel (%p6034) target = $region156
        $region155: #{tpu_custom_call.1} parent=79 // pred_region
          %6037 = dma.done [#allocation5], 2048
        $region156: #{tpu_custom_call.1} parent=79 // pred_fallthru
          _
      $region80: #{tpu_custom_call.1} parent=5 // pred_fallthru
        _
      %p6038 = scmp.le.s32.totalorder 2, %s25
      // Predicated region
      $region157: #{tpu_custom_call.1} parent=5 // pred_check
        %p6039 = pneg %p6038
      $region158: #{tpu_custom_call.1} parent=5 // pred_check_branch
        %6041 = sbr.rel (%p6039) target = $region160
      $region159: #{tpu_custom_call.1} parent=5 // pred_region
        %s6042 = ssub.s32 %s25, 2
      $region160: #{tpu_custom_call.1} parent=5 // pred_fallthru
        _
    $region6: #{tpu_custom_call.1} parent=1 // loop_footer
      %s29 = sadd.s32 1, %s25
    $region7: #{tpu_custom_call.1} parent=1 // loop_footer_branch
      %24 = sbr.rel target = $region3
    $region8: #{tpu_custom_call.1} parent=1 // loop_exit
      _
    %6043 = vsyncpa [#allocation4], 1
    %s6044 = scalar_lea.sflag [#allocation4], 1
    %6045 = vsyncpa %s6044, 1
    %6046 = vsyncpa [#allocation7], 1
    %6047 = vsyncpa [#allocation21], 1
    %6048 = vsyncpa [#allocation5], 1
    %s6049 = scalar_lea.sflag [#allocation5], 1
    %6050 = vsyncpa %s6049, 1

</llo_original>
